<compile_context>
chip_gen: v6e
topology: v6e:2x2x1
jax: 0.10.0
libtpu: 0.0.40
codegen_flags: <defaults>
</compile_context>

<pallas_src>
import jax
import jax.numpy as jnp
from jax.experimental import pallas as pl
from jax.experimental.pallas import tpu as pltpu


# ----------------------------------------------------------------------------
# Fused kernel: num_layers GRU stack + Linear(H, 1) head.
# PyTorch GRU gate order in the packed weights is (r, z, n).
# ----------------------------------------------------------------------------
def discriminator_kernel(x_ref, wih_ref, whh_ref, bih_ref, bhhn_ref,
                         wlin_ref, blin_ref, o_ref):
    """
    x_ref    : (T*B, H)      time-major; rows [t*B, (t+1)*B) hold timestep t
    wih_ref  : (L, 3, H, H)  per-layer, per-gate (r,z,n) input weights, (in,out)
    whh_ref  : (L, 3, H, H)  per-layer, per-gate hidden weights, (in,out)
    bih_ref  : (L, 3, 1, H)  effective input biases: (b_ih_r+b_hh_r,
                             b_ih_z+b_hh_z, b_ih_n)  -- host-folded
    bhhn_ref : (L, 1, H)     b_hh_n (must stay inside r*(.) per GRU equations)
    wlin_ref : (1, H)        linear head weight
    blin_ref : (1, 1)        linear head bias
    o_ref    : (B, T)        logits, batch-first, already squeezed
    """
    B, T = o_ref.shape
    _, H = x_ref.shape
    L = wih_ref.shape[0]

    xin = x_ref[...]                                  # (T*B, H) layer input
    for l in range(L):
        # ---- hoisted input projection: one batched matmul per gate over ALL
        #      timesteps, effective bias folded in (never redone in the loop)
        gi = [
            jnp.dot(xin, wih_ref[l, g], preferred_element_type=jnp.float32)
            + bih_ref[l, g]                           # (T*B, H)
            for g in range(3)
        ]
        # per-gate hidden weights, loaded once per layer
        whh_r = whh_ref[l, 0]
        whh_z = whh_ref[l, 1]
        whh_n = whh_ref[l, 2]
        # b_hh_n broadcast hoisted once per layer
        bhh_n = jnp.broadcast_to(bhhn_ref[l], (B, H))

        # ---- sequential recurrence (statically unrolled; static indexing)
        h = jnp.zeros((B, H), jnp.float32)            # PyTorch default h0 = 0
        ys = []
        for t in range(T):
            lo = t * B                                # static, sublane-aligned
            gh_r = jnp.dot(h, whh_r, preferred_element_type=jnp.float32)
            gh_z = jnp.dot(h, whh_z, preferred_element_type=jnp.float32)
            gh_n = jnp.dot(h, whh_n, preferred_element_type=jnp.float32) + bhh_n
            r = jax.nn.sigmoid(gi[0][lo:lo + B, :] + gh_r)
            z = jax.nn.sigmoid(gi[1][lo:lo + B, :] + gh_z)
            n = jnp.tanh(gi[2][lo:lo + B, :] + r * gh_n)
            h = n + z * (h - n)                       # == (1-z)*n + z*h
            ys.append(h)
        xin = jnp.concatenate(ys, axis=0)             # (T*B, H) -> next layer

    # ---- Linear(H, 1) head: one fused multiply + lane reduction over ALL
    #      timesteps of the last layer, then assemble the (B, T) tile.
    w_lin = wlin_ref[...]                             # (1, H)
    scores = jnp.sum(xin * w_lin, axis=-1, keepdims=True)        # (T*B, 1)
    lane = jax.lax.broadcasted_iota(jnp.int32, (B, T), 1)
    out = jnp.zeros((B, T), jnp.float32)
    for t in range(T):
        s_t = scores[t * B:(t + 1) * B, :]            # (B, 1) static slice
        out = jnp.where(lane == t, s_t, out)          # place column t
    o_ref[...] = out + blin_ref[...]                  # bias added once


# ----------------------------------------------------------------------------
# Wrapper: one pallas_call, everything VMEM-resident.
# ----------------------------------------------------------------------------
def discriminator_forward(x_bth, wih, whh, bih_eff, bhh_n, w_lin, b_lin):
    """x_bth: (B, T, H) batch-first. Returns (B, T) logits."""
    B, T, H = x_bth.shape
    L = wih.shape[0]
    # Pad batch to a sublane multiple so every in-kernel slice is aligned.
    # (Free in vregs: a (2, 32) f32 tile already occupies a full (8,128) vreg.)
    B_pad = max(8, ((B + 7) // 8) * 8)
    x_p = jnp.pad(x_bth.astype(jnp.float32), ((0, B_pad - B), (0, 0), (0, 0)))
    # time-major flatten on the XLA side (free): rows t*B_pad:(t+1)*B_pad == step t
    x_flat = jnp.transpose(x_p, (1, 0, 2)).reshape(T * B_pad, H)
    blin = b_lin.reshape(1, 1).astype(jnp.float32)

    out = pl.pallas_call(
        discriminator_kernel,
        out_shape=jax.ShapeDtypeStruct((B_pad, T), jnp.float32),
        grid=(1,),
        in_specs=[
            pl.BlockSpec((T * B_pad, H), lambda i: (0, 0)),
            pl.BlockSpec((L, 3, H, H), lambda i: (0, 0, 0, 0)),
            pl.BlockSpec((L, 3, H, H), lambda i: (0, 0, 0, 0)),
            pl.BlockSpec((L, 3, 1, H), lambda i: (0, 0, 0, 0)),
            pl.BlockSpec((L, 1, H), lambda i: (0, 0, 0)),
            pl.BlockSpec((1, H), lambda i: (0, 0)),
            pl.BlockSpec((1, 1), lambda i: (0, 0)),
        ],
        out_specs=pl.BlockSpec((B_pad, T), lambda i: (0, 0)),
        compiler_params=pltpu.CompilerParams(
            dimension_semantics=("arbitrary",)),
    )(x_flat, wih, whh, bih_eff, bhh_n, w_lin.astype(jnp.float32), blin)
    return out[:B]


# ----------------------------------------------------------------------------
# Parameter init, matching the module's __init__:
#   weight_ih / weight_hh : xavier_uniform_; bias_ih = 1, bias_hh = 0
#   linear.weight : xavier_uniform_, linear.bias = 0
# ----------------------------------------------------------------------------
def xavier_uniform(key, shape):
    fan_out, fan_in = shape                  # PyTorch 2D convention: (out, in)
    bound = (6.0 / (fan_in + fan_out)) ** 0.5
    return jax.random.uniform(key, shape, jnp.float32, -bound, bound)


def init_params(key, hidden_dim, num_layers):
    H = hidden_dim
    layers = []
    for _ in range(num_layers):
        key, k1, k2 = jax.random.split(key, 3)
        w_ih = xavier_uniform(k1, (3 * H, H))
        w_hh = xavier_uniform(k2, (3 * H, H))
        b_ih = jnp.ones((3 * H,), jnp.float32)
        b_hh = jnp.zeros((3 * H,), jnp.float32)
        layers.append((w_ih, w_hh, b_ih, b_hh))
    key, kl = jax.random.split(key)
    w_lin = xavier_uniform(kl, (1, H))
    b_lin = jnp.zeros((1,), jnp.float32)
    return layers, (w_lin, b_lin)


def pack_gru_params(layers, H):
    """PyTorch packed (3H, H) weights -> per-gate (L, 3, H, H) in (in, out)
    layout, with b_hh folded into the input bias for the r and z gates."""
    wih, whh, bih_eff, bhh_n = [], [], [], []
    for (w_ih, w_hh, b_ih, b_hh) in layers:
        wih.append(w_ih.reshape(3, H, H).transpose(0, 2, 1))       # (3, H, H)
        whh.append(w_hh.reshape(3, H, H).transpose(0, 2, 1))       # (3, H, H)
        bi = b_ih.reshape(3, 1, H)
        bh = b_hh.reshape(3, 1, H)
        bih_eff.append(jnp.stack([bi[0] + bh[0],                   # r
                                  bi[1] + bh[1],                   # z
                                  bi[2]]))                         # n (b_ih only)
        bhh_n.append(bh[2])                                        # (1, H)
    return (jnp.stack(wih), jnp.stack(whh),
            jnp.stack(bih_eff), jnp.stack(bhh_n))


# ----------------------------------------------------------------------------
# Pure-JAX reference (lax.scan) for the correctness check.
# ----------------------------------------------------------------------------
def discriminator_ref(x_bth, layers, lin):
    out = x_bth.astype(jnp.float32)
    B = out.shape[0]
    H = out.shape[-1]
    for (w_ih, w_hh, b_ih, b_hh) in layers:
        def step(h, x_t, w_ih=w_ih, w_hh=w_hh, b_ih=b_ih, b_hh=b_hh):
            gi = x_t @ w_ih.T + b_ih
            gh = h @ w_hh.T + b_hh
            i_r, i_z, i_n = gi[:, :H], gi[:, H:2 * H], gi[:, 2 * H:]
            h_r, h_z, h_n = gh[:, :H], gh[:, H:2 * H], gh[:, 2 * H:]
            r = jax.nn.sigmoid(i_r + h_r)
            z = jax.nn.sigmoid(i_z + h_z)
            n = jnp.tanh(i_n + r * h_n)
            h_new = (1.0 - z) * n + z * h
            return h_new, h_new
        h0 = jnp.zeros((B, H), jnp.float32)
        _, ys = jax.lax.scan(step, h0, jnp.swapaxes(out, 0, 1))
        out = jnp.swapaxes(ys, 0, 1)
    w_lin, b_lin = lin
    return (out @ w_lin.T + b_lin)[..., 0]


if __name__ == "__main__":
    # param = {'hidden_dim': 32, 'num_layers': 2, 'module': 'gru'}
    B, T, HIDDEN, NUM_LAYERS = 2, 8, 32, 2

    key = jax.random.PRNGKey(0)
    key, kx = jax.random.split(key)
    x = jax.random.normal(kx, (B, T, HIDDEN), jnp.float32)   # batch-first input
    # The T (sequence-lengths) argument of Discriminator.forward is unused in
    # the math; omitted.

    layers, (w_lin, b_lin) = init_params(key, HIDDEN, NUM_LAYERS)
    wih, whh, bih_eff, bhh_n = pack_gru_params(layers, HIDDEN)

    fwd = jax.jit(discriminator_forward)
    out = fwd(x, wih, whh, bih_eff, bhh_n, w_lin, b_lin)
    out = jax.block_until_ready(out)
    assert out.shape == (B, T), out.shape

    ref = discriminator_ref(x, layers, (w_lin, b_lin))
    err = float(jnp.max(jnp.abs(out - ref)))
    assert jnp.allclose(out, ref, atol=1e-4, rtol=1e-4), err

    print("KERNEL_OK")
</pallas_src>

<mosaic_0001>
module attributes {stable_mosaic.version = 11 : i64} {
  func.func @discriminator_kernel(%arg0: i32, %arg1: memref<64x32xf32, #tpu.memory_space<vmem>>, %arg2: memref<2x3x32x32xf32, #tpu.memory_space<vmem>>, %arg3: memref<2x3x32x32xf32, #tpu.memory_space<vmem>>, %arg4: memref<2x3x1x32xf32, #tpu.memory_space<vmem>>, %arg5: memref<2x1x32xf32, #tpu.memory_space<vmem>>, %arg6: memref<1x32xf32, #tpu.memory_space<vmem>>, %arg7: memref<1x1xf32, #tpu.memory_space<vmem>>, %arg8: memref<8x8xf32, #tpu.memory_space<vmem>>) attributes {dimension_semantics = [#tpu.dimension_semantics<arbitrary>], iteration_bounds = array<i64: 1>, scalar_prefetch = 0 : i64, scratch_operands = 0 : i64, tpu.core_type = #tpu.core_type<tc>, window_params = [{pipeline_mode = #tpu.pipeline_mode<synchronous>, transform_indices = @transform_0, window_bounds = array<i64: 64, 32>}, {pipeline_mode = #tpu.pipeline_mode<synchronous>, transform_indices = @transform_1, window_bounds = array<i64: 2, 3, 32, 32>}, {pipeline_mode = #tpu.pipeline_mode<synchronous>, transform_indices = @transform_2, window_bounds = array<i64: 2, 3, 32, 32>}, {pipeline_mode = #tpu.pipeline_mode<synchronous>, transform_indices = @transform_3, window_bounds = array<i64: 2, 3, 1, 32>}, {pipeline_mode = #tpu.pipeline_mode<synchronous>, transform_indices = @transform_4, window_bounds = array<i64: 2, 1, 32>}, {pipeline_mode = #tpu.pipeline_mode<synchronous>, transform_indices = @transform_5, window_bounds = array<i64: 1, 32>}, {pipeline_mode = #tpu.pipeline_mode<synchronous>, transform_indices = @transform_6, window_bounds = array<i64: 1, 1>}, {pipeline_mode = #tpu.pipeline_mode<synchronous>, transform_indices = @transform_7, window_bounds = array<i64: 8, 8>}]} {
    %c0 = arith.constant 0 : index
    %c0_0 = arith.constant 0 : index
    %0 = vector.load %arg1[%c0, %c0_0] : memref<64x32xf32, #tpu.memory_space<vmem>>, vector<64x32xf32>
    %c0_1 = arith.constant 0 : index
    %c0_2 = arith.constant 0 : index
    %c0_3 = arith.constant 0 : index
    %c0_4 = arith.constant 0 : index
    %1 = vector.load %arg2[%c0_1, %c0_2, %c0_3, %c0_4] : memref<2x3x32x32xf32, #tpu.memory_space<vmem>>, vector<1x1x32x32xf32>
    %2 = vector.shape_cast %1 : vector<1x1x32x32xf32> to vector<32x32xf32>
    %cst = arith.constant dense<0.000000e+00> : vector<64x32xf32>
    %3 = tpu.matmul %0, %2, %cst {dimension_numbers = #tpu.dot_dimension_numbers<[1], [0], [0], [1], [0, 0, 1, 1], [], []>} : vector<64x32xf32>, vector<32x32xf32>, vector<64x32xf32> -> vector<64x32xf32>
    %c0_5 = arith.constant 0 : index
    %c0_6 = arith.constant 0 : index
    %c0_7 = arith.constant 0 : index
    %c0_8 = arith.constant 0 : index
    %4 = vector.load %arg4[%c0_5, %c0_6, %c0_7, %c0_8] : memref<2x3x1x32xf32, #tpu.memory_space<vmem>>, vector<1x1x1x32xf32>
    %5 = vector.shape_cast %4 : vector<1x1x1x32xf32> to vector<1x32xf32>
    %6 = vector.broadcast %5 : vector<1x32xf32> to vector<64x32xf32>
    %7 = arith.addf %3, %6 : vector<64x32xf32>
    %c0_9 = arith.constant 0 : index
    %c1 = arith.constant 1 : index
    %c0_10 = arith.constant 0 : index
    %c0_11 = arith.constant 0 : index
    %8 = vector.load %arg2[%c0_9, %c1, %c0_10, %c0_11] : memref<2x3x32x32xf32, #tpu.memory_space<vmem>>, vector<1x1x32x32xf32>
    %9 = vector.shape_cast %8 : vector<1x1x32x32xf32> to vector<32x32xf32>
    %cst_12 = arith.constant dense<0.000000e+00> : vector<64x32xf32>
    %10 = tpu.matmul %0, %9, %cst_12 {dimension_numbers = #tpu.dot_dimension_numbers<[1], [0], [0], [1], [0, 0, 1, 1], [], []>} : vector<64x32xf32>, vector<32x32xf32>, vector<64x32xf32> -> vector<64x32xf32>
    %c0_13 = arith.constant 0 : index
    %c1_14 = arith.constant 1 : index
    %c0_15 = arith.constant 0 : index
    %c0_16 = arith.constant 0 : index
    %11 = vector.load %arg4[%c0_13, %c1_14, %c0_15, %c0_16] : memref<2x3x1x32xf32, #tpu.memory_space<vmem>>, vector<1x1x1x32xf32>
    %12 = vector.shape_cast %11 : vector<1x1x1x32xf32> to vector<1x32xf32>
    %13 = vector.broadcast %12 : vector<1x32xf32> to vector<64x32xf32>
    %14 = arith.addf %10, %13 : vector<64x32xf32>
    %c0_17 = arith.constant 0 : index
    %c2 = arith.constant 2 : index
    %c0_18 = arith.constant 0 : index
    %c0_19 = arith.constant 0 : index
    %15 = vector.load %arg2[%c0_17, %c2, %c0_18, %c0_19] : memref<2x3x32x32xf32, #tpu.memory_space<vmem>>, vector<1x1x32x32xf32>
    %16 = vector.shape_cast %15 : vector<1x1x32x32xf32> to vector<32x32xf32>
    %cst_20 = arith.constant dense<0.000000e+00> : vector<64x32xf32>
    %17 = tpu.matmul %0, %16, %cst_20 {dimension_numbers = #tpu.dot_dimension_numbers<[1], [0], [0], [1], [0, 0, 1, 1], [], []>} : vector<64x32xf32>, vector<32x32xf32>, vector<64x32xf32> -> vector<64x32xf32>
    %c0_21 = arith.constant 0 : index
    %c2_22 = arith.constant 2 : index
    %c0_23 = arith.constant 0 : index
    %c0_24 = arith.constant 0 : index
    %18 = vector.load %arg4[%c0_21, %c2_22, %c0_23, %c0_24] : memref<2x3x1x32xf32, #tpu.memory_space<vmem>>, vector<1x1x1x32xf32>
    %19 = vector.shape_cast %18 : vector<1x1x1x32xf32> to vector<1x32xf32>
    %20 = vector.broadcast %19 : vector<1x32xf32> to vector<64x32xf32>
    %21 = arith.addf %17, %20 : vector<64x32xf32>
    %c0_25 = arith.constant 0 : index
    %c0_26 = arith.constant 0 : index
    %c0_27 = arith.constant 0 : index
    %c0_28 = arith.constant 0 : index
    %22 = vector.load %arg3[%c0_25, %c0_26, %c0_27, %c0_28] : memref<2x3x32x32xf32, #tpu.memory_space<vmem>>, vector<1x1x32x32xf32>
    %23 = vector.shape_cast %22 : vector<1x1x32x32xf32> to vector<32x32xf32>
    %c0_29 = arith.constant 0 : index
    %c1_30 = arith.constant 1 : index
    %c0_31 = arith.constant 0 : index
    %c0_32 = arith.constant 0 : index
    %24 = vector.load %arg3[%c0_29, %c1_30, %c0_31, %c0_32] : memref<2x3x32x32xf32, #tpu.memory_space<vmem>>, vector<1x1x32x32xf32>
    %25 = vector.shape_cast %24 : vector<1x1x32x32xf32> to vector<32x32xf32>
    %c0_33 = arith.constant 0 : index
    %c2_34 = arith.constant 2 : index
    %c0_35 = arith.constant 0 : index
    %c0_36 = arith.constant 0 : index
    %26 = vector.load %arg3[%c0_33, %c2_34, %c0_35, %c0_36] : memref<2x3x32x32xf32, #tpu.memory_space<vmem>>, vector<1x1x32x32xf32>
    %27 = vector.shape_cast %26 : vector<1x1x32x32xf32> to vector<32x32xf32>
    %c0_37 = arith.constant 0 : index
    %c0_38 = arith.constant 0 : index
    %c0_39 = arith.constant 0 : index
    %28 = vector.load %arg5[%c0_37, %c0_38, %c0_39] : memref<2x1x32xf32, #tpu.memory_space<vmem>>, vector<1x1x32xf32>
    %29 = vector.shape_cast %28 : vector<1x1x32xf32> to vector<1x32xf32>
    %30 = vector.shape_cast %29 : vector<1x32xf32> to vector<1x32xf32>
    %31 = vector.broadcast %30 : vector<1x32xf32> to vector<8x32xf32>
    %cst_40 = arith.constant 0.000000e+00 : f32
    %32 = vector.broadcast %cst_40 : f32 to vector<8x32xf32>
    %cst_41 = arith.constant dense<0.000000e+00> : vector<8x32xf32>
    %33 = tpu.matmul %32, %23, %cst_41 {dimension_numbers = #tpu.dot_dimension_numbers<[1], [0], [0], [1], [0, 0, 1, 1], [], []>} : vector<8x32xf32>, vector<32x32xf32>, vector<8x32xf32> -> vector<8x32xf32>
    %cst_42 = arith.constant dense<0.000000e+00> : vector<8x32xf32>
    %34 = tpu.matmul %32, %25, %cst_42 {dimension_numbers = #tpu.dot_dimension_numbers<[1], [0], [0], [1], [0, 0, 1, 1], [], []>} : vector<8x32xf32>, vector<32x32xf32>, vector<8x32xf32> -> vector<8x32xf32>
    %cst_43 = arith.constant dense<0.000000e+00> : vector<8x32xf32>
    %35 = tpu.matmul %32, %27, %cst_43 {dimension_numbers = #tpu.dot_dimension_numbers<[1], [0], [0], [1], [0, 0, 1, 1], [], []>} : vector<8x32xf32>, vector<32x32xf32>, vector<8x32xf32> -> vector<8x32xf32>
    %36 = arith.addf %35, %31 : vector<8x32xf32>
    %37 = vector.extract_strided_slice %7 {offsets = [0, 0], sizes = [8, 32], strides = [1, 1]} : vector<64x32xf32> to vector<8x32xf32>
    %38 = arith.addf %37, %33 : vector<8x32xf32>
    %39 = arith.negf %38 : vector<8x32xf32>
    %40 = math.exp %39 : vector<8x32xf32>
    %cst_44 = arith.constant 1.000000e+00 : f32
    %41 = vector.broadcast %cst_44 : f32 to vector<8x32xf32>
    %42 = arith.addf %41, %40 : vector<8x32xf32>
    %43 = arith.divf %41, %42 : vector<8x32xf32>
    %44 = vector.extract_strided_slice %14 {offsets = [0, 0], sizes = [8, 32], strides = [1, 1]} : vector<64x32xf32> to vector<8x32xf32>
    %45 = arith.addf %44, %34 : vector<8x32xf32>
    %46 = arith.negf %45 : vector<8x32xf32>
    %47 = math.exp %46 : vector<8x32xf32>
    %cst_45 = arith.constant 1.000000e+00 : f32
    %48 = vector.broadcast %cst_45 : f32 to vector<8x32xf32>
    %49 = arith.addf %48, %47 : vector<8x32xf32>
    %50 = arith.divf %48, %49 : vector<8x32xf32>
    %51 = vector.extract_strided_slice %21 {offsets = [0, 0], sizes = [8, 32], strides = [1, 1]} : vector<64x32xf32> to vector<8x32xf32>
    %52 = arith.mulf %43, %36 : vector<8x32xf32>
    %53 = arith.addf %51, %52 : vector<8x32xf32>
    %54 = math.tanh %53 : vector<8x32xf32>
    %55 = arith.subf %32, %54 : vector<8x32xf32>
    %56 = arith.mulf %50, %55 : vector<8x32xf32>
    %57 = arith.addf %54, %56 : vector<8x32xf32>
    %cst_46 = arith.constant dense<0.000000e+00> : vector<8x32xf32>
    %58 = tpu.matmul %57, %23, %cst_46 {dimension_numbers = #tpu.dot_dimension_numbers<[1], [0], [0], [1], [0, 0, 1, 1], [], []>} : vector<8x32xf32>, vector<32x32xf32>, vector<8x32xf32> -> vector<8x32xf32>
    %cst_47 = arith.constant dense<0.000000e+00> : vector<8x32xf32>
    %59 = tpu.matmul %57, %25, %cst_47 {dimension_numbers = #tpu.dot_dimension_numbers<[1], [0], [0], [1], [0, 0, 1, 1], [], []>} : vector<8x32xf32>, vector<32x32xf32>, vector<8x32xf32> -> vector<8x32xf32>
    %cst_48 = arith.constant dense<0.000000e+00> : vector<8x32xf32>
    %60 = tpu.matmul %57, %27, %cst_48 {dimension_numbers = #tpu.dot_dimension_numbers<[1], [0], [0], [1], [0, 0, 1, 1], [], []>} : vector<8x32xf32>, vector<32x32xf32>, vector<8x32xf32> -> vector<8x32xf32>
    %61 = arith.addf %60, %31 : vector<8x32xf32>
    %62 = vector.extract_strided_slice %7 {offsets = [8, 0], sizes = [8, 32], strides = [1, 1]} : vector<64x32xf32> to vector<8x32xf32>
    %63 = arith.addf %62, %58 : vector<8x32xf32>
    %64 = arith.negf %63 : vector<8x32xf32>
    %65 = math.exp %64 : vector<8x32xf32>
    %cst_49 = arith.constant 1.000000e+00 : f32
    %66 = vector.broadcast %cst_49 : f32 to vector<8x32xf32>
    %67 = arith.addf %66, %65 : vector<8x32xf32>
    %68 = arith.divf %66, %67 : vector<8x32xf32>
    %69 = vector.extract_strided_slice %14 {offsets = [8, 0], sizes = [8, 32], strides = [1, 1]} : vector<64x32xf32> to vector<8x32xf32>
    %70 = arith.addf %69, %59 : vector<8x32xf32>
    %71 = arith.negf %70 : vector<8x32xf32>
    %72 = math.exp %71 : vector<8x32xf32>
    %cst_50 = arith.constant 1.000000e+00 : f32
    %73 = vector.broadcast %cst_50 : f32 to vector<8x32xf32>
    %74 = arith.addf %73, %72 : vector<8x32xf32>
    %75 = arith.divf %73, %74 : vector<8x32xf32>
    %76 = vector.extract_strided_slice %21 {offsets = [8, 0], sizes = [8, 32], strides = [1, 1]} : vector<64x32xf32> to vector<8x32xf32>
    %77 = arith.mulf %68, %61 : vector<8x32xf32>
    %78 = arith.addf %76, %77 : vector<8x32xf32>
    %79 = math.tanh %78 : vector<8x32xf32>
    %80 = arith.subf %57, %79 : vector<8x32xf32>
    %81 = arith.mulf %75, %80 : vector<8x32xf32>
    %82 = arith.addf %79, %81 : vector<8x32xf32>
    %cst_51 = arith.constant dense<0.000000e+00> : vector<8x32xf32>
    %83 = tpu.matmul %82, %23, %cst_51 {dimension_numbers = #tpu.dot_dimension_numbers<[1], [0], [0], [1], [0, 0, 1, 1], [], []>} : vector<8x32xf32>, vector<32x32xf32>, vector<8x32xf32> -> vector<8x32xf32>
    %cst_52 = arith.constant dense<0.000000e+00> : vector<8x32xf32>
    %84 = tpu.matmul %82, %25, %cst_52 {dimension_numbers = #tpu.dot_dimension_numbers<[1], [0], [0], [1], [0, 0, 1, 1], [], []>} : vector<8x32xf32>, vector<32x32xf32>, vector<8x32xf32> -> vector<8x32xf32>
    %cst_53 = arith.constant dense<0.000000e+00> : vector<8x32xf32>
    %85 = tpu.matmul %82, %27, %cst_53 {dimension_numbers = #tpu.dot_dimension_numbers<[1], [0], [0], [1], [0, 0, 1, 1], [], []>} : vector<8x32xf32>, vector<32x32xf32>, vector<8x32xf32> -> vector<8x32xf32>
    %86 = arith.addf %85, %31 : vector<8x32xf32>
    %87 = vector.extract_strided_slice %7 {offsets = [16, 0], sizes = [8, 32], strides = [1, 1]} : vector<64x32xf32> to vector<8x32xf32>
    %88 = arith.addf %87, %83 : vector<8x32xf32>
    %89 = arith.negf %88 : vector<8x32xf32>
    %90 = math.exp %89 : vector<8x32xf32>
    %cst_54 = arith.constant 1.000000e+00 : f32
    %91 = vector.broadcast %cst_54 : f32 to vector<8x32xf32>
    %92 = arith.addf %91, %90 : vector<8x32xf32>
    %93 = arith.divf %91, %92 : vector<8x32xf32>
    %94 = vector.extract_strided_slice %14 {offsets = [16, 0], sizes = [8, 32], strides = [1, 1]} : vector<64x32xf32> to vector<8x32xf32>
    %95 = arith.addf %94, %84 : vector<8x32xf32>
    %96 = arith.negf %95 : vector<8x32xf32>
    %97 = math.exp %96 : vector<8x32xf32>
    %cst_55 = arith.constant 1.000000e+00 : f32
    %98 = vector.broadcast %cst_55 : f32 to vector<8x32xf32>
    %99 = arith.addf %98, %97 : vector<8x32xf32>
    %100 = arith.divf %98, %99 : vector<8x32xf32>
    %101 = vector.extract_strided_slice %21 {offsets = [16, 0], sizes = [8, 32], strides = [1, 1]} : vector<64x32xf32> to vector<8x32xf32>
    %102 = arith.mulf %93, %86 : vector<8x32xf32>
    %103 = arith.addf %101, %102 : vector<8x32xf32>
    %104 = math.tanh %103 : vector<8x32xf32>
    %105 = arith.subf %82, %104 : vector<8x32xf32>
    %106 = arith.mulf %100, %105 : vector<8x32xf32>
    %107 = arith.addf %104, %106 : vector<8x32xf32>
    %cst_56 = arith.constant dense<0.000000e+00> : vector<8x32xf32>
    %108 = tpu.matmul %107, %23, %cst_56 {dimension_numbers = #tpu.dot_dimension_numbers<[1], [0], [0], [1], [0, 0, 1, 1], [], []>} : vector<8x32xf32>, vector<32x32xf32>, vector<8x32xf32> -> vector<8x32xf32>
    %cst_57 = arith.constant dense<0.000000e+00> : vector<8x32xf32>
    %109 = tpu.matmul %107, %25, %cst_57 {dimension_numbers = #tpu.dot_dimension_numbers<[1], [0], [0], [1], [0, 0, 1, 1], [], []>} : vector<8x32xf32>, vector<32x32xf32>, vector<8x32xf32> -> vector<8x32xf32>
    %cst_58 = arith.constant dense<0.000000e+00> : vector<8x32xf32>
    %110 = tpu.matmul %107, %27, %cst_58 {dimension_numbers = #tpu.dot_dimension_numbers<[1], [0], [0], [1], [0, 0, 1, 1], [], []>} : vector<8x32xf32>, vector<32x32xf32>, vector<8x32xf32> -> vector<8x32xf32>
    %111 = arith.addf %110, %31 : vector<8x32xf32>
    %112 = vector.extract_strided_slice %7 {offsets = [24, 0], sizes = [8, 32], strides = [1, 1]} : vector<64x32xf32> to vector<8x32xf32>
    %113 = arith.addf %112, %108 : vector<8x32xf32>
    %114 = arith.negf %113 : vector<8x32xf32>
    %115 = math.exp %114 : vector<8x32xf32>
    %cst_59 = arith.constant 1.000000e+00 : f32
    %116 = vector.broadcast %cst_59 : f32 to vector<8x32xf32>
    %117 = arith.addf %116, %115 : vector<8x32xf32>
    %118 = arith.divf %116, %117 : vector<8x32xf32>
    %119 = vector.extract_strided_slice %14 {offsets = [24, 0], sizes = [8, 32], strides = [1, 1]} : vector<64x32xf32> to vector<8x32xf32>
    %120 = arith.addf %119, %109 : vector<8x32xf32>
    %121 = arith.negf %120 : vector<8x32xf32>
    %122 = math.exp %121 : vector<8x32xf32>
    %cst_60 = arith.constant 1.000000e+00 : f32
    %123 = vector.broadcast %cst_60 : f32 to vector<8x32xf32>
    %124 = arith.addf %123, %122 : vector<8x32xf32>
    %125 = arith.divf %123, %124 : vector<8x32xf32>
    %126 = vector.extract_strided_slice %21 {offsets = [24, 0], sizes = [8, 32], strides = [1, 1]} : vector<64x32xf32> to vector<8x32xf32>
    %127 = arith.mulf %118, %111 : vector<8x32xf32>
    %128 = arith.addf %126, %127 : vector<8x32xf32>
    %129 = math.tanh %128 : vector<8x32xf32>
    %130 = arith.subf %107, %129 : vector<8x32xf32>
    %131 = arith.mulf %125, %130 : vector<8x32xf32>
    %132 = arith.addf %129, %131 : vector<8x32xf32>
    %cst_61 = arith.constant dense<0.000000e+00> : vector<8x32xf32>
    %133 = tpu.matmul %132, %23, %cst_61 {dimension_numbers = #tpu.dot_dimension_numbers<[1], [0], [0], [1], [0, 0, 1, 1], [], []>} : vector<8x32xf32>, vector<32x32xf32>, vector<8x32xf32> -> vector<8x32xf32>
    %cst_62 = arith.constant dense<0.000000e+00> : vector<8x32xf32>
    %134 = tpu.matmul %132, %25, %cst_62 {dimension_numbers = #tpu.dot_dimension_numbers<[1], [0], [0], [1], [0, 0, 1, 1], [], []>} : vector<8x32xf32>, vector<32x32xf32>, vector<8x32xf32> -> vector<8x32xf32>
    %cst_63 = arith.constant dense<0.000000e+00> : vector<8x32xf32>
    %135 = tpu.matmul %132, %27, %cst_63 {dimension_numbers = #tpu.dot_dimension_numbers<[1], [0], [0], [1], [0, 0, 1, 1], [], []>} : vector<8x32xf32>, vector<32x32xf32>, vector<8x32xf32> -> vector<8x32xf32>
    %136 = arith.addf %135, %31 : vector<8x32xf32>
    %137 = vector.extract_strided_slice %7 {offsets = [32, 0], sizes = [8, 32], strides = [1, 1]} : vector<64x32xf32> to vector<8x32xf32>
    %138 = arith.addf %137, %133 : vector<8x32xf32>
    %139 = arith.negf %138 : vector<8x32xf32>
    %140 = math.exp %139 : vector<8x32xf32>
    %cst_64 = arith.constant 1.000000e+00 : f32
    %141 = vector.broadcast %cst_64 : f32 to vector<8x32xf32>
    %142 = arith.addf %141, %140 : vector<8x32xf32>
    %143 = arith.divf %141, %142 : vector<8x32xf32>
    %144 = vector.extract_strided_slice %14 {offsets = [32, 0], sizes = [8, 32], strides = [1, 1]} : vector<64x32xf32> to vector<8x32xf32>
    %145 = arith.addf %144, %134 : vector<8x32xf32>
    %146 = arith.negf %145 : vector<8x32xf32>
    %147 = math.exp %146 : vector<8x32xf32>
    %cst_65 = arith.constant 1.000000e+00 : f32
    %148 = vector.broadcast %cst_65 : f32 to vector<8x32xf32>
    %149 = arith.addf %148, %147 : vector<8x32xf32>
    %150 = arith.divf %148, %149 : vector<8x32xf32>
    %151 = vector.extract_strided_slice %21 {offsets = [32, 0], sizes = [8, 32], strides = [1, 1]} : vector<64x32xf32> to vector<8x32xf32>
    %152 = arith.mulf %143, %136 : vector<8x32xf32>
    %153 = arith.addf %151, %152 : vector<8x32xf32>
    %154 = math.tanh %153 : vector<8x32xf32>
    %155 = arith.subf %132, %154 : vector<8x32xf32>
    %156 = arith.mulf %150, %155 : vector<8x32xf32>
    %157 = arith.addf %154, %156 : vector<8x32xf32>
    %cst_66 = arith.constant dense<0.000000e+00> : vector<8x32xf32>
    %158 = tpu.matmul %157, %23, %cst_66 {dimension_numbers = #tpu.dot_dimension_numbers<[1], [0], [0], [1], [0, 0, 1, 1], [], []>} : vector<8x32xf32>, vector<32x32xf32>, vector<8x32xf32> -> vector<8x32xf32>
    %cst_67 = arith.constant dense<0.000000e+00> : vector<8x32xf32>
    %159 = tpu.matmul %157, %25, %cst_67 {dimension_numbers = #tpu.dot_dimension_numbers<[1], [0], [0], [1], [0, 0, 1, 1], [], []>} : vector<8x32xf32>, vector<32x32xf32>, vector<8x32xf32> -> vector<8x32xf32>
    %cst_68 = arith.constant dense<0.000000e+00> : vector<8x32xf32>
    %160 = tpu.matmul %157, %27, %cst_68 {dimension_numbers = #tpu.dot_dimension_numbers<[1], [0], [0], [1], [0, 0, 1, 1], [], []>} : vector<8x32xf32>, vector<32x32xf32>, vector<8x32xf32> -> vector<8x32xf32>
    %161 = arith.addf %160, %31 : vector<8x32xf32>
    %162 = vector.extract_strided_slice %7 {offsets = [40, 0], sizes = [8, 32], strides = [1, 1]} : vector<64x32xf32> to vector<8x32xf32>
    %163 = arith.addf %162, %158 : vector<8x32xf32>
    %164 = arith.negf %163 : vector<8x32xf32>
    %165 = math.exp %164 : vector<8x32xf32>
    %cst_69 = arith.constant 1.000000e+00 : f32
    %166 = vector.broadcast %cst_69 : f32 to vector<8x32xf32>
    %167 = arith.addf %166, %165 : vector<8x32xf32>
    %168 = arith.divf %166, %167 : vector<8x32xf32>
    %169 = vector.extract_strided_slice %14 {offsets = [40, 0], sizes = [8, 32], strides = [1, 1]} : vector<64x32xf32> to vector<8x32xf32>
    %170 = arith.addf %169, %159 : vector<8x32xf32>
    %171 = arith.negf %170 : vector<8x32xf32>
    %172 = math.exp %171 : vector<8x32xf32>
    %cst_70 = arith.constant 1.000000e+00 : f32
    %173 = vector.broadcast %cst_70 : f32 to vector<8x32xf32>
    %174 = arith.addf %173, %172 : vector<8x32xf32>
    %175 = arith.divf %173, %174 : vector<8x32xf32>
    %176 = vector.extract_strided_slice %21 {offsets = [40, 0], sizes = [8, 32], strides = [1, 1]} : vector<64x32xf32> to vector<8x32xf32>
    %177 = arith.mulf %168, %161 : vector<8x32xf32>
    %178 = arith.addf %176, %177 : vector<8x32xf32>
    %179 = math.tanh %178 : vector<8x32xf32>
    %180 = arith.subf %157, %179 : vector<8x32xf32>
    %181 = arith.mulf %175, %180 : vector<8x32xf32>
    %182 = arith.addf %179, %181 : vector<8x32xf32>
    %cst_71 = arith.constant dense<0.000000e+00> : vector<8x32xf32>
    %183 = tpu.matmul %182, %23, %cst_71 {dimension_numbers = #tpu.dot_dimension_numbers<[1], [0], [0], [1], [0, 0, 1, 1], [], []>} : vector<8x32xf32>, vector<32x32xf32>, vector<8x32xf32> -> vector<8x32xf32>
    %cst_72 = arith.constant dense<0.000000e+00> : vector<8x32xf32>
    %184 = tpu.matmul %182, %25, %cst_72 {dimension_numbers = #tpu.dot_dimension_numbers<[1], [0], [0], [1], [0, 0, 1, 1], [], []>} : vector<8x32xf32>, vector<32x32xf32>, vector<8x32xf32> -> vector<8x32xf32>
    %cst_73 = arith.constant dense<0.000000e+00> : vector<8x32xf32>
    %185 = tpu.matmul %182, %27, %cst_73 {dimension_numbers = #tpu.dot_dimension_numbers<[1], [0], [0], [1], [0, 0, 1, 1], [], []>} : vector<8x32xf32>, vector<32x32xf32>, vector<8x32xf32> -> vector<8x32xf32>
    %186 = arith.addf %185, %31 : vector<8x32xf32>
    %187 = vector.extract_strided_slice %7 {offsets = [48, 0], sizes = [8, 32], strides = [1, 1]} : vector<64x32xf32> to vector<8x32xf32>
    %188 = arith.addf %187, %183 : vector<8x32xf32>
    %189 = arith.negf %188 : vector<8x32xf32>
    %190 = math.exp %189 : vector<8x32xf32>
    %cst_74 = arith.constant 1.000000e+00 : f32
    %191 = vector.broadcast %cst_74 : f32 to vector<8x32xf32>
    %192 = arith.addf %191, %190 : vector<8x32xf32>
    %193 = arith.divf %191, %192 : vector<8x32xf32>
    %194 = vector.extract_strided_slice %14 {offsets = [48, 0], sizes = [8, 32], strides = [1, 1]} : vector<64x32xf32> to vector<8x32xf32>
    %195 = arith.addf %194, %184 : vector<8x32xf32>
    %196 = arith.negf %195 : vector<8x32xf32>
    %197 = math.exp %196 : vector<8x32xf32>
    %cst_75 = arith.constant 1.000000e+00 : f32
    %198 = vector.broadcast %cst_75 : f32 to vector<8x32xf32>
    %199 = arith.addf %198, %197 : vector<8x32xf32>
    %200 = arith.divf %198, %199 : vector<8x32xf32>
    %201 = vector.extract_strided_slice %21 {offsets = [48, 0], sizes = [8, 32], strides = [1, 1]} : vector<64x32xf32> to vector<8x32xf32>
    %202 = arith.mulf %193, %186 : vector<8x32xf32>
    %203 = arith.addf %201, %202 : vector<8x32xf32>
    %204 = math.tanh %203 : vector<8x32xf32>
    %205 = arith.subf %182, %204 : vector<8x32xf32>
    %206 = arith.mulf %200, %205 : vector<8x32xf32>
    %207 = arith.addf %204, %206 : vector<8x32xf32>
    %cst_76 = arith.constant dense<0.000000e+00> : vector<8x32xf32>
    %208 = tpu.matmul %207, %23, %cst_76 {dimension_numbers = #tpu.dot_dimension_numbers<[1], [0], [0], [1], [0, 0, 1, 1], [], []>} : vector<8x32xf32>, vector<32x32xf32>, vector<8x32xf32> -> vector<8x32xf32>
    %cst_77 = arith.constant dense<0.000000e+00> : vector<8x32xf32>
    %209 = tpu.matmul %207, %25, %cst_77 {dimension_numbers = #tpu.dot_dimension_numbers<[1], [0], [0], [1], [0, 0, 1, 1], [], []>} : vector<8x32xf32>, vector<32x32xf32>, vector<8x32xf32> -> vector<8x32xf32>
    %cst_78 = arith.constant dense<0.000000e+00> : vector<8x32xf32>
    %210 = tpu.matmul %207, %27, %cst_78 {dimension_numbers = #tpu.dot_dimension_numbers<[1], [0], [0], [1], [0, 0, 1, 1], [], []>} : vector<8x32xf32>, vector<32x32xf32>, vector<8x32xf32> -> vector<8x32xf32>
    %211 = arith.addf %210, %31 : vector<8x32xf32>
    %212 = vector.extract_strided_slice %7 {offsets = [56, 0], sizes = [8, 32], strides = [1, 1]} : vector<64x32xf32> to vector<8x32xf32>
    %213 = arith.addf %212, %208 : vector<8x32xf32>
    %214 = arith.negf %213 : vector<8x32xf32>
    %215 = math.exp %214 : vector<8x32xf32>
    %cst_79 = arith.constant 1.000000e+00 : f32
    %216 = vector.broadcast %cst_79 : f32 to vector<8x32xf32>
    %217 = arith.addf %216, %215 : vector<8x32xf32>
    %218 = arith.divf %216, %217 : vector<8x32xf32>
    %219 = vector.extract_strided_slice %14 {offsets = [56, 0], sizes = [8, 32], strides = [1, 1]} : vector<64x32xf32> to vector<8x32xf32>
    %220 = arith.addf %219, %209 : vector<8x32xf32>
    %221 = arith.negf %220 : vector<8x32xf32>
    %222 = math.exp %221 : vector<8x32xf32>
    %cst_80 = arith.constant 1.000000e+00 : f32
    %223 = vector.broadcast %cst_80 : f32 to vector<8x32xf32>
    %224 = arith.addf %223, %222 : vector<8x32xf32>
    %225 = arith.divf %223, %224 : vector<8x32xf32>
    %226 = vector.extract_strided_slice %21 {offsets = [56, 0], sizes = [8, 32], strides = [1, 1]} : vector<64x32xf32> to vector<8x32xf32>
    %227 = arith.mulf %218, %211 : vector<8x32xf32>
    %228 = arith.addf %226, %227 : vector<8x32xf32>
    %229 = math.tanh %228 : vector<8x32xf32>
    %230 = arith.subf %207, %229 : vector<8x32xf32>
    %231 = arith.mulf %225, %230 : vector<8x32xf32>
    %232 = arith.addf %229, %231 : vector<8x32xf32>
    %233 = tpu.concatenate %57, %82, %107, %132, %157, %182, %207, %232 in 0 : vector<8x32xf32>, vector<8x32xf32>, vector<8x32xf32>, vector<8x32xf32>, vector<8x32xf32>, vector<8x32xf32>, vector<8x32xf32>, vector<8x32xf32> -> vector<64x32xf32>
    %c1_81 = arith.constant 1 : index
    %c0_82 = arith.constant 0 : index
    %c0_83 = arith.constant 0 : index
    %c0_84 = arith.constant 0 : index
    %234 = vector.load %arg2[%c1_81, %c0_82, %c0_83, %c0_84] : memref<2x3x32x32xf32, #tpu.memory_space<vmem>>, vector<1x1x32x32xf32>
    %235 = vector.shape_cast %234 : vector<1x1x32x32xf32> to vector<32x32xf32>
    %cst_85 = arith.constant dense<0.000000e+00> : vector<64x32xf32>
    %236 = tpu.matmul %233, %235, %cst_85 {dimension_numbers = #tpu.dot_dimension_numbers<[1], [0], [0], [1], [0, 0, 1, 1], [], []>} : vector<64x32xf32>, vector<32x32xf32>, vector<64x32xf32> -> vector<64x32xf32>
    %c1_86 = arith.constant 1 : index
    %c0_87 = arith.constant 0 : index
    %c0_88 = arith.constant 0 : index
    %c0_89 = arith.constant 0 : index
    %237 = vector.load %arg4[%c1_86, %c0_87, %c0_88, %c0_89] : memref<2x3x1x32xf32, #tpu.memory_space<vmem>>, vector<1x1x1x32xf32>
    %238 = vector.shape_cast %237 : vector<1x1x1x32xf32> to vector<1x32xf32>
    %239 = vector.broadcast %238 : vector<1x32xf32> to vector<64x32xf32>
    %240 = arith.addf %236, %239 : vector<64x32xf32>
    %c1_90 = arith.constant 1 : index
    %c1_91 = arith.constant 1 : index
    %c0_92 = arith.constant 0 : index
    %c0_93 = arith.constant 0 : index
    %241 = vector.load %arg2[%c1_90, %c1_91, %c0_92, %c0_93] : memref<2x3x32x32xf32, #tpu.memory_space<vmem>>, vector<1x1x32x32xf32>
    %242 = vector.shape_cast %241 : vector<1x1x32x32xf32> to vector<32x32xf32>
    %cst_94 = arith.constant dense<0.000000e+00> : vector<64x32xf32>
    %243 = tpu.matmul %233, %242, %cst_94 {dimension_numbers = #tpu.dot_dimension_numbers<[1], [0], [0], [1], [0, 0, 1, 1], [], []>} : vector<64x32xf32>, vector<32x32xf32>, vector<64x32xf32> -> vector<64x32xf32>
    %c1_95 = arith.constant 1 : index
    %c1_96 = arith.constant 1 : index
    %c0_97 = arith.constant 0 : index
    %c0_98 = arith.constant 0 : index
    %244 = vector.load %arg4[%c1_95, %c1_96, %c0_97, %c0_98] : memref<2x3x1x32xf32, #tpu.memory_space<vmem>>, vector<1x1x1x32xf32>
    %245 = vector.shape_cast %244 : vector<1x1x1x32xf32> to vector<1x32xf32>
    %246 = vector.broadcast %245 : vector<1x32xf32> to vector<64x32xf32>
    %247 = arith.addf %243, %246 : vector<64x32xf32>
    %c1_99 = arith.constant 1 : index
    %c2_100 = arith.constant 2 : index
    %c0_101 = arith.constant 0 : index
    %c0_102 = arith.constant 0 : index
    %248 = vector.load %arg2[%c1_99, %c2_100, %c0_101, %c0_102] : memref<2x3x32x32xf32, #tpu.memory_space<vmem>>, vector<1x1x32x32xf32>
    %249 = vector.shape_cast %248 : vector<1x1x32x32xf32> to vector<32x32xf32>
    %cst_103 = arith.constant dense<0.000000e+00> : vector<64x32xf32>
    %250 = tpu.matmul %233, %249, %cst_103 {dimension_numbers = #tpu.dot_dimension_numbers<[1], [0], [0], [1], [0, 0, 1, 1], [], []>} : vector<64x32xf32>, vector<32x32xf32>, vector<64x32xf32> -> vector<64x32xf32>
    %c1_104 = arith.constant 1 : index
    %c2_105 = arith.constant 2 : index
    %c0_106 = arith.constant 0 : index
    %c0_107 = arith.constant 0 : index
    %251 = vector.load %arg4[%c1_104, %c2_105, %c0_106, %c0_107] : memref<2x3x1x32xf32, #tpu.memory_space<vmem>>, vector<1x1x1x32xf32>
    %252 = vector.shape_cast %251 : vector<1x1x1x32xf32> to vector<1x32xf32>
    %253 = vector.broadcast %252 : vector<1x32xf32> to vector<64x32xf32>
    %254 = arith.addf %250, %253 : vector<64x32xf32>
    %c1_108 = arith.constant 1 : index
    %c0_109 = arith.constant 0 : index
    %c0_110 = arith.constant 0 : index
    %c0_111 = arith.constant 0 : index
    %255 = vector.load %arg3[%c1_108, %c0_109, %c0_110, %c0_111] : memref<2x3x32x32xf32, #tpu.memory_space<vmem>>, vector<1x1x32x32xf32>
    %256 = vector.shape_cast %255 : vector<1x1x32x32xf32> to vector<32x32xf32>
    %c1_112 = arith.constant 1 : index
    %c1_113 = arith.constant 1 : index
    %c0_114 = arith.constant 0 : index
    %c0_115 = arith.constant 0 : index
    %257 = vector.load %arg3[%c1_112, %c1_113, %c0_114, %c0_115] : memref<2x3x32x32xf32, #tpu.memory_space<vmem>>, vector<1x1x32x32xf32>
    %258 = vector.shape_cast %257 : vector<1x1x32x32xf32> to vector<32x32xf32>
    %c1_116 = arith.constant 1 : index
    %c2_117 = arith.constant 2 : index
    %c0_118 = arith.constant 0 : index
    %c0_119 = arith.constant 0 : index
    %259 = vector.load %arg3[%c1_116, %c2_117, %c0_118, %c0_119] : memref<2x3x32x32xf32, #tpu.memory_space<vmem>>, vector<1x1x32x32xf32>
    %260 = vector.shape_cast %259 : vector<1x1x32x32xf32> to vector<32x32xf32>
    %c1_120 = arith.constant 1 : index
    %c0_121 = arith.constant 0 : index
    %c0_122 = arith.constant 0 : index
    %261 = vector.load %arg5[%c1_120, %c0_121, %c0_122] : memref<2x1x32xf32, #tpu.memory_space<vmem>>, vector<1x1x32xf32>
    %262 = vector.shape_cast %261 : vector<1x1x32xf32> to vector<1x32xf32>
    %263 = vector.shape_cast %262 : vector<1x32xf32> to vector<1x32xf32>
    %264 = vector.broadcast %263 : vector<1x32xf32> to vector<8x32xf32>
    %cst_123 = arith.constant 0.000000e+00 : f32
    %265 = vector.broadcast %cst_123 : f32 to vector<8x32xf32>
    %cst_124 = arith.constant dense<0.000000e+00> : vector<8x32xf32>
    %266 = tpu.matmul %265, %256, %cst_124 {dimension_numbers = #tpu.dot_dimension_numbers<[1], [0], [0], [1], [0, 0, 1, 1], [], []>} : vector<8x32xf32>, vector<32x32xf32>, vector<8x32xf32> -> vector<8x32xf32>
    %cst_125 = arith.constant dense<0.000000e+00> : vector<8x32xf32>
    %267 = tpu.matmul %265, %258, %cst_125 {dimension_numbers = #tpu.dot_dimension_numbers<[1], [0], [0], [1], [0, 0, 1, 1], [], []>} : vector<8x32xf32>, vector<32x32xf32>, vector<8x32xf32> -> vector<8x32xf32>
    %cst_126 = arith.constant dense<0.000000e+00> : vector<8x32xf32>
    %268 = tpu.matmul %265, %260, %cst_126 {dimension_numbers = #tpu.dot_dimension_numbers<[1], [0], [0], [1], [0, 0, 1, 1], [], []>} : vector<8x32xf32>, vector<32x32xf32>, vector<8x32xf32> -> vector<8x32xf32>
    %269 = arith.addf %268, %264 : vector<8x32xf32>
    %270 = vector.extract_strided_slice %240 {offsets = [0, 0], sizes = [8, 32], strides = [1, 1]} : vector<64x32xf32> to vector<8x32xf32>
    %271 = arith.addf %270, %266 : vector<8x32xf32>
    %272 = arith.negf %271 : vector<8x32xf32>
    %273 = math.exp %272 : vector<8x32xf32>
    %cst_127 = arith.constant 1.000000e+00 : f32
    %274 = vector.broadcast %cst_127 : f32 to vector<8x32xf32>
    %275 = arith.addf %274, %273 : vector<8x32xf32>
    %276 = arith.divf %274, %275 : vector<8x32xf32>
    %277 = vector.extract_strided_slice %247 {offsets = [0, 0], sizes = [8, 32], strides = [1, 1]} : vector<64x32xf32> to vector<8x32xf32>
    %278 = arith.addf %277, %267 : vector<8x32xf32>
    %279 = arith.negf %278 : vector<8x32xf32>
    %280 = math.exp %279 : vector<8x32xf32>
    %cst_128 = arith.constant 1.000000e+00 : f32
    %281 = vector.broadcast %cst_128 : f32 to vector<8x32xf32>
    %282 = arith.addf %281, %280 : vector<8x32xf32>
    %283 = arith.divf %281, %282 : vector<8x32xf32>
    %284 = vector.extract_strided_slice %254 {offsets = [0, 0], sizes = [8, 32], strides = [1, 1]} : vector<64x32xf32> to vector<8x32xf32>
    %285 = arith.mulf %276, %269 : vector<8x32xf32>
    %286 = arith.addf %284, %285 : vector<8x32xf32>
    %287 = math.tanh %286 : vector<8x32xf32>
    %288 = arith.subf %265, %287 : vector<8x32xf32>
    %289 = arith.mulf %283, %288 : vector<8x32xf32>
    %290 = arith.addf %287, %289 : vector<8x32xf32>
    %cst_129 = arith.constant dense<0.000000e+00> : vector<8x32xf32>
    %291 = tpu.matmul %290, %256, %cst_129 {dimension_numbers = #tpu.dot_dimension_numbers<[1], [0], [0], [1], [0, 0, 1, 1], [], []>} : vector<8x32xf32>, vector<32x32xf32>, vector<8x32xf32> -> vector<8x32xf32>
    %cst_130 = arith.constant dense<0.000000e+00> : vector<8x32xf32>
    %292 = tpu.matmul %290, %258, %cst_130 {dimension_numbers = #tpu.dot_dimension_numbers<[1], [0], [0], [1], [0, 0, 1, 1], [], []>} : vector<8x32xf32>, vector<32x32xf32>, vector<8x32xf32> -> vector<8x32xf32>
    %cst_131 = arith.constant dense<0.000000e+00> : vector<8x32xf32>
    %293 = tpu.matmul %290, %260, %cst_131 {dimension_numbers = #tpu.dot_dimension_numbers<[1], [0], [0], [1], [0, 0, 1, 1], [], []>} : vector<8x32xf32>, vector<32x32xf32>, vector<8x32xf32> -> vector<8x32xf32>
    %294 = arith.addf %293, %264 : vector<8x32xf32>
    %295 = vector.extract_strided_slice %240 {offsets = [8, 0], sizes = [8, 32], strides = [1, 1]} : vector<64x32xf32> to vector<8x32xf32>
    %296 = arith.addf %295, %291 : vector<8x32xf32>
    %297 = arith.negf %296 : vector<8x32xf32>
    %298 = math.exp %297 : vector<8x32xf32>
    %cst_132 = arith.constant 1.000000e+00 : f32
    %299 = vector.broadcast %cst_132 : f32 to vector<8x32xf32>
    %300 = arith.addf %299, %298 : vector<8x32xf32>
    %301 = arith.divf %299, %300 : vector<8x32xf32>
    %302 = vector.extract_strided_slice %247 {offsets = [8, 0], sizes = [8, 32], strides = [1, 1]} : vector<64x32xf32> to vector<8x32xf32>
    %303 = arith.addf %302, %292 : vector<8x32xf32>
    %304 = arith.negf %303 : vector<8x32xf32>
    %305 = math.exp %304 : vector<8x32xf32>
    %cst_133 = arith.constant 1.000000e+00 : f32
    %306 = vector.broadcast %cst_133 : f32 to vector<8x32xf32>
    %307 = arith.addf %306, %305 : vector<8x32xf32>
    %308 = arith.divf %306, %307 : vector<8x32xf32>
    %309 = vector.extract_strided_slice %254 {offsets = [8, 0], sizes = [8, 32], strides = [1, 1]} : vector<64x32xf32> to vector<8x32xf32>
    %310 = arith.mulf %301, %294 : vector<8x32xf32>
    %311 = arith.addf %309, %310 : vector<8x32xf32>
    %312 = math.tanh %311 : vector<8x32xf32>
    %313 = arith.subf %290, %312 : vector<8x32xf32>
    %314 = arith.mulf %308, %313 : vector<8x32xf32>
    %315 = arith.addf %312, %314 : vector<8x32xf32>
    %cst_134 = arith.constant dense<0.000000e+00> : vector<8x32xf32>
    %316 = tpu.matmul %315, %256, %cst_134 {dimension_numbers = #tpu.dot_dimension_numbers<[1], [0], [0], [1], [0, 0, 1, 1], [], []>} : vector<8x32xf32>, vector<32x32xf32>, vector<8x32xf32> -> vector<8x32xf32>
    %cst_135 = arith.constant dense<0.000000e+00> : vector<8x32xf32>
    %317 = tpu.matmul %315, %258, %cst_135 {dimension_numbers = #tpu.dot_dimension_numbers<[1], [0], [0], [1], [0, 0, 1, 1], [], []>} : vector<8x32xf32>, vector<32x32xf32>, vector<8x32xf32> -> vector<8x32xf32>
    %cst_136 = arith.constant dense<0.000000e+00> : vector<8x32xf32>
    %318 = tpu.matmul %315, %260, %cst_136 {dimension_numbers = #tpu.dot_dimension_numbers<[1], [0], [0], [1], [0, 0, 1, 1], [], []>} : vector<8x32xf32>, vector<32x32xf32>, vector<8x32xf32> -> vector<8x32xf32>
    %319 = arith.addf %318, %264 : vector<8x32xf32>
    %320 = vector.extract_strided_slice %240 {offsets = [16, 0], sizes = [8, 32], strides = [1, 1]} : vector<64x32xf32> to vector<8x32xf32>
    %321 = arith.addf %320, %316 : vector<8x32xf32>
    %322 = arith.negf %321 : vector<8x32xf32>
    %323 = math.exp %322 : vector<8x32xf32>
    %cst_137 = arith.constant 1.000000e+00 : f32
    %324 = vector.broadcast %cst_137 : f32 to vector<8x32xf32>
    %325 = arith.addf %324, %323 : vector<8x32xf32>
    %326 = arith.divf %324, %325 : vector<8x32xf32>
    %327 = vector.extract_strided_slice %247 {offsets = [16, 0], sizes = [8, 32], strides = [1, 1]} : vector<64x32xf32> to vector<8x32xf32>
    %328 = arith.addf %327, %317 : vector<8x32xf32>
    %329 = arith.negf %328 : vector<8x32xf32>
    %330 = math.exp %329 : vector<8x32xf32>
    %cst_138 = arith.constant 1.000000e+00 : f32
    %331 = vector.broadcast %cst_138 : f32 to vector<8x32xf32>
    %332 = arith.addf %331, %330 : vector<8x32xf32>
    %333 = arith.divf %331, %332 : vector<8x32xf32>
    %334 = vector.extract_strided_slice %254 {offsets = [16, 0], sizes = [8, 32], strides = [1, 1]} : vector<64x32xf32> to vector<8x32xf32>
    %335 = arith.mulf %326, %319 : vector<8x32xf32>
    %336 = arith.addf %334, %335 : vector<8x32xf32>
    %337 = math.tanh %336 : vector<8x32xf32>
    %338 = arith.subf %315, %337 : vector<8x32xf32>
    %339 = arith.mulf %333, %338 : vector<8x32xf32>
    %340 = arith.addf %337, %339 : vector<8x32xf32>
    %cst_139 = arith.constant dense<0.000000e+00> : vector<8x32xf32>
    %341 = tpu.matmul %340, %256, %cst_139 {dimension_numbers = #tpu.dot_dimension_numbers<[1], [0], [0], [1], [0, 0, 1, 1], [], []>} : vector<8x32xf32>, vector<32x32xf32>, vector<8x32xf32> -> vector<8x32xf32>
    %cst_140 = arith.constant dense<0.000000e+00> : vector<8x32xf32>
    %342 = tpu.matmul %340, %258, %cst_140 {dimension_numbers = #tpu.dot_dimension_numbers<[1], [0], [0], [1], [0, 0, 1, 1], [], []>} : vector<8x32xf32>, vector<32x32xf32>, vector<8x32xf32> -> vector<8x32xf32>
    %cst_141 = arith.constant dense<0.000000e+00> : vector<8x32xf32>
    %343 = tpu.matmul %340, %260, %cst_141 {dimension_numbers = #tpu.dot_dimension_numbers<[1], [0], [0], [1], [0, 0, 1, 1], [], []>} : vector<8x32xf32>, vector<32x32xf32>, vector<8x32xf32> -> vector<8x32xf32>
    %344 = arith.addf %343, %264 : vector<8x32xf32>
    %345 = vector.extract_strided_slice %240 {offsets = [24, 0], sizes = [8, 32], strides = [1, 1]} : vector<64x32xf32> to vector<8x32xf32>
    %346 = arith.addf %345, %341 : vector<8x32xf32>
    %347 = arith.negf %346 : vector<8x32xf32>
    %348 = math.exp %347 : vector<8x32xf32>
    %cst_142 = arith.constant 1.000000e+00 : f32
    %349 = vector.broadcast %cst_142 : f32 to vector<8x32xf32>
    %350 = arith.addf %349, %348 : vector<8x32xf32>
    %351 = arith.divf %349, %350 : vector<8x32xf32>
    %352 = vector.extract_strided_slice %247 {offsets = [24, 0], sizes = [8, 32], strides = [1, 1]} : vector<64x32xf32> to vector<8x32xf32>
    %353 = arith.addf %352, %342 : vector<8x32xf32>
    %354 = arith.negf %353 : vector<8x32xf32>
    %355 = math.exp %354 : vector<8x32xf32>
    %cst_143 = arith.constant 1.000000e+00 : f32
    %356 = vector.broadcast %cst_143 : f32 to vector<8x32xf32>
    %357 = arith.addf %356, %355 : vector<8x32xf32>
    %358 = arith.divf %356, %357 : vector<8x32xf32>
    %359 = vector.extract_strided_slice %254 {offsets = [24, 0], sizes = [8, 32], strides = [1, 1]} : vector<64x32xf32> to vector<8x32xf32>
    %360 = arith.mulf %351, %344 : vector<8x32xf32>
    %361 = arith.addf %359, %360 : vector<8x32xf32>
    %362 = math.tanh %361 : vector<8x32xf32>
    %363 = arith.subf %340, %362 : vector<8x32xf32>
    %364 = arith.mulf %358, %363 : vector<8x32xf32>
    %365 = arith.addf %362, %364 : vector<8x32xf32>
    %cst_144 = arith.constant dense<0.000000e+00> : vector<8x32xf32>
    %366 = tpu.matmul %365, %256, %cst_144 {dimension_numbers = #tpu.dot_dimension_numbers<[1], [0], [0], [1], [0, 0, 1, 1], [], []>} : vector<8x32xf32>, vector<32x32xf32>, vector<8x32xf32> -> vector<8x32xf32>
    %cst_145 = arith.constant dense<0.000000e+00> : vector<8x32xf32>
    %367 = tpu.matmul %365, %258, %cst_145 {dimension_numbers = #tpu.dot_dimension_numbers<[1], [0], [0], [1], [0, 0, 1, 1], [], []>} : vector<8x32xf32>, vector<32x32xf32>, vector<8x32xf32> -> vector<8x32xf32>
    %cst_146 = arith.constant dense<0.000000e+00> : vector<8x32xf32>
    %368 = tpu.matmul %365, %260, %cst_146 {dimension_numbers = #tpu.dot_dimension_numbers<[1], [0], [0], [1], [0, 0, 1, 1], [], []>} : vector<8x32xf32>, vector<32x32xf32>, vector<8x32xf32> -> vector<8x32xf32>
    %369 = arith.addf %368, %264 : vector<8x32xf32>
    %370 = vector.extract_strided_slice %240 {offsets = [32, 0], sizes = [8, 32], strides = [1, 1]} : vector<64x32xf32> to vector<8x32xf32>
    %371 = arith.addf %370, %366 : vector<8x32xf32>
    %372 = arith.negf %371 : vector<8x32xf32>
    %373 = math.exp %372 : vector<8x32xf32>
    %cst_147 = arith.constant 1.000000e+00 : f32
    %374 = vector.broadcast %cst_147 : f32 to vector<8x32xf32>
    %375 = arith.addf %374, %373 : vector<8x32xf32>
    %376 = arith.divf %374, %375 : vector<8x32xf32>
    %377 = vector.extract_strided_slice %247 {offsets = [32, 0], sizes = [8, 32], strides = [1, 1]} : vector<64x32xf32> to vector<8x32xf32>
    %378 = arith.addf %377, %367 : vector<8x32xf32>
    %379 = arith.negf %378 : vector<8x32xf32>
    %380 = math.exp %379 : vector<8x32xf32>
    %cst_148 = arith.constant 1.000000e+00 : f32
    %381 = vector.broadcast %cst_148 : f32 to vector<8x32xf32>
    %382 = arith.addf %381, %380 : vector<8x32xf32>
    %383 = arith.divf %381, %382 : vector<8x32xf32>
    %384 = vector.extract_strided_slice %254 {offsets = [32, 0], sizes = [8, 32], strides = [1, 1]} : vector<64x32xf32> to vector<8x32xf32>
    %385 = arith.mulf %376, %369 : vector<8x32xf32>
    %386 = arith.addf %384, %385 : vector<8x32xf32>
    %387 = math.tanh %386 : vector<8x32xf32>
    %388 = arith.subf %365, %387 : vector<8x32xf32>
    %389 = arith.mulf %383, %388 : vector<8x32xf32>
    %390 = arith.addf %387, %389 : vector<8x32xf32>
    %cst_149 = arith.constant dense<0.000000e+00> : vector<8x32xf32>
    %391 = tpu.matmul %390, %256, %cst_149 {dimension_numbers = #tpu.dot_dimension_numbers<[1], [0], [0], [1], [0, 0, 1, 1], [], []>} : vector<8x32xf32>, vector<32x32xf32>, vector<8x32xf32> -> vector<8x32xf32>
    %cst_150 = arith.constant dense<0.000000e+00> : vector<8x32xf32>
    %392 = tpu.matmul %390, %258, %cst_150 {dimension_numbers = #tpu.dot_dimension_numbers<[1], [0], [0], [1], [0, 0, 1, 1], [], []>} : vector<8x32xf32>, vector<32x32xf32>, vector<8x32xf32> -> vector<8x32xf32>
    %cst_151 = arith.constant dense<0.000000e+00> : vector<8x32xf32>
    %393 = tpu.matmul %390, %260, %cst_151 {dimension_numbers = #tpu.dot_dimension_numbers<[1], [0], [0], [1], [0, 0, 1, 1], [], []>} : vector<8x32xf32>, vector<32x32xf32>, vector<8x32xf32> -> vector<8x32xf32>
    %394 = arith.addf %393, %264 : vector<8x32xf32>
    %395 = vector.extract_strided_slice %240 {offsets = [40, 0], sizes = [8, 32], strides = [1, 1]} : vector<64x32xf32> to vector<8x32xf32>
    %396 = arith.addf %395, %391 : vector<8x32xf32>
    %397 = arith.negf %396 : vector<8x32xf32>
    %398 = math.exp %397 : vector<8x32xf32>
    %cst_152 = arith.constant 1.000000e+00 : f32
    %399 = vector.broadcast %cst_152 : f32 to vector<8x32xf32>
    %400 = arith.addf %399, %398 : vector<8x32xf32>
    %401 = arith.divf %399, %400 : vector<8x32xf32>
    %402 = vector.extract_strided_slice %247 {offsets = [40, 0], sizes = [8, 32], strides = [1, 1]} : vector<64x32xf32> to vector<8x32xf32>
    %403 = arith.addf %402, %392 : vector<8x32xf32>
    %404 = arith.negf %403 : vector<8x32xf32>
    %405 = math.exp %404 : vector<8x32xf32>
    %cst_153 = arith.constant 1.000000e+00 : f32
    %406 = vector.broadcast %cst_153 : f32 to vector<8x32xf32>
    %407 = arith.addf %406, %405 : vector<8x32xf32>
    %408 = arith.divf %406, %407 : vector<8x32xf32>
    %409 = vector.extract_strided_slice %254 {offsets = [40, 0], sizes = [8, 32], strides = [1, 1]} : vector<64x32xf32> to vector<8x32xf32>
    %410 = arith.mulf %401, %394 : vector<8x32xf32>
    %411 = arith.addf %409, %410 : vector<8x32xf32>
    %412 = math.tanh %411 : vector<8x32xf32>
    %413 = arith.subf %390, %412 : vector<8x32xf32>
    %414 = arith.mulf %408, %413 : vector<8x32xf32>
    %415 = arith.addf %412, %414 : vector<8x32xf32>
    %cst_154 = arith.constant dense<0.000000e+00> : vector<8x32xf32>
    %416 = tpu.matmul %415, %256, %cst_154 {dimension_numbers = #tpu.dot_dimension_numbers<[1], [0], [0], [1], [0, 0, 1, 1], [], []>} : vector<8x32xf32>, vector<32x32xf32>, vector<8x32xf32> -> vector<8x32xf32>
    %cst_155 = arith.constant dense<0.000000e+00> : vector<8x32xf32>
    %417 = tpu.matmul %415, %258, %cst_155 {dimension_numbers = #tpu.dot_dimension_numbers<[1], [0], [0], [1], [0, 0, 1, 1], [], []>} : vector<8x32xf32>, vector<32x32xf32>, vector<8x32xf32> -> vector<8x32xf32>
    %cst_156 = arith.constant dense<0.000000e+00> : vector<8x32xf32>
    %418 = tpu.matmul %415, %260, %cst_156 {dimension_numbers = #tpu.dot_dimension_numbers<[1], [0], [0], [1], [0, 0, 1, 1], [], []>} : vector<8x32xf32>, vector<32x32xf32>, vector<8x32xf32> -> vector<8x32xf32>
    %419 = arith.addf %418, %264 : vector<8x32xf32>
    %420 = vector.extract_strided_slice %240 {offsets = [48, 0], sizes = [8, 32], strides = [1, 1]} : vector<64x32xf32> to vector<8x32xf32>
    %421 = arith.addf %420, %416 : vector<8x32xf32>
    %422 = arith.negf %421 : vector<8x32xf32>
    %423 = math.exp %422 : vector<8x32xf32>
    %cst_157 = arith.constant 1.000000e+00 : f32
    %424 = vector.broadcast %cst_157 : f32 to vector<8x32xf32>
    %425 = arith.addf %424, %423 : vector<8x32xf32>
    %426 = arith.divf %424, %425 : vector<8x32xf32>
    %427 = vector.extract_strided_slice %247 {offsets = [48, 0], sizes = [8, 32], strides = [1, 1]} : vector<64x32xf32> to vector<8x32xf32>
    %428 = arith.addf %427, %417 : vector<8x32xf32>
    %429 = arith.negf %428 : vector<8x32xf32>
    %430 = math.exp %429 : vector<8x32xf32>
    %cst_158 = arith.constant 1.000000e+00 : f32
    %431 = vector.broadcast %cst_158 : f32 to vector<8x32xf32>
    %432 = arith.addf %431, %430 : vector<8x32xf32>
    %433 = arith.divf %431, %432 : vector<8x32xf32>
    %434 = vector.extract_strided_slice %254 {offsets = [48, 0], sizes = [8, 32], strides = [1, 1]} : vector<64x32xf32> to vector<8x32xf32>
    %435 = arith.mulf %426, %419 : vector<8x32xf32>
    %436 = arith.addf %434, %435 : vector<8x32xf32>
    %437 = math.tanh %436 : vector<8x32xf32>
    %438 = arith.subf %415, %437 : vector<8x32xf32>
    %439 = arith.mulf %433, %438 : vector<8x32xf32>
    %440 = arith.addf %437, %439 : vector<8x32xf32>
    %cst_159 = arith.constant dense<0.000000e+00> : vector<8x32xf32>
    %441 = tpu.matmul %440, %256, %cst_159 {dimension_numbers = #tpu.dot_dimension_numbers<[1], [0], [0], [1], [0, 0, 1, 1], [], []>} : vector<8x32xf32>, vector<32x32xf32>, vector<8x32xf32> -> vector<8x32xf32>
    %cst_160 = arith.constant dense<0.000000e+00> : vector<8x32xf32>
    %442 = tpu.matmul %440, %258, %cst_160 {dimension_numbers = #tpu.dot_dimension_numbers<[1], [0], [0], [1], [0, 0, 1, 1], [], []>} : vector<8x32xf32>, vector<32x32xf32>, vector<8x32xf32> -> vector<8x32xf32>
    %cst_161 = arith.constant dense<0.000000e+00> : vector<8x32xf32>
    %443 = tpu.matmul %440, %260, %cst_161 {dimension_numbers = #tpu.dot_dimension_numbers<[1], [0], [0], [1], [0, 0, 1, 1], [], []>} : vector<8x32xf32>, vector<32x32xf32>, vector<8x32xf32> -> vector<8x32xf32>
    %444 = arith.addf %443, %264 : vector<8x32xf32>
    %445 = vector.extract_strided_slice %240 {offsets = [56, 0], sizes = [8, 32], strides = [1, 1]} : vector<64x32xf32> to vector<8x32xf32>
    %446 = arith.addf %445, %441 : vector<8x32xf32>
    %447 = arith.negf %446 : vector<8x32xf32>
    %448 = math.exp %447 : vector<8x32xf32>
    %cst_162 = arith.constant 1.000000e+00 : f32
    %449 = vector.broadcast %cst_162 : f32 to vector<8x32xf32>
    %450 = arith.addf %449, %448 : vector<8x32xf32>
    %451 = arith.divf %449, %450 : vector<8x32xf32>
    %452 = vector.extract_strided_slice %247 {offsets = [56, 0], sizes = [8, 32], strides = [1, 1]} : vector<64x32xf32> to vector<8x32xf32>
    %453 = arith.addf %452, %442 : vector<8x32xf32>
    %454 = arith.negf %453 : vector<8x32xf32>
    %455 = math.exp %454 : vector<8x32xf32>
    %cst_163 = arith.constant 1.000000e+00 : f32
    %456 = vector.broadcast %cst_163 : f32 to vector<8x32xf32>
    %457 = arith.addf %456, %455 : vector<8x32xf32>
    %458 = arith.divf %456, %457 : vector<8x32xf32>
    %459 = vector.extract_strided_slice %254 {offsets = [56, 0], sizes = [8, 32], strides = [1, 1]} : vector<64x32xf32> to vector<8x32xf32>
    %460 = arith.mulf %451, %444 : vector<8x32xf32>
    %461 = arith.addf %459, %460 : vector<8x32xf32>
    %462 = math.tanh %461 : vector<8x32xf32>
    %463 = arith.subf %440, %462 : vector<8x32xf32>
    %464 = arith.mulf %458, %463 : vector<8x32xf32>
    %465 = arith.addf %462, %464 : vector<8x32xf32>
    %466 = tpu.concatenate %290, %315, %340, %365, %390, %415, %440, %465 in 0 : vector<8x32xf32>, vector<8x32xf32>, vector<8x32xf32>, vector<8x32xf32>, vector<8x32xf32>, vector<8x32xf32>, vector<8x32xf32>, vector<8x32xf32> -> vector<64x32xf32>
    %c0_164 = arith.constant 0 : index
    %c0_165 = arith.constant 0 : index
    %467 = vector.load %arg6[%c0_164, %c0_165] : memref<1x32xf32, #tpu.memory_space<vmem>>, vector<1x32xf32>
    %468 = vector.broadcast %467 : vector<1x32xf32> to vector<64x32xf32>
    %469 = arith.mulf %466, %468 : vector<64x32xf32>
    %cst_166 = arith.constant dense<0.000000e+00> : vector<64xf32>
    %470 = vector.multi_reduction <add>, %469, %cst_166 [1] : vector<64x32xf32> to vector<64xf32>
    %471 = vector.shape_cast %470 : vector<64xf32> to vector<64x1xf32>
    %472 = tpu.iota {dimensions = array<i32: 1>} : vector<8x8xi32>
    %cst_167 = arith.constant 0.000000e+00 : f32
    %473 = vector.broadcast %cst_167 : f32 to vector<8x8xf32>
    %474 = vector.extract_strided_slice %471 {offsets = [0, 0], sizes = [8, 1], strides = [1, 1]} : vector<64x1xf32> to vector<8x1xf32>
    %c0_i32 = arith.constant 0 : i32
    %475 = vector.broadcast %c0_i32 : i32 to vector<8x8xi32>
    %476 = arith.cmpi eq, %472, %475 : vector<8x8xi32>
    %477 = vector.shape_cast %474 : vector<8x1xf32> to vector<8x1xf32>
    %478 = vector.broadcast %477 : vector<8x1xf32> to vector<8x8xf32>
    %479 = arith.select %476, %478, %473 : vector<8x8xi1>, vector<8x8xf32>
    %480 = vector.extract_strided_slice %471 {offsets = [8, 0], sizes = [8, 1], strides = [1, 1]} : vector<64x1xf32> to vector<8x1xf32>
    %c1_i32 = arith.constant 1 : i32
    %481 = vector.broadcast %c1_i32 : i32 to vector<8x8xi32>
    %482 = arith.cmpi eq, %472, %481 : vector<8x8xi32>
    %483 = vector.shape_cast %480 : vector<8x1xf32> to vector<8x1xf32>
    %484 = vector.broadcast %483 : vector<8x1xf32> to vector<8x8xf32>
    %485 = arith.select %482, %484, %479 : vector<8x8xi1>, vector<8x8xf32>
    %486 = vector.extract_strided_slice %471 {offsets = [16, 0], sizes = [8, 1], strides = [1, 1]} : vector<64x1xf32> to vector<8x1xf32>
    %c2_i32 = arith.constant 2 : i32
    %487 = vector.broadcast %c2_i32 : i32 to vector<8x8xi32>
    %488 = arith.cmpi eq, %472, %487 : vector<8x8xi32>
    %489 = vector.shape_cast %486 : vector<8x1xf32> to vector<8x1xf32>
    %490 = vector.broadcast %489 : vector<8x1xf32> to vector<8x8xf32>
    %491 = arith.select %488, %490, %485 : vector<8x8xi1>, vector<8x8xf32>
    %492 = vector.extract_strided_slice %471 {offsets = [24, 0], sizes = [8, 1], strides = [1, 1]} : vector<64x1xf32> to vector<8x1xf32>
    %c3_i32 = arith.constant 3 : i32
    %493 = vector.broadcast %c3_i32 : i32 to vector<8x8xi32>
    %494 = arith.cmpi eq, %472, %493 : vector<8x8xi32>
    %495 = vector.shape_cast %492 : vector<8x1xf32> to vector<8x1xf32>
    %496 = vector.broadcast %495 : vector<8x1xf32> to vector<8x8xf32>
    %497 = arith.select %494, %496, %491 : vector<8x8xi1>, vector<8x8xf32>
    %498 = vector.extract_strided_slice %471 {offsets = [32, 0], sizes = [8, 1], strides = [1, 1]} : vector<64x1xf32> to vector<8x1xf32>
    %c4_i32 = arith.constant 4 : i32
    %499 = vector.broadcast %c4_i32 : i32 to vector<8x8xi32>
    %500 = arith.cmpi eq, %472, %499 : vector<8x8xi32>
    %501 = vector.shape_cast %498 : vector<8x1xf32> to vector<8x1xf32>
    %502 = vector.broadcast %501 : vector<8x1xf32> to vector<8x8xf32>
    %503 = arith.select %500, %502, %497 : vector<8x8xi1>, vector<8x8xf32>
    %504 = vector.extract_strided_slice %471 {offsets = [40, 0], sizes = [8, 1], strides = [1, 1]} : vector<64x1xf32> to vector<8x1xf32>
    %c5_i32 = arith.constant 5 : i32
    %505 = vector.broadcast %c5_i32 : i32 to vector<8x8xi32>
    %506 = arith.cmpi eq, %472, %505 : vector<8x8xi32>
    %507 = vector.shape_cast %504 : vector<8x1xf32> to vector<8x1xf32>
    %508 = vector.broadcast %507 : vector<8x1xf32> to vector<8x8xf32>
    %509 = arith.select %506, %508, %503 : vector<8x8xi1>, vector<8x8xf32>
    %510 = vector.extract_strided_slice %471 {offsets = [48, 0], sizes = [8, 1], strides = [1, 1]} : vector<64x1xf32> to vector<8x1xf32>
    %c6_i32 = arith.constant 6 : i32
    %511 = vector.broadcast %c6_i32 : i32 to vector<8x8xi32>
    %512 = arith.cmpi eq, %472, %511 : vector<8x8xi32>
    %513 = vector.shape_cast %510 : vector<8x1xf32> to vector<8x1xf32>
    %514 = vector.broadcast %513 : vector<8x1xf32> to vector<8x8xf32>
    %515 = arith.select %512, %514, %509 : vector<8x8xi1>, vector<8x8xf32>
    %516 = vector.extract_strided_slice %471 {offsets = [56, 0], sizes = [8, 1], strides = [1, 1]} : vector<64x1xf32> to vector<8x1xf32>
    %c7_i32 = arith.constant 7 : i32
    %517 = vector.broadcast %c7_i32 : i32 to vector<8x8xi32>
    %518 = arith.cmpi eq, %472, %517 : vector<8x8xi32>
    %519 = vector.shape_cast %516 : vector<8x1xf32> to vector<8x1xf32>
    %520 = vector.broadcast %519 : vector<8x1xf32> to vector<8x8xf32>
    %521 = arith.select %518, %520, %515 : vector<8x8xi1>, vector<8x8xf32>
    %c0_168 = arith.constant 0 : index
    %c0_169 = arith.constant 0 : index
    %522 = vector.load %arg7[%c0_168, %c0_169] : memref<1x1xf32, #tpu.memory_space<vmem>>, vector<1x1xf32>
    %523 = vector.broadcast %522 : vector<1x1xf32> to vector<8x8xf32>
    %524 = arith.addf %521, %523 : vector<8x8xf32>
    %c0_170 = arith.constant 0 : index
    %c0_171 = arith.constant 0 : index
    %525 = vector.load %arg8[%c0_170, %c0_171] : memref<8x8xf32, #tpu.memory_space<vmem>>, vector<8x8xf32>
    tpu.vector_store %arg8[%c0_170, %c0_171], %524 {strides = array<i32>} : memref<8x8xf32, #tpu.memory_space<vmem>>, vector<8x8xf32>,
    return
  }
  func.func @transform_0(%arg0: i32) -> (i32, i32) {
    %c0_i32 = arith.constant 0 : i32
    %c0_i32_0 = arith.constant 0 : i32
    %c0_i32_1 = arith.constant 0 : i32
    return %c0_i32, %c0_i32_0 : i32, i32
  }
  func.func @transform_1(%arg0: i32) -> (i32, i32, i32, i32) {
    %c0_i32 = arith.constant 0 : i32
    %c0_i32_0 = arith.constant 0 : i32
    %c0_i32_1 = arith.constant 0 : i32
    %c0_i32_2 = arith.constant 0 : i32
    %c0_i32_3 = arith.constant 0 : i32
    return %c0_i32, %c0_i32_0, %c0_i32_1, %c0_i32_2 : i32, i32, i32, i32
  }
  func.func @transform_2(%arg0: i32) -> (i32, i32, i32, i32) {
    %c0_i32 = arith.constant 0 : i32
    %c0_i32_0 = arith.constant 0 : i32
    %c0_i32_1 = arith.constant 0 : i32
    %c0_i32_2 = arith.constant 0 : i32
    %c0_i32_3 = arith.constant 0 : i32
    return %c0_i32, %c0_i32_0, %c0_i32_1, %c0_i32_2 : i32, i32, i32, i32
  }
  func.func @transform_3(%arg0: i32) -> (i32, i32, i32, i32) {
    %c0_i32 = arith.constant 0 : i32
    %c0_i32_0 = arith.constant 0 : i32
    %c0_i32_1 = arith.constant 0 : i32
    %c0_i32_2 = arith.constant 0 : i32
    %c0_i32_3 = arith.constant 0 : i32
    return %c0_i32, %c0_i32_0, %c0_i32_1, %c0_i32_2 : i32, i32, i32, i32
  }
  func.func @transform_4(%arg0: i32) -> (i32, i32, i32) {
    %c0_i32 = arith.constant 0 : i32
    %c0_i32_0 = arith.constant 0 : i32
    %c0_i32_1 = arith.constant 0 : i32
    %c0_i32_2 = arith.constant 0 : i32
    return %c0_i32, %c0_i32_0, %c0_i32_1 : i32, i32, i32
  }
  func.func @transform_5(%arg0: i32) -> (i32, i32) {
    %c0_i32 = arith.constant 0 : i32
    %c0_i32_0 = arith.constant 0 : i32
    %c0_i32_1 = arith.constant 0 : i32
    return %c0_i32, %c0_i32_0 : i32, i32
  }
  func.func @transform_6(%arg0: i32) -> (i32, i32) {
    %c0_i32 = arith.constant 0 : i32
    %c0_i32_0 = arith.constant 0 : i32
    %c0_i32_1 = arith.constant 0 : i32
    return %c0_i32, %c0_i32_0 : i32, i32
  }
  func.func @transform_7(%arg0: i32) -> (i32, i32) {
    %c0_i32 = arith.constant 0 : i32
    %c0_i32_0 = arith.constant 0 : i32
    %c0_i32_1 = arith.constant 0 : i32
    return %c0_i32, %c0_i32_0 : i32, i32
  }
}

</mosaic_0001>

<llo_original>
// kernel: discriminator_forward.1
$region0: #{discriminator_forward.1}
  #allocation0 [shape = 'u32[]', space=smem, size = 0x4, offset = 0x4, fixed_abs, tag = 'smem constant byte address 0x4 - core index']
  #allocation1 [shape = 'u32[144,128]{1,0:T(1,128)}', space=vmem, size = 0x12000, scoped, tag = 'internal scratch']
  #allocation2 [shape = 'f32[1,1]{1,0:T(1,128)S(1)}', space=vmem, size = 0x200, scoped, tag = 'scoped memory for discriminator_forward.1']
  %s0 = inlined_call_operand.vmem [shape: f32[64,32], index: 0, kind: input, shape index: {}]
  %s1 = inlined_call_operand.vmem [shape: f32[2,3,32,32], index: 1, kind: input, shape index: {}]
  %s2 = inlined_call_operand.hbm [shape: f32[2,3,32,32], index: 2, kind: input, shape index: {}]
  %s3 = inlined_call_operand.vmem [shape: f32[2,3,1,32], index: 3, kind: input, shape index: {}]
  %s4 = inlined_call_operand.vmem [shape: f32[2,1,32], index: 4, kind: input, shape index: {}]
  %s5 = inlined_call_operand.vmem [shape: f32[1,32], index: 5, kind: input, shape index: {}]
  %s6 = inlined_call_operand.<no memory space> [shape: f32[1,1], index: 6, kind: input, shape index: {}]
  %s7 = inlined_call_operand.vmem [shape: f32[8,8], index: 7, kind: output, shape index: {}]
  %s8 = sld [smem:[#allocation0]]
  $region42: #{discriminator_forward.1} parent=0
    _
  %s10 = ssub.s32 1, %s8
  %s11 = scalar_select 0, %s10, %s8
  %v12 = vstv %s6
  %13 = vst [vmem:[#allocation2] sm:$0x1] %v12
  $region1: #{discriminator_forward.1} parent=0
    #allocation3 [shape = 'u8[98304]{0}', space=vmem, size = 0x18000, scoped, tag = 'input window, operand 2, single buffered']
    #allocation4 [shape = 's32[1]{0}', space=sflag, size = 0x4, scoped, tag = 'scoped memory for discriminator_forward.1']
    %14 = vsyncpa [#allocation4], 0
    // Predicated region
    $region2: #{discriminator_forward.1} parent=1 // pred_check
      _
    $region3: #{discriminator_forward.1} parent=1 // pred_check_branch
      %16 = sbr.rel (0) target = $region5
    $region4: #{discriminator_forward.1} parent=1 // pred_region
      _
    $region5: #{discriminator_forward.1} parent=1 // pred_fallthru
      _
    // Predicated region
    $region6: #{discriminator_forward.1} parent=1 // pred_check
      _
    $region7: #{discriminator_forward.1} parent=1 // pred_check_branch
      %18 = sbr.rel (0) target = $region9
    $region8: #{discriminator_forward.1} parent=1 // pred_region
      _
    $region9: #{discriminator_forward.1} parent=1 // pred_fallthru
      _
    // Predicated region
    $region10: #{discriminator_forward.1} parent=1 // pred_check
      _
    $region11: #{discriminator_forward.1} parent=1 // pred_check_branch
      %20 = sbr.rel (0) target = $region13
    $region12: #{discriminator_forward.1} parent=1 // pred_region
      %s22 = ssub.s32 3072, 3072
      %23 = vsyncadd [#allocation4], %s22
      %s24 = sshll.u32 [#allocation3], 4
      %s25 = int_to_ptr.vmem [resolvable:$true] %s24
      %30 = dma.hbm_to_vmem [thread:$0]  %s2, 3072, %s25, [#allocation4], 128, 128, 8
    $region13: #{discriminator_forward.1} parent=1 // pred_fallthru
      _
    // Predicated region
    $region14: #{discriminator_forward.1} parent=1 // pred_check
      _
    $region15: #{discriminator_forward.1} parent=1 // pred_check_branch
      %32 = sbr.rel (0) target = $region17
    $region16: #{discriminator_forward.1} parent=1 // pred_region
      _
    $region17: #{discriminator_forward.1} parent=1 // pred_fallthru
      _
    // Predicated region
    $region18: #{discriminator_forward.1} parent=1 // pred_check
      _
    $region19: #{discriminator_forward.1} parent=1 // pred_check_branch
      %34 = sbr.rel (0) target = $region21
    $region20: #{discriminator_forward.1} parent=1 // pred_region
      _
    $region21: #{discriminator_forward.1} parent=1 // pred_fallthru
      _
    // Predicated region
    $region22: #{discriminator_forward.1} parent=1 // pred_check
      _
    $region23: #{discriminator_forward.1} parent=1 // pred_check_branch
      %36 = sbr.rel (0) target = $region25
    $region24: #{discriminator_forward.1} parent=1 // pred_region
      _
    $region25: #{discriminator_forward.1} parent=1 // pred_fallthru
      _
    // Predicated region
    $region26: #{discriminator_forward.1} parent=1 // pred_check
      _
    $region27: #{discriminator_forward.1} parent=1 // pred_check_branch
      %38 = sbr.rel (0) target = $region29
    $region28: #{discriminator_forward.1} parent=1 // pred_region
      _
    $region29: #{discriminator_forward.1} parent=1 // pred_fallthru
      _
    // Predicated region
    $region30: #{discriminator_forward.1} parent=1 // pred_check
      _
    $region31: #{discriminator_forward.1} parent=1 // pred_check_branch
      %40 = sbr.rel (0) target = $region33
    $region32: #{discriminator_forward.1} parent=1 // pred_region
      %41 = dma.done [#allocation4], 3072
    $region33: #{discriminator_forward.1} parent=1 // pred_fallthru
      _
    %v42 = vld [vmem:[%s0] sm:$0xff]
    %v43 = vld [vmem:[%s0 + $0x8] sm:$0xff]
    %v44 = vld [vmem:[%s0 + $0x10] sm:$0xff]
    %v45 = vld [vmem:[%s0 + $0x18] sm:$0xff]
    %v46 = vld [vmem:[%s0 + $0x20] sm:$0xff]
    %v47 = vld [vmem:[%s0 + $0x28] sm:$0xff]
    %v48 = vld [vmem:[%s0 + $0x30] sm:$0xff]
    %v49 = vld [vmem:[%s0 + $0x38] sm:$0xff]
    %v50 = vld [vmem:[%s1] sm:$0xff]
    %v51 = vld [vmem:[%s1 + $0x8] sm:$0xff]
    %v52 = vld [vmem:[%s1 + $0x10] sm:$0xff]
    %v53 = vld [vmem:[%s1 + $0x18] sm:$0xff]
    %v54 = vld [vmem:[%s3] sm:$0x1]
    %v56 = vlaneseq
    %v57 = vshrl.u32 %v56, 7
    %v58 = vsub.s32 0, %v57
    %v59 = vrot.slane %v54, %v58
    %vm61 = vcmask 261120
    %v63 = vsel %vm61, %v42, 0
    %v66 = vsel %vm61, %v43, 0
    %v69 = vsel %vm61, %v44, 0
    %v72 = vsel %vm61, %v45, 0
    %v75 = vsel %vm61, %v46, 0
    %v78 = vsel %vm61, %v47, 0
    %v81 = vsel %vm61, %v48, 0
    %v84 = vsel %vm61, %v49, 0
    %86 = vmatprep.subr.mxu0 0.0
    %87 = vmatpush1.msra.mxu0 0.0
    %88 = vmatprep.subr.mxu0 0.0
    %89 = vmatpush1.msra.mxu0 0.0
    %90 = vmatprep.subr.mxu0 0.0
    %91 = vmatpush1.msra.mxu0 0.0
    %92 = vmatprep.subr.mxu0 0.0
    %93 = vmatpush1.msra.mxu0 0.0
    %94 = vmatprep.subr.mxu0 0.0
    %95 = vmatpush1.msra.mxu0 0.0
    %96 = vmatprep.subr.mxu0 0.0
    %97 = vmatpush1.msra.mxu0 0.0
    %98 = vmatprep.subr.mxu0 0.0
    %99 = vmatpush1.msra.mxu0 0.0
    %100 = vmatprep.subr.mxu0 0.0
    %101 = vmatpush1.msra.mxu0 0.0
    %102 = vmatprep.subr.mxu0 0.0
    %103 = vmatpush1.msra.mxu0 0.0
    %104 = vmatprep.subr.mxu0 0.0
    %105 = vmatpush1.msra.mxu0 0.0
    %106 = vmatprep.subr.mxu0 0.0
    %107 = vmatpush1.msra.mxu0 0.0
    %108 = vmatprep.subr.mxu0 0.0
    %109 = vmatpush1.msra.mxu0 0.0
    %110 = vmatprep.subr.mxu0 0.0
    %111 = vmatpush1.msra.mxu0 %v53
    %112 = vmatprep.subr.mxu0 0.0
    %113 = vmatpush1.msra.mxu0 %v52
    %114 = vmatprep.subr.mxu0 0.0
    %115 = vmatpush1.msra.mxu0 %v51
    %116 = vmatprep.subr.mxu0 0.0
    %117 = vmatpush1.msra.mxu0 %v50
    %118 = vmatprep.subr.mxu0 0.0
    %119 = vmatpush2.msra.mxu0 0.0
    %120 = vmatprep.subr.mxu0 0.0
    %121 = vmatpush2.msra.mxu0 0.0
    %122 = vmatprep.subr.mxu0 0.0
    %123 = vmatpush2.msra.mxu0 0.0
    %124 = vmatprep.subr.mxu0 0.0
    %125 = vmatpush2.msra.mxu0 0.0
    %126 = vmatprep.subr.mxu0 0.0
    %127 = vmatpush2.msra.mxu0 0.0
    %128 = vmatprep.subr.mxu0 0.0
    %129 = vmatpush2.msra.mxu0 0.0
    %130 = vmatprep.subr.mxu0 0.0
    %131 = vmatpush2.msra.mxu0 0.0
    %132 = vmatprep.subr.mxu0 0.0
    %133 = vmatpush2.msra.mxu0 0.0
    %134 = vmatprep.subr.mxu0 0.0
    %135 = vmatpush2.msra.mxu0 0.0
    %136 = vmatprep.subr.mxu0 0.0
    %137 = vmatpush2.msra.mxu0 0.0
    %138 = vmatprep.subr.mxu0 0.0
    %139 = vmatpush2.msra.mxu0 0.0
    %140 = vmatprep.subr.mxu0 0.0
    %141 = vmatpush2.msra.mxu0 0.0
    %142 = vmatprep.subr.mxu0 0.0
    %143 = vmatpush2.msra.mxu0 0.0
    %144 = vmatprep.subr.mxu0 0.0
    %145 = vmatpush2.msra.mxu0 0.0
    %146 = vmatprep.subr.mxu0 0.0
    %147 = vmatpush2.msra.mxu0 0.0
    %148 = vmatprep.subr.mxu0 0.0
    %149 = vmatpush2.msra.mxu0 0.0
    %150 = vmatprep.mubr.f32.mxu0 0.0
    %151 = vmatmul.mubr.f32.gmra.mxu0 %v63
    %v152 = vpop.f32.mrf.mxu0
    %v153 = vadd.f32 %v59, %v152
    %v154 = vpop.f32.mrf.mxu0
    %155 = vmatprep.mubr.f32.mxu0 0.0
    %156 = vmatmul.mubr.f32.gmra.mxu0 %v66
    %v157 = vpop.f32.mrf.mxu0
    %v158 = vadd.f32 %v59, %v157
    %v159 = vpop.f32.mrf.mxu0
    %160 = vmatprep.mubr.f32.mxu0 0.0
    %161 = vmatmul.mubr.f32.gmra.mxu0 %v69
    %v162 = vpop.f32.mrf.mxu0
    %v163 = vadd.f32 %v59, %v162
    %v164 = vpop.f32.mrf.mxu0
    %165 = vmatprep.mubr.f32.mxu0 0.0
    %166 = vmatmul.mubr.f32.gmra.mxu0 %v72
    %v167 = vpop.f32.mrf.mxu0
    %v168 = vadd.f32 %v59, %v167
    %v169 = vpop.f32.mrf.mxu0
    %170 = vmatprep.mubr.f32.mxu0 0.0
    %171 = vmatmul.mubr.f32.gmra.mxu0 %v75
    %v172 = vpop.f32.mrf.mxu0
    %v173 = vadd.f32 %v59, %v172
    %v174 = vpop.f32.mrf.mxu0
    %175 = vmatprep.mubr.f32.mxu0 0.0
    %176 = vmatmul.mubr.f32.gmra.mxu0 %v78
    %v177 = vpop.f32.mrf.mxu0
    %v178 = vadd.f32 %v59, %v177
    %v179 = vpop.f32.mrf.mxu0
    %180 = vmatprep.mubr.f32.mxu0 0.0
    %181 = vmatmul.mubr.f32.gmra.mxu0 %v81
    %v182 = vpop.f32.mrf.mxu0
    %v183 = vadd.f32 %v59, %v182
    %v184 = vpop.f32.mrf.mxu0
    %185 = vmatprep.mubr.f32.mxu0 0.0
    %186 = vmatmul.mubr.f32.gmra.mxu0 %v84
    %v187 = vpop.f32.mrf.mxu0
    %v188 = vadd.f32 %v59, %v187
    %v189 = vpop.f32.mrf.mxu0
    %190 = vdwg.mxu0
    %s191 = scalar_lea.vmem %s1, 32
    %v192 = vld [vmem:[%s191] sm:$0xff]
    %v193 = vld [vmem:[%s191 + $0x8] sm:$0xff]
    %v194 = vld [vmem:[%s191 + $0x10] sm:$0xff]
    %v195 = vld [vmem:[%s191 + $0x18] sm:$0xff]
    %s196 = scalar_lea.vmem %s3, 1
    %v197 = vld [vmem:[%s196] sm:$0x1]
    %v199 = vlaneseq
    %v200 = vshrl.u32 %v199, 7
    %v201 = vsub.s32 0, %v200
    %v202 = vrot.slane %v197, %v201
    %204 = vmatprep.subr.mxu0 0.0
    %205 = vmatpush1.msra.mxu0 0.0
    %206 = vmatprep.subr.mxu0 0.0
    %207 = vmatpush1.msra.mxu0 0.0
    %208 = vmatprep.subr.mxu0 0.0
    %209 = vmatpush1.msra.mxu0 0.0
    %210 = vmatprep.subr.mxu0 0.0
    %211 = vmatpush1.msra.mxu0 0.0
    %212 = vmatprep.subr.mxu0 0.0
    %213 = vmatpush1.msra.mxu0 0.0
    %214 = vmatprep.subr.mxu0 0.0
    %215 = vmatpush1.msra.mxu0 0.0
    %216 = vmatprep.subr.mxu0 0.0
    %217 = vmatpush1.msra.mxu0 0.0
    %218 = vmatprep.subr.mxu0 0.0
    %219 = vmatpush1.msra.mxu0 0.0
    %220 = vmatprep.subr.mxu0 0.0
    %221 = vmatpush1.msra.mxu0 0.0
    %222 = vmatprep.subr.mxu0 0.0
    %223 = vmatpush1.msra.mxu0 0.0
    %224 = vmatprep.subr.mxu0 0.0
    %225 = vmatpush1.msra.mxu0 0.0
    %226 = vmatprep.subr.mxu0 0.0
    %227 = vmatpush1.msra.mxu0 0.0
    %228 = vmatprep.subr.mxu0 0.0
    %229 = vmatpush1.msra.mxu0 %v195
    %230 = vmatprep.subr.mxu0 0.0
    %231 = vmatpush1.msra.mxu0 %v194
    %232 = vmatprep.subr.mxu0 0.0
    %233 = vmatpush1.msra.mxu0 %v193
    %234 = vmatprep.subr.mxu0 0.0
    %235 = vmatpush1.msra.mxu0 %v192
    %236 = vmatprep.subr.mxu0 0.0
    %237 = vmatpush2.msra.mxu0 0.0
    %238 = vmatprep.subr.mxu0 0.0
    %239 = vmatpush2.msra.mxu0 0.0
    %240 = vmatprep.subr.mxu0 0.0
    %241 = vmatpush2.msra.mxu0 0.0
    %242 = vmatprep.subr.mxu0 0.0
    %243 = vmatpush2.msra.mxu0 0.0
    %244 = vmatprep.subr.mxu0 0.0
    %245 = vmatpush2.msra.mxu0 0.0
    %246 = vmatprep.subr.mxu0 0.0
    %247 = vmatpush2.msra.mxu0 0.0
    %248 = vmatprep.subr.mxu0 0.0
    %249 = vmatpush2.msra.mxu0 0.0
    %250 = vmatprep.subr.mxu0 0.0
    %251 = vmatpush2.msra.mxu0 0.0
    %252 = vmatprep.subr.mxu0 0.0
    %253 = vmatpush2.msra.mxu0 0.0
    %254 = vmatprep.subr.mxu0 0.0
    %255 = vmatpush2.msra.mxu0 0.0
    %256 = vmatprep.subr.mxu0 0.0
    %257 = vmatpush2.msra.mxu0 0.0
    %258 = vmatprep.subr.mxu0 0.0
    %259 = vmatpush2.msra.mxu0 0.0
    %260 = vmatprep.subr.mxu0 0.0
    %261 = vmatpush2.msra.mxu0 0.0
    %262 = vmatprep.subr.mxu0 0.0
    %263 = vmatpush2.msra.mxu0 0.0
    %264 = vmatprep.subr.mxu0 0.0
    %265 = vmatpush2.msra.mxu0 0.0
    %266 = vmatprep.subr.mxu0 0.0
    %267 = vmatpush2.msra.mxu0 0.0
    %268 = vmatprep.mubr.f32.mxu0 0.0
    %269 = vmatmul.mubr.f32.gmra.mxu0 %v63
    %v270 = vpop.f32.mrf.mxu0
    %v271 = vadd.f32 %v202, %v270
    %v272 = vpop.f32.mrf.mxu0
    %273 = vmatprep.mubr.f32.mxu0 0.0
    %274 = vmatmul.mubr.f32.gmra.mxu0 %v66
    %v275 = vpop.f32.mrf.mxu0
    %v276 = vadd.f32 %v202, %v275
    %v277 = vpop.f32.mrf.mxu0
    %278 = vmatprep.mubr.f32.mxu0 0.0
    %279 = vmatmul.mubr.f32.gmra.mxu0 %v69
    %v280 = vpop.f32.mrf.mxu0
    %v281 = vadd.f32 %v202, %v280
    %v282 = vpop.f32.mrf.mxu0
    %283 = vmatprep.mubr.f32.mxu0 0.0
    %284 = vmatmul.mubr.f32.gmra.mxu0 %v72
    %v285 = vpop.f32.mrf.mxu0
    %v286 = vadd.f32 %v202, %v285
    %v287 = vpop.f32.mrf.mxu0
    %288 = vmatprep.mubr.f32.mxu0 0.0
    %289 = vmatmul.mubr.f32.gmra.mxu0 %v75
    %v290 = vpop.f32.mrf.mxu0
    %v291 = vadd.f32 %v202, %v290
    %v292 = vpop.f32.mrf.mxu0
    %293 = vmatprep.mubr.f32.mxu0 0.0
    %294 = vmatmul.mubr.f32.gmra.mxu0 %v78
    %v295 = vpop.f32.mrf.mxu0
    %v296 = vadd.f32 %v202, %v295
    %v297 = vpop.f32.mrf.mxu0
    %298 = vmatprep.mubr.f32.mxu0 0.0
    %299 = vmatmul.mubr.f32.gmra.mxu0 %v81
    %v300 = vpop.f32.mrf.mxu0
    %v301 = vadd.f32 %v202, %v300
    %v302 = vpop.f32.mrf.mxu0
    %303 = vmatprep.mubr.f32.mxu0 0.0
    %304 = vmatmul.mubr.f32.gmra.mxu0 %v84
    %v305 = vpop.f32.mrf.mxu0
    %v306 = vadd.f32 %v202, %v305
    %v307 = vpop.f32.mrf.mxu0
    %308 = vdwg.mxu0
    %s309 = scalar_lea.vmem %s1, 64
    %v310 = vld [vmem:[%s309] sm:$0xff]
    %v311 = vld [vmem:[%s309 + $0x8] sm:$0xff]
    %v312 = vld [vmem:[%s309 + $0x10] sm:$0xff]
    %v313 = vld [vmem:[%s309 + $0x18] sm:$0xff]
    %s314 = scalar_lea.vmem %s3, 2
    %v315 = vld [vmem:[%s314] sm:$0x1]
    %v317 = vlaneseq
    %v318 = vshrl.u32 %v317, 7
    %v319 = vsub.s32 0, %v318
    %v320 = vrot.slane %v315, %v319
    %322 = vmatprep.subr.mxu0 0.0
    %323 = vmatpush1.msra.mxu0 0.0
    %324 = vmatprep.subr.mxu0 0.0
    %325 = vmatpush1.msra.mxu0 0.0
    %326 = vmatprep.subr.mxu0 0.0
    %327 = vmatpush1.msra.mxu0 0.0
    %328 = vmatprep.subr.mxu0 0.0
    %329 = vmatpush1.msra.mxu0 0.0
    %330 = vmatprep.subr.mxu0 0.0
    %331 = vmatpush1.msra.mxu0 0.0
    %332 = vmatprep.subr.mxu0 0.0
    %333 = vmatpush1.msra.mxu0 0.0
    %334 = vmatprep.subr.mxu0 0.0
    %335 = vmatpush1.msra.mxu0 0.0
    %336 = vmatprep.subr.mxu0 0.0
    %337 = vmatpush1.msra.mxu0 0.0
    %338 = vmatprep.subr.mxu0 0.0
    %339 = vmatpush1.msra.mxu0 0.0
    %340 = vmatprep.subr.mxu0 0.0
    %341 = vmatpush1.msra.mxu0 0.0
    %342 = vmatprep.subr.mxu0 0.0
    %343 = vmatpush1.msra.mxu0 0.0
    %344 = vmatprep.subr.mxu0 0.0
    %345 = vmatpush1.msra.mxu0 0.0
    %346 = vmatprep.subr.mxu0 0.0
    %347 = vmatpush1.msra.mxu0 %v313
    %348 = vmatprep.subr.mxu0 0.0
    %349 = vmatpush1.msra.mxu0 %v312
    %350 = vmatprep.subr.mxu0 0.0
    %351 = vmatpush1.msra.mxu0 %v311
    %352 = vmatprep.subr.mxu0 0.0
    %353 = vmatpush1.msra.mxu0 %v310
    %354 = vmatprep.subr.mxu0 0.0
    %355 = vmatpush2.msra.mxu0 0.0
    %356 = vmatprep.subr.mxu0 0.0
    %357 = vmatpush2.msra.mxu0 0.0
    %358 = vmatprep.subr.mxu0 0.0
    %359 = vmatpush2.msra.mxu0 0.0
    %360 = vmatprep.subr.mxu0 0.0
    %361 = vmatpush2.msra.mxu0 0.0
    %362 = vmatprep.subr.mxu0 0.0
    %363 = vmatpush2.msra.mxu0 0.0
    %364 = vmatprep.subr.mxu0 0.0
    %365 = vmatpush2.msra.mxu0 0.0
    %366 = vmatprep.subr.mxu0 0.0
    %367 = vmatpush2.msra.mxu0 0.0
    %368 = vmatprep.subr.mxu0 0.0
    %369 = vmatpush2.msra.mxu0 0.0
    %370 = vmatprep.subr.mxu0 0.0
    %371 = vmatpush2.msra.mxu0 0.0
    %372 = vmatprep.subr.mxu0 0.0
    %373 = vmatpush2.msra.mxu0 0.0
    %374 = vmatprep.subr.mxu0 0.0
    %375 = vmatpush2.msra.mxu0 0.0
    %376 = vmatprep.subr.mxu0 0.0
    %377 = vmatpush2.msra.mxu0 0.0
    %378 = vmatprep.subr.mxu0 0.0
    %379 = vmatpush2.msra.mxu0 0.0
    %380 = vmatprep.subr.mxu0 0.0
    %381 = vmatpush2.msra.mxu0 0.0
    %382 = vmatprep.subr.mxu0 0.0
    %383 = vmatpush2.msra.mxu0 0.0
    %384 = vmatprep.subr.mxu0 0.0
    %385 = vmatpush2.msra.mxu0 0.0
    %386 = vmatprep.mubr.f32.mxu0 0.0
    %387 = vmatmul.mubr.f32.gmra.mxu0 %v63
    %v388 = vpop.f32.mrf.mxu0
    %v389 = vadd.f32 %v320, %v388
    %v390 = vpop.f32.mrf.mxu0
    %391 = vmatprep.mubr.f32.mxu0 0.0
    %392 = vmatmul.mubr.f32.gmra.mxu0 %v66
    %v393 = vpop.f32.mrf.mxu0
    %v394 = vadd.f32 %v320, %v393
    %v395 = vpop.f32.mrf.mxu0
    %396 = vmatprep.mubr.f32.mxu0 0.0
    %397 = vmatmul.mubr.f32.gmra.mxu0 %v69
    %v398 = vpop.f32.mrf.mxu0
    %v399 = vadd.f32 %v320, %v398
    %v400 = vpop.f32.mrf.mxu0
    %401 = vmatprep.mubr.f32.mxu0 0.0
    %402 = vmatmul.mubr.f32.gmra.mxu0 %v72
    %v403 = vpop.f32.mrf.mxu0
    %v404 = vadd.f32 %v320, %v403
    %v405 = vpop.f32.mrf.mxu0
    %406 = vmatprep.mubr.f32.mxu0 0.0
    %407 = vmatmul.mubr.f32.gmra.mxu0 %v75
    %v408 = vpop.f32.mrf.mxu0
    %v409 = vadd.f32 %v320, %v408
    %v410 = vpop.f32.mrf.mxu0
    %411 = vmatprep.mubr.f32.mxu0 0.0
    %412 = vmatmul.mubr.f32.gmra.mxu0 %v78
    %v413 = vpop.f32.mrf.mxu0
    %v414 = vadd.f32 %v320, %v413
    %v415 = vpop.f32.mrf.mxu0
    %416 = vmatprep.mubr.f32.mxu0 0.0
    %417 = vmatmul.mubr.f32.gmra.mxu0 %v81
    %v418 = vpop.f32.mrf.mxu0
    %v419 = vadd.f32 %v320, %v418
    %v420 = vpop.f32.mrf.mxu0
    %421 = vmatprep.mubr.f32.mxu0 0.0
    %422 = vmatmul.mubr.f32.gmra.mxu0 %v84
    %v423 = vpop.f32.mrf.mxu0
    %v424 = vadd.f32 %v320, %v423
    %v425 = vpop.f32.mrf.mxu0
    %426 = vdwg.mxu0
    %v427 = vld [vmem:[#allocation3] sm:$0xff]
    %v428 = vld [vmem:[#allocation3 + $0x8] sm:$0xff]
    %v429 = vld [vmem:[#allocation3 + $0x10] sm:$0xff]
    %v430 = vld [vmem:[#allocation3 + $0x18] sm:$0xff]
    %s431 = scalar_lea.vmem [#allocation3], 32
    %v432 = vld [vmem:[%s431] sm:$0xff]
    %v433 = vld [vmem:[%s431 + $0x8] sm:$0xff]
    %v434 = vld [vmem:[%s431 + $0x10] sm:$0xff]
    %v435 = vld [vmem:[%s431 + $0x18] sm:$0xff]
    %s436 = scalar_lea.vmem [#allocation3], 64
    %v437 = vld [vmem:[%s436] sm:$0xff]
    %v438 = vld [vmem:[%s436 + $0x8] sm:$0xff]
    %v439 = vld [vmem:[%s436 + $0x10] sm:$0xff]
    %v440 = vld [vmem:[%s436 + $0x18] sm:$0xff]
    %v441 = vld [vmem:[%s4] sm:$0x1]
    %v443 = vlaneseq
    %v444 = vshrl.u32 %v443, 7
    %v445 = vsub.s32 0, %v444
    %v446 = vrot.slane %v441, %v445
    %v449 = vsel %vm61, 0.0, 0
    %451 = vmatprep.subr.mxu0 0.0
    %452 = vmatpush1.msra.mxu0 0.0
    %453 = vmatprep.subr.mxu0 0.0
    %454 = vmatpush1.msra.mxu0 0.0
    %455 = vmatprep.subr.mxu0 0.0
    %456 = vmatpush1.msra.mxu0 0.0
    %457 = vmatprep.subr.mxu0 0.0
    %458 = vmatpush1.msra.mxu0 0.0
    %459 = vmatprep.subr.mxu0 0.0
    %460 = vmatpush1.msra.mxu0 0.0
    %461 = vmatprep.subr.mxu0 0.0
    %462 = vmatpush1.msra.mxu0 0.0
    %463 = vmatprep.subr.mxu0 0.0
    %464 = vmatpush1.msra.mxu0 0.0
    %465 = vmatprep.subr.mxu0 0.0
    %466 = vmatpush1.msra.mxu0 0.0
    %467 = vmatprep.subr.mxu0 0.0
    %468 = vmatpush1.msra.mxu0 0.0
    %469 = vmatprep.subr.mxu0 0.0
    %470 = vmatpush1.msra.mxu0 0.0
    %471 = vmatprep.subr.mxu0 0.0
    %472 = vmatpush1.msra.mxu0 0.0
    %473 = vmatprep.subr.mxu0 0.0
    %474 = vmatpush1.msra.mxu0 0.0
    %475 = vmatprep.subr.mxu0 0.0
    %476 = vmatpush1.msra.mxu0 %v430
    %477 = vmatprep.subr.mxu0 0.0
    %478 = vmatpush1.msra.mxu0 %v429
    %479 = vmatprep.subr.mxu0 0.0
    %480 = vmatpush1.msra.mxu0 %v428
    %481 = vmatprep.subr.mxu0 0.0
    %482 = vmatpush1.msra.mxu0 %v427
    %483 = vmatprep.subr.mxu0 0.0
    %484 = vmatpush2.msra.mxu0 0.0
    %485 = vmatprep.subr.mxu0 0.0
    %486 = vmatpush2.msra.mxu0 0.0
    %487 = vmatprep.subr.mxu0 0.0
    %488 = vmatpush2.msra.mxu0 0.0
    %489 = vmatprep.subr.mxu0 0.0
    %490 = vmatpush2.msra.mxu0 0.0
    %491 = vmatprep.subr.mxu0 0.0
    %492 = vmatpush2.msra.mxu0 0.0
    %493 = vmatprep.subr.mxu0 0.0
    %494 = vmatpush2.msra.mxu0 0.0
    %495 = vmatprep.subr.mxu0 0.0
    %496 = vmatpush2.msra.mxu0 0.0
    %497 = vmatprep.subr.mxu0 0.0
    %498 = vmatpush2.msra.mxu0 0.0
    %499 = vmatprep.subr.mxu0 0.0
    %500 = vmatpush2.msra.mxu0 0.0
    %501 = vmatprep.subr.mxu0 0.0
    %502 = vmatpush2.msra.mxu0 0.0
    %503 = vmatprep.subr.mxu0 0.0
    %504 = vmatpush2.msra.mxu0 0.0
    %505 = vmatprep.subr.mxu0 0.0
    %506 = vmatpush2.msra.mxu0 0.0
    %507 = vmatprep.subr.mxu0 0.0
    %508 = vmatpush2.msra.mxu0 0.0
    %509 = vmatprep.subr.mxu0 0.0
    %510 = vmatpush2.msra.mxu0 0.0
    %511 = vmatprep.subr.mxu0 0.0
    %512 = vmatpush2.msra.mxu0 0.0
    %513 = vmatprep.subr.mxu0 0.0
    %514 = vmatpush2.msra.mxu0 0.0
    %515 = vmatprep.mubr.f32.mxu0 0.0
    %516 = vmatmul.mubr.f32.gmra.mxu0 %v449
    %v517 = vpop.f32.mrf.mxu0
    %v518 = vadd.f32 0.0, %v517
    %v519 = vpop.f32.mrf.mxu0
    %520 = vdwg.mxu0
    %521 = vmatprep.subr.mxu0 0.0
    %522 = vmatpush1.msra.mxu0 0.0
    %523 = vmatprep.subr.mxu0 0.0
    %524 = vmatpush1.msra.mxu0 0.0
    %525 = vmatprep.subr.mxu0 0.0
    %526 = vmatpush1.msra.mxu0 0.0
    %527 = vmatprep.subr.mxu0 0.0
    %528 = vmatpush1.msra.mxu0 0.0
    %529 = vmatprep.subr.mxu0 0.0
    %530 = vmatpush1.msra.mxu0 0.0
    %531 = vmatprep.subr.mxu0 0.0
    %532 = vmatpush1.msra.mxu0 0.0
    %533 = vmatprep.subr.mxu0 0.0
    %534 = vmatpush1.msra.mxu0 0.0
    %535 = vmatprep.subr.mxu0 0.0
    %536 = vmatpush1.msra.mxu0 0.0
    %537 = vmatprep.subr.mxu0 0.0
    %538 = vmatpush1.msra.mxu0 0.0
    %539 = vmatprep.subr.mxu0 0.0
    %540 = vmatpush1.msra.mxu0 0.0
    %541 = vmatprep.subr.mxu0 0.0
    %542 = vmatpush1.msra.mxu0 0.0
    %543 = vmatprep.subr.mxu0 0.0
    %544 = vmatpush1.msra.mxu0 0.0
    %545 = vmatprep.subr.mxu0 0.0
    %546 = vmatpush1.msra.mxu0 %v435
    %547 = vmatprep.subr.mxu0 0.0
    %548 = vmatpush1.msra.mxu0 %v434
    %549 = vmatprep.subr.mxu0 0.0
    %550 = vmatpush1.msra.mxu0 %v433
    %551 = vmatprep.subr.mxu0 0.0
    %552 = vmatpush1.msra.mxu0 %v432
    %553 = vmatprep.subr.mxu0 0.0
    %554 = vmatpush2.msra.mxu0 0.0
    %555 = vmatprep.subr.mxu0 0.0
    %556 = vmatpush2.msra.mxu0 0.0
    %557 = vmatprep.subr.mxu0 0.0
    %558 = vmatpush2.msra.mxu0 0.0
    %559 = vmatprep.subr.mxu0 0.0
    %560 = vmatpush2.msra.mxu0 0.0
    %561 = vmatprep.subr.mxu0 0.0
    %562 = vmatpush2.msra.mxu0 0.0
    %563 = vmatprep.subr.mxu0 0.0
    %564 = vmatpush2.msra.mxu0 0.0
    %565 = vmatprep.subr.mxu0 0.0
    %566 = vmatpush2.msra.mxu0 0.0
    %567 = vmatprep.subr.mxu0 0.0
    %568 = vmatpush2.msra.mxu0 0.0
    %569 = vmatprep.subr.mxu0 0.0
    %570 = vmatpush2.msra.mxu0 0.0
    %571 = vmatprep.subr.mxu0 0.0
    %572 = vmatpush2.msra.mxu0 0.0
    %573 = vmatprep.subr.mxu0 0.0
    %574 = vmatpush2.msra.mxu0 0.0
    %575 = vmatprep.subr.mxu0 0.0
    %576 = vmatpush2.msra.mxu0 0.0
    %577 = vmatprep.subr.mxu0 0.0
    %578 = vmatpush2.msra.mxu0 0.0
    %579 = vmatprep.subr.mxu0 0.0
    %580 = vmatpush2.msra.mxu0 0.0
    %581 = vmatprep.subr.mxu0 0.0
    %582 = vmatpush2.msra.mxu0 0.0
    %583 = vmatprep.subr.mxu0 0.0
    %584 = vmatpush2.msra.mxu0 0.0
    %585 = vmatprep.mubr.f32.mxu0 0.0
    %586 = vmatmul.mubr.f32.gmra.mxu0 %v449
    %v587 = vpop.f32.mrf.mxu0
    %v588 = vadd.f32 0.0, %v587
    %v589 = vpop.f32.mrf.mxu0
    %590 = vdwg.mxu0
    %591 = vmatprep.subr.mxu0 0.0
    %592 = vmatpush1.msra.mxu0 0.0
    %593 = vmatprep.subr.mxu0 0.0
    %594 = vmatpush1.msra.mxu0 0.0
    %595 = vmatprep.subr.mxu0 0.0
    %596 = vmatpush1.msra.mxu0 0.0
    %597 = vmatprep.subr.mxu0 0.0
    %598 = vmatpush1.msra.mxu0 0.0
    %599 = vmatprep.subr.mxu0 0.0
    %600 = vmatpush1.msra.mxu0 0.0
    %601 = vmatprep.subr.mxu0 0.0
    %602 = vmatpush1.msra.mxu0 0.0
    %603 = vmatprep.subr.mxu0 0.0
    %604 = vmatpush1.msra.mxu0 0.0
    %605 = vmatprep.subr.mxu0 0.0
    %606 = vmatpush1.msra.mxu0 0.0
    %607 = vmatprep.subr.mxu0 0.0
    %608 = vmatpush1.msra.mxu0 0.0
    %609 = vmatprep.subr.mxu0 0.0
    %610 = vmatpush1.msra.mxu0 0.0
    %611 = vmatprep.subr.mxu0 0.0
    %612 = vmatpush1.msra.mxu0 0.0
    %613 = vmatprep.subr.mxu0 0.0
    %614 = vmatpush1.msra.mxu0 0.0
    %615 = vmatprep.subr.mxu0 0.0
    %616 = vmatpush1.msra.mxu0 %v440
    %617 = vmatprep.subr.mxu0 0.0
    %618 = vmatpush1.msra.mxu0 %v439
    %619 = vmatprep.subr.mxu0 0.0
    %620 = vmatpush1.msra.mxu0 %v438
    %621 = vmatprep.subr.mxu0 0.0
    %622 = vmatpush1.msra.mxu0 %v437
    %623 = vmatprep.subr.mxu0 0.0
    %624 = vmatpush2.msra.mxu0 0.0
    %625 = vmatprep.subr.mxu0 0.0
    %626 = vmatpush2.msra.mxu0 0.0
    %627 = vmatprep.subr.mxu0 0.0
    %628 = vmatpush2.msra.mxu0 0.0
    %629 = vmatprep.subr.mxu0 0.0
    %630 = vmatpush2.msra.mxu0 0.0
    %631 = vmatprep.subr.mxu0 0.0
    %632 = vmatpush2.msra.mxu0 0.0
    %633 = vmatprep.subr.mxu0 0.0
    %634 = vmatpush2.msra.mxu0 0.0
    %635 = vmatprep.subr.mxu0 0.0
    %636 = vmatpush2.msra.mxu0 0.0
    %637 = vmatprep.subr.mxu0 0.0
    %638 = vmatpush2.msra.mxu0 0.0
    %639 = vmatprep.subr.mxu0 0.0
    %640 = vmatpush2.msra.mxu0 0.0
    %641 = vmatprep.subr.mxu0 0.0
    %642 = vmatpush2.msra.mxu0 0.0
    %643 = vmatprep.subr.mxu0 0.0
    %644 = vmatpush2.msra.mxu0 0.0
    %645 = vmatprep.subr.mxu0 0.0
    %646 = vmatpush2.msra.mxu0 0.0
    %647 = vmatprep.subr.mxu0 0.0
    %648 = vmatpush2.msra.mxu0 0.0
    %649 = vmatprep.subr.mxu0 0.0
    %650 = vmatpush2.msra.mxu0 0.0
    %651 = vmatprep.subr.mxu0 0.0
    %652 = vmatpush2.msra.mxu0 0.0
    %653 = vmatprep.subr.mxu0 0.0
    %654 = vmatpush2.msra.mxu0 0.0
    %655 = vmatprep.mubr.f32.mxu0 0.0
    %656 = vmatmul.mubr.f32.gmra.mxu0 %v449
    %v657 = vpop.f32.mrf.mxu0
    %v658 = vadd.f32 %v446, %v657
    %v659 = vpop.f32.mrf.mxu0
    %660 = vdwg.mxu0
    %v661 = vadd.f32 %v153, %v518
    %v662 = vxor.u32 %v661, 2147483648
    %v663 = vmul.f32 %v662, 1.442695
    %v664 = vpow.pop %v663
    %v665 = vadd.f32 %v664, 1.0
    %v666 = vrcp.pop %v665
    %v667 = vmul.f32 1.0, %v666
    %v668 = vadd.f32 %v271, %v588
    %v669 = vxor.u32 %v668, 2147483648
    %v670 = vmul.f32 %v669, 1.442695
    %v671 = vpow.pop %v670
    %v672 = vadd.f32 %v671, 1.0
    %v673 = vrcp.pop %v672
    %v674 = vmul.f32 1.0, %v673
    %v675 = vmul.f32 %v667, %v658
    %v676 = vadd.f32 %v389, %v675
    %v677 = vtanh.pop %v676
    %v678 = vsub.f32 0.0, %v677
    %v679 = vmul.f32 %v674, %v678
    %v680 = vadd.f32 %v677, %v679
    %v682 = vsel %vm61, %v680, 0
    %684 = vmatprep.subr.mxu0 0.0
    %685 = vmatpush1.msra.mxu0 0.0
    %686 = vmatprep.subr.mxu0 0.0
    %687 = vmatpush1.msra.mxu0 0.0
    %688 = vmatprep.subr.mxu0 0.0
    %689 = vmatpush1.msra.mxu0 0.0
    %690 = vmatprep.subr.mxu0 0.0
    %691 = vmatpush1.msra.mxu0 0.0
    %692 = vmatprep.subr.mxu0 0.0
    %693 = vmatpush1.msra.mxu0 0.0
    %694 = vmatprep.subr.mxu0 0.0
    %695 = vmatpush1.msra.mxu0 0.0
    %696 = vmatprep.subr.mxu0 0.0
    %697 = vmatpush1.msra.mxu0 0.0
    %698 = vmatprep.subr.mxu0 0.0
    %699 = vmatpush1.msra.mxu0 0.0
    %700 = vmatprep.subr.mxu0 0.0
    %701 = vmatpush1.msra.mxu0 0.0
    %702 = vmatprep.subr.mxu0 0.0
    %703 = vmatpush1.msra.mxu0 0.0
    %704 = vmatprep.subr.mxu0 0.0
    %705 = vmatpush1.msra.mxu0 0.0
    %706 = vmatprep.subr.mxu0 0.0
    %707 = vmatpush1.msra.mxu0 0.0
    %708 = vmatprep.subr.mxu0 0.0
    %709 = vmatpush1.msra.mxu0 %v430
    %710 = vmatprep.subr.mxu0 0.0
    %711 = vmatpush1.msra.mxu0 %v429
    %712 = vmatprep.subr.mxu0 0.0
    %713 = vmatpush1.msra.mxu0 %v428
    %714 = vmatprep.subr.mxu0 0.0
    %715 = vmatpush1.msra.mxu0 %v427
    %716 = vmatprep.subr.mxu0 0.0
    %717 = vmatpush2.msra.mxu0 0.0
    %718 = vmatprep.subr.mxu0 0.0
    %719 = vmatpush2.msra.mxu0 0.0
    %720 = vmatprep.subr.mxu0 0.0
    %721 = vmatpush2.msra.mxu0 0.0
    %722 = vmatprep.subr.mxu0 0.0
    %723 = vmatpush2.msra.mxu0 0.0
    %724 = vmatprep.subr.mxu0 0.0
    %725 = vmatpush2.msra.mxu0 0.0
    %726 = vmatprep.subr.mxu0 0.0
    %727 = vmatpush2.msra.mxu0 0.0
    %728 = vmatprep.subr.mxu0 0.0
    %729 = vmatpush2.msra.mxu0 0.0
    %730 = vmatprep.subr.mxu0 0.0
    %731 = vmatpush2.msra.mxu0 0.0
    %732 = vmatprep.subr.mxu0 0.0
    %733 = vmatpush2.msra.mxu0 0.0
    %734 = vmatprep.subr.mxu0 0.0
    %735 = vmatpush2.msra.mxu0 0.0
    %736 = vmatprep.subr.mxu0 0.0
    %737 = vmatpush2.msra.mxu0 0.0
    %738 = vmatprep.subr.mxu0 0.0
    %739 = vmatpush2.msra.mxu0 0.0
    %740 = vmatprep.subr.mxu0 0.0
    %741 = vmatpush2.msra.mxu0 0.0
    %742 = vmatprep.subr.mxu0 0.0
    %743 = vmatpush2.msra.mxu0 0.0
    %744 = vmatprep.subr.mxu0 0.0
    %745 = vmatpush2.msra.mxu0 0.0
    %746 = vmatprep.subr.mxu0 0.0
    %747 = vmatpush2.msra.mxu0 0.0
    %748 = vmatprep.mubr.f32.mxu0 0.0
    %749 = vmatmul.mubr.f32.gmra.mxu0 %v682
    %v750 = vpop.f32.mrf.mxu0
    %v751 = vadd.f32 0.0, %v750
    %v752 = vpop.f32.mrf.mxu0
    %753 = vdwg.mxu0
    %754 = vmatprep.subr.mxu0 0.0
    %755 = vmatpush1.msra.mxu0 0.0
    %756 = vmatprep.subr.mxu0 0.0
    %757 = vmatpush1.msra.mxu0 0.0
    %758 = vmatprep.subr.mxu0 0.0
    %759 = vmatpush1.msra.mxu0 0.0
    %760 = vmatprep.subr.mxu0 0.0
    %761 = vmatpush1.msra.mxu0 0.0
    %762 = vmatprep.subr.mxu0 0.0
    %763 = vmatpush1.msra.mxu0 0.0
    %764 = vmatprep.subr.mxu0 0.0
    %765 = vmatpush1.msra.mxu0 0.0
    %766 = vmatprep.subr.mxu0 0.0
    %767 = vmatpush1.msra.mxu0 0.0
    %768 = vmatprep.subr.mxu0 0.0
    %769 = vmatpush1.msra.mxu0 0.0
    %770 = vmatprep.subr.mxu0 0.0
    %771 = vmatpush1.msra.mxu0 0.0
    %772 = vmatprep.subr.mxu0 0.0
    %773 = vmatpush1.msra.mxu0 0.0
    %774 = vmatprep.subr.mxu0 0.0
    %775 = vmatpush1.msra.mxu0 0.0
    %776 = vmatprep.subr.mxu0 0.0
    %777 = vmatpush1.msra.mxu0 0.0
    %778 = vmatprep.subr.mxu0 0.0
    %779 = vmatpush1.msra.mxu0 %v435
    %780 = vmatprep.subr.mxu0 0.0
    %781 = vmatpush1.msra.mxu0 %v434
    %782 = vmatprep.subr.mxu0 0.0
    %783 = vmatpush1.msra.mxu0 %v433
    %784 = vmatprep.subr.mxu0 0.0
    %785 = vmatpush1.msra.mxu0 %v432
    %786 = vmatprep.subr.mxu0 0.0
    %787 = vmatpush2.msra.mxu0 0.0
    %788 = vmatprep.subr.mxu0 0.0
    %789 = vmatpush2.msra.mxu0 0.0
    %790 = vmatprep.subr.mxu0 0.0
    %791 = vmatpush2.msra.mxu0 0.0
    %792 = vmatprep.subr.mxu0 0.0
    %793 = vmatpush2.msra.mxu0 0.0
    %794 = vmatprep.subr.mxu0 0.0
    %795 = vmatpush2.msra.mxu0 0.0
    %796 = vmatprep.subr.mxu0 0.0
    %797 = vmatpush2.msra.mxu0 0.0
    %798 = vmatprep.subr.mxu0 0.0
    %799 = vmatpush2.msra.mxu0 0.0
    %800 = vmatprep.subr.mxu0 0.0
    %801 = vmatpush2.msra.mxu0 0.0
    %802 = vmatprep.subr.mxu0 0.0
    %803 = vmatpush2.msra.mxu0 0.0
    %804 = vmatprep.subr.mxu0 0.0
    %805 = vmatpush2.msra.mxu0 0.0
    %806 = vmatprep.subr.mxu0 0.0
    %807 = vmatpush2.msra.mxu0 0.0
    %808 = vmatprep.subr.mxu0 0.0
    %809 = vmatpush2.msra.mxu0 0.0
    %810 = vmatprep.subr.mxu0 0.0
    %811 = vmatpush2.msra.mxu0 0.0
    %812 = vmatprep.subr.mxu0 0.0
    %813 = vmatpush2.msra.mxu0 0.0
    %814 = vmatprep.subr.mxu0 0.0
    %815 = vmatpush2.msra.mxu0 0.0
    %816 = vmatprep.subr.mxu0 0.0
    %817 = vmatpush2.msra.mxu0 0.0
    %818 = vmatprep.mubr.f32.mxu0 0.0
    %819 = vmatmul.mubr.f32.gmra.mxu0 %v682
    %v820 = vpop.f32.mrf.mxu0
    %v821 = vadd.f32 0.0, %v820
    %v822 = vpop.f32.mrf.mxu0
    %823 = vdwg.mxu0
    %824 = vmatprep.subr.mxu0 0.0
    %825 = vmatpush1.msra.mxu0 0.0
    %826 = vmatprep.subr.mxu0 0.0
    %827 = vmatpush1.msra.mxu0 0.0
    %828 = vmatprep.subr.mxu0 0.0
    %829 = vmatpush1.msra.mxu0 0.0
    %830 = vmatprep.subr.mxu0 0.0
    %831 = vmatpush1.msra.mxu0 0.0
    %832 = vmatprep.subr.mxu0 0.0
    %833 = vmatpush1.msra.mxu0 0.0
    %834 = vmatprep.subr.mxu0 0.0
    %835 = vmatpush1.msra.mxu0 0.0
    %836 = vmatprep.subr.mxu0 0.0
    %837 = vmatpush1.msra.mxu0 0.0
    %838 = vmatprep.subr.mxu0 0.0
    %839 = vmatpush1.msra.mxu0 0.0
    %840 = vmatprep.subr.mxu0 0.0
    %841 = vmatpush1.msra.mxu0 0.0
    %842 = vmatprep.subr.mxu0 0.0
    %843 = vmatpush1.msra.mxu0 0.0
    %844 = vmatprep.subr.mxu0 0.0
    %845 = vmatpush1.msra.mxu0 0.0
    %846 = vmatprep.subr.mxu0 0.0
    %847 = vmatpush1.msra.mxu0 0.0
    %848 = vmatprep.subr.mxu0 0.0
    %849 = vmatpush1.msra.mxu0 %v440
    %850 = vmatprep.subr.mxu0 0.0
    %851 = vmatpush1.msra.mxu0 %v439
    %852 = vmatprep.subr.mxu0 0.0
    %853 = vmatpush1.msra.mxu0 %v438
    %854 = vmatprep.subr.mxu0 0.0
    %855 = vmatpush1.msra.mxu0 %v437
    %856 = vmatprep.subr.mxu0 0.0
    %857 = vmatpush2.msra.mxu0 0.0
    %858 = vmatprep.subr.mxu0 0.0
    %859 = vmatpush2.msra.mxu0 0.0
    %860 = vmatprep.subr.mxu0 0.0
    %861 = vmatpush2.msra.mxu0 0.0
    %862 = vmatprep.subr.mxu0 0.0
    %863 = vmatpush2.msra.mxu0 0.0
    %864 = vmatprep.subr.mxu0 0.0
    %865 = vmatpush2.msra.mxu0 0.0
    %866 = vmatprep.subr.mxu0 0.0
    %867 = vmatpush2.msra.mxu0 0.0
    %868 = vmatprep.subr.mxu0 0.0
    %869 = vmatpush2.msra.mxu0 0.0
    %870 = vmatprep.subr.mxu0 0.0
    %871 = vmatpush2.msra.mxu0 0.0
    %872 = vmatprep.subr.mxu0 0.0
    %873 = vmatpush2.msra.mxu0 0.0
    %874 = vmatprep.subr.mxu0 0.0
    %875 = vmatpush2.msra.mxu0 0.0
    %876 = vmatprep.subr.mxu0 0.0
    %877 = vmatpush2.msra.mxu0 0.0
    %878 = vmatprep.subr.mxu0 0.0
    %879 = vmatpush2.msra.mxu0 0.0
    %880 = vmatprep.subr.mxu0 0.0
    %881 = vmatpush2.msra.mxu0 0.0
    %882 = vmatprep.subr.mxu0 0.0
    %883 = vmatpush2.msra.mxu0 0.0
    %884 = vmatprep.subr.mxu0 0.0
    %885 = vmatpush2.msra.mxu0 0.0
    %886 = vmatprep.subr.mxu0 0.0
    %887 = vmatpush2.msra.mxu0 0.0
    %888 = vmatprep.mubr.f32.mxu0 0.0
    %889 = vmatmul.mubr.f32.gmra.mxu0 %v682
    %v890 = vpop.f32.mrf.mxu0
    %v891 = vadd.f32 %v446, %v890
    %v892 = vpop.f32.mrf.mxu0
    %893 = vdwg.mxu0
    %v894 = vadd.f32 %v158, %v751
    %v895 = vxor.u32 %v894, 2147483648
    %v896 = vmul.f32 %v895, 1.442695
    %v897 = vpow.pop %v896
    %v898 = vadd.f32 %v897, 1.0
    %v899 = vrcp.pop %v898
    %v900 = vmul.f32 1.0, %v899
    %v901 = vadd.f32 %v276, %v821
    %v902 = vxor.u32 %v901, 2147483648
    %v903 = vmul.f32 %v902, 1.442695
    %v904 = vpow.pop %v903
    %v905 = vadd.f32 %v904, 1.0
    %v906 = vrcp.pop %v905
    %v907 = vmul.f32 1.0, %v906
    %v908 = vmul.f32 %v900, %v891
    %v909 = vadd.f32 %v394, %v908
    %v910 = vtanh.pop %v909
    %v911 = vsub.f32 %v680, %v910
    %v912 = vmul.f32 %v907, %v911
    %v913 = vadd.f32 %v910, %v912
    %v915 = vsel %vm61, %v913, 0
    %917 = vmatprep.subr.mxu0 0.0
    %918 = vmatpush1.msra.mxu0 0.0
    %919 = vmatprep.subr.mxu0 0.0
    %920 = vmatpush1.msra.mxu0 0.0
    %921 = vmatprep.subr.mxu0 0.0
    %922 = vmatpush1.msra.mxu0 0.0
    %923 = vmatprep.subr.mxu0 0.0
    %924 = vmatpush1.msra.mxu0 0.0
    %925 = vmatprep.subr.mxu0 0.0
    %926 = vmatpush1.msra.mxu0 0.0
    %927 = vmatprep.subr.mxu0 0.0
    %928 = vmatpush1.msra.mxu0 0.0
    %929 = vmatprep.subr.mxu0 0.0
    %930 = vmatpush1.msra.mxu0 0.0
    %931 = vmatprep.subr.mxu0 0.0
    %932 = vmatpush1.msra.mxu0 0.0
    %933 = vmatprep.subr.mxu0 0.0
    %934 = vmatpush1.msra.mxu0 0.0
    %935 = vmatprep.subr.mxu0 0.0
    %936 = vmatpush1.msra.mxu0 0.0
    %937 = vmatprep.subr.mxu0 0.0
    %938 = vmatpush1.msra.mxu0 0.0
    %939 = vmatprep.subr.mxu0 0.0
    %940 = vmatpush1.msra.mxu0 0.0
    %941 = vmatprep.subr.mxu0 0.0
    %942 = vmatpush1.msra.mxu0 %v430
    %943 = vmatprep.subr.mxu0 0.0
    %944 = vmatpush1.msra.mxu0 %v429
    %945 = vmatprep.subr.mxu0 0.0
    %946 = vmatpush1.msra.mxu0 %v428
    %947 = vmatprep.subr.mxu0 0.0
    %948 = vmatpush1.msra.mxu0 %v427
    %949 = vmatprep.subr.mxu0 0.0
    %950 = vmatpush2.msra.mxu0 0.0
    %951 = vmatprep.subr.mxu0 0.0
    %952 = vmatpush2.msra.mxu0 0.0
    %953 = vmatprep.subr.mxu0 0.0
    %954 = vmatpush2.msra.mxu0 0.0
    %955 = vmatprep.subr.mxu0 0.0
    %956 = vmatpush2.msra.mxu0 0.0
    %957 = vmatprep.subr.mxu0 0.0
    %958 = vmatpush2.msra.mxu0 0.0
    %959 = vmatprep.subr.mxu0 0.0
    %960 = vmatpush2.msra.mxu0 0.0
    %961 = vmatprep.subr.mxu0 0.0
    %962 = vmatpush2.msra.mxu0 0.0
    %963 = vmatprep.subr.mxu0 0.0
    %964 = vmatpush2.msra.mxu0 0.0
    %965 = vmatprep.subr.mxu0 0.0
    %966 = vmatpush2.msra.mxu0 0.0
    %967 = vmatprep.subr.mxu0 0.0
    %968 = vmatpush2.msra.mxu0 0.0
    %969 = vmatprep.subr.mxu0 0.0
    %970 = vmatpush2.msra.mxu0 0.0
    %971 = vmatprep.subr.mxu0 0.0
    %972 = vmatpush2.msra.mxu0 0.0
    %973 = vmatprep.subr.mxu0 0.0
    %974 = vmatpush2.msra.mxu0 0.0
    %975 = vmatprep.subr.mxu0 0.0
    %976 = vmatpush2.msra.mxu0 0.0
    %977 = vmatprep.subr.mxu0 0.0
    %978 = vmatpush2.msra.mxu0 0.0
    %979 = vmatprep.subr.mxu0 0.0
    %980 = vmatpush2.msra.mxu0 0.0
    %981 = vmatprep.mubr.f32.mxu0 0.0
    %982 = vmatmul.mubr.f32.gmra.mxu0 %v915
    %v983 = vpop.f32.mrf.mxu0
    %v984 = vadd.f32 0.0, %v983
    %v985 = vpop.f32.mrf.mxu0
    %986 = vdwg.mxu0
    %987 = vmatprep.subr.mxu0 0.0
    %988 = vmatpush1.msra.mxu0 0.0
    %989 = vmatprep.subr.mxu0 0.0
    %990 = vmatpush1.msra.mxu0 0.0
    %991 = vmatprep.subr.mxu0 0.0
    %992 = vmatpush1.msra.mxu0 0.0
    %993 = vmatprep.subr.mxu0 0.0
    %994 = vmatpush1.msra.mxu0 0.0
    %995 = vmatprep.subr.mxu0 0.0
    %996 = vmatpush1.msra.mxu0 0.0
    %997 = vmatprep.subr.mxu0 0.0
    %998 = vmatpush1.msra.mxu0 0.0
    %999 = vmatprep.subr.mxu0 0.0
    %1000 = vmatpush1.msra.mxu0 0.0
    %1001 = vmatprep.subr.mxu0 0.0
    %1002 = vmatpush1.msra.mxu0 0.0
    %1003 = vmatprep.subr.mxu0 0.0
    %1004 = vmatpush1.msra.mxu0 0.0
    %1005 = vmatprep.subr.mxu0 0.0
    %1006 = vmatpush1.msra.mxu0 0.0
    %1007 = vmatprep.subr.mxu0 0.0
    %1008 = vmatpush1.msra.mxu0 0.0
    %1009 = vmatprep.subr.mxu0 0.0
    %1010 = vmatpush1.msra.mxu0 0.0
    %1011 = vmatprep.subr.mxu0 0.0
    %1012 = vmatpush1.msra.mxu0 %v435
    %1013 = vmatprep.subr.mxu0 0.0
    %1014 = vmatpush1.msra.mxu0 %v434
    %1015 = vmatprep.subr.mxu0 0.0
    %1016 = vmatpush1.msra.mxu0 %v433
    %1017 = vmatprep.subr.mxu0 0.0
    %1018 = vmatpush1.msra.mxu0 %v432
    %1019 = vmatprep.subr.mxu0 0.0
    %1020 = vmatpush2.msra.mxu0 0.0
    %1021 = vmatprep.subr.mxu0 0.0
    %1022 = vmatpush2.msra.mxu0 0.0
    %1023 = vmatprep.subr.mxu0 0.0
    %1024 = vmatpush2.msra.mxu0 0.0
    %1025 = vmatprep.subr.mxu0 0.0
    %1026 = vmatpush2.msra.mxu0 0.0
    %1027 = vmatprep.subr.mxu0 0.0
    %1028 = vmatpush2.msra.mxu0 0.0
    %1029 = vmatprep.subr.mxu0 0.0
    %1030 = vmatpush2.msra.mxu0 0.0
    %1031 = vmatprep.subr.mxu0 0.0
    %1032 = vmatpush2.msra.mxu0 0.0
    %1033 = vmatprep.subr.mxu0 0.0
    %1034 = vmatpush2.msra.mxu0 0.0
    %1035 = vmatprep.subr.mxu0 0.0
    %1036 = vmatpush2.msra.mxu0 0.0
    %1037 = vmatprep.subr.mxu0 0.0
    %1038 = vmatpush2.msra.mxu0 0.0
    %1039 = vmatprep.subr.mxu0 0.0
    %1040 = vmatpush2.msra.mxu0 0.0
    %1041 = vmatprep.subr.mxu0 0.0
    %1042 = vmatpush2.msra.mxu0 0.0
    %1043 = vmatprep.subr.mxu0 0.0
    %1044 = vmatpush2.msra.mxu0 0.0
    %1045 = vmatprep.subr.mxu0 0.0
    %1046 = vmatpush2.msra.mxu0 0.0
    %1047 = vmatprep.subr.mxu0 0.0
    %1048 = vmatpush2.msra.mxu0 0.0
    %1049 = vmatprep.subr.mxu0 0.0
    %1050 = vmatpush2.msra.mxu0 0.0
    %1051 = vmatprep.mubr.f32.mxu0 0.0
    %1052 = vmatmul.mubr.f32.gmra.mxu0 %v915
    %v1053 = vpop.f32.mrf.mxu0
    %v1054 = vadd.f32 0.0, %v1053
    %v1055 = vpop.f32.mrf.mxu0
    %1056 = vdwg.mxu0
    %1057 = vmatprep.subr.mxu0 0.0
    %1058 = vmatpush1.msra.mxu0 0.0
    %1059 = vmatprep.subr.mxu0 0.0
    %1060 = vmatpush1.msra.mxu0 0.0
    %1061 = vmatprep.subr.mxu0 0.0
    %1062 = vmatpush1.msra.mxu0 0.0
    %1063 = vmatprep.subr.mxu0 0.0
    %1064 = vmatpush1.msra.mxu0 0.0
    %1065 = vmatprep.subr.mxu0 0.0
    %1066 = vmatpush1.msra.mxu0 0.0
    %1067 = vmatprep.subr.mxu0 0.0
    %1068 = vmatpush1.msra.mxu0 0.0
    %1069 = vmatprep.subr.mxu0 0.0
    %1070 = vmatpush1.msra.mxu0 0.0
    %1071 = vmatprep.subr.mxu0 0.0
    %1072 = vmatpush1.msra.mxu0 0.0
    %1073 = vmatprep.subr.mxu0 0.0
    %1074 = vmatpush1.msra.mxu0 0.0
    %1075 = vmatprep.subr.mxu0 0.0
    %1076 = vmatpush1.msra.mxu0 0.0
    %1077 = vmatprep.subr.mxu0 0.0
    %1078 = vmatpush1.msra.mxu0 0.0
    %1079 = vmatprep.subr.mxu0 0.0
    %1080 = vmatpush1.msra.mxu0 0.0
    %1081 = vmatprep.subr.mxu0 0.0
    %1082 = vmatpush1.msra.mxu0 %v440
    %1083 = vmatprep.subr.mxu0 0.0
    %1084 = vmatpush1.msra.mxu0 %v439
    %1085 = vmatprep.subr.mxu0 0.0
    %1086 = vmatpush1.msra.mxu0 %v438
    %1087 = vmatprep.subr.mxu0 0.0
    %1088 = vmatpush1.msra.mxu0 %v437
    %1089 = vmatprep.subr.mxu0 0.0
    %1090 = vmatpush2.msra.mxu0 0.0
    %1091 = vmatprep.subr.mxu0 0.0
    %1092 = vmatpush2.msra.mxu0 0.0
    %1093 = vmatprep.subr.mxu0 0.0
    %1094 = vmatpush2.msra.mxu0 0.0
    %1095 = vmatprep.subr.mxu0 0.0
    %1096 = vmatpush2.msra.mxu0 0.0
    %1097 = vmatprep.subr.mxu0 0.0
    %1098 = vmatpush2.msra.mxu0 0.0
    %1099 = vmatprep.subr.mxu0 0.0
    %1100 = vmatpush2.msra.mxu0 0.0
    %1101 = vmatprep.subr.mxu0 0.0
    %1102 = vmatpush2.msra.mxu0 0.0
    %1103 = vmatprep.subr.mxu0 0.0
    %1104 = vmatpush2.msra.mxu0 0.0
    %1105 = vmatprep.subr.mxu0 0.0
    %1106 = vmatpush2.msra.mxu0 0.0
    %1107 = vmatprep.subr.mxu0 0.0
    %1108 = vmatpush2.msra.mxu0 0.0
    %1109 = vmatprep.subr.mxu0 0.0
    %1110 = vmatpush2.msra.mxu0 0.0
    %1111 = vmatprep.subr.mxu0 0.0
    %1112 = vmatpush2.msra.mxu0 0.0
    %1113 = vmatprep.subr.mxu0 0.0
    %1114 = vmatpush2.msra.mxu0 0.0
    %1115 = vmatprep.subr.mxu0 0.0
    %1116 = vmatpush2.msra.mxu0 0.0
    %1117 = vmatprep.subr.mxu0 0.0
    %1118 = vmatpush2.msra.mxu0 0.0
    %1119 = vmatprep.subr.mxu0 0.0
    %1120 = vmatpush2.msra.mxu0 0.0
    %1121 = vmatprep.mubr.f32.mxu0 0.0
    %1122 = vmatmul.mubr.f32.gmra.mxu0 %v915
    %v1123 = vpop.f32.mrf.mxu0
    %v1124 = vadd.f32 %v446, %v1123
    %v1125 = vpop.f32.mrf.mxu0
    %1126 = vdwg.mxu0
    %v1127 = vadd.f32 %v163, %v984
    %v1128 = vxor.u32 %v1127, 2147483648
    %v1129 = vmul.f32 %v1128, 1.442695
    %v1130 = vpow.pop %v1129
    %v1131 = vadd.f32 %v1130, 1.0
    %v1132 = vrcp.pop %v1131
    %v1133 = vmul.f32 1.0, %v1132
    %v1134 = vadd.f32 %v281, %v1054
    %v1135 = vxor.u32 %v1134, 2147483648
    %v1136 = vmul.f32 %v1135, 1.442695
    %v1137 = vpow.pop %v1136
    %v1138 = vadd.f32 %v1137, 1.0
    %v1139 = vrcp.pop %v1138
    %v1140 = vmul.f32 1.0, %v1139
    %v1141 = vmul.f32 %v1133, %v1124
    %v1142 = vadd.f32 %v399, %v1141
    %v1143 = vtanh.pop %v1142
    %v1144 = vsub.f32 %v913, %v1143
    %v1145 = vmul.f32 %v1140, %v1144
    %v1146 = vadd.f32 %v1143, %v1145
    %v1148 = vsel %vm61, %v1146, 0
    %1150 = vmatprep.subr.mxu0 0.0
    %1151 = vmatpush1.msra.mxu0 0.0
    %1152 = vmatprep.subr.mxu0 0.0
    %1153 = vmatpush1.msra.mxu0 0.0
    %1154 = vmatprep.subr.mxu0 0.0
    %1155 = vmatpush1.msra.mxu0 0.0
    %1156 = vmatprep.subr.mxu0 0.0
    %1157 = vmatpush1.msra.mxu0 0.0
    %1158 = vmatprep.subr.mxu0 0.0
    %1159 = vmatpush1.msra.mxu0 0.0
    %1160 = vmatprep.subr.mxu0 0.0
    %1161 = vmatpush1.msra.mxu0 0.0
    %1162 = vmatprep.subr.mxu0 0.0
    %1163 = vmatpush1.msra.mxu0 0.0
    %1164 = vmatprep.subr.mxu0 0.0
    %1165 = vmatpush1.msra.mxu0 0.0
    %1166 = vmatprep.subr.mxu0 0.0
    %1167 = vmatpush1.msra.mxu0 0.0
    %1168 = vmatprep.subr.mxu0 0.0
    %1169 = vmatpush1.msra.mxu0 0.0
    %1170 = vmatprep.subr.mxu0 0.0
    %1171 = vmatpush1.msra.mxu0 0.0
    %1172 = vmatprep.subr.mxu0 0.0
    %1173 = vmatpush1.msra.mxu0 0.0
    %1174 = vmatprep.subr.mxu0 0.0
    %1175 = vmatpush1.msra.mxu0 %v430
    %1176 = vmatprep.subr.mxu0 0.0
    %1177 = vmatpush1.msra.mxu0 %v429
    %1178 = vmatprep.subr.mxu0 0.0
    %1179 = vmatpush1.msra.mxu0 %v428
    %1180 = vmatprep.subr.mxu0 0.0
    %1181 = vmatpush1.msra.mxu0 %v427
    %1182 = vmatprep.subr.mxu0 0.0
    %1183 = vmatpush2.msra.mxu0 0.0
    %1184 = vmatprep.subr.mxu0 0.0
    %1185 = vmatpush2.msra.mxu0 0.0
    %1186 = vmatprep.subr.mxu0 0.0
    %1187 = vmatpush2.msra.mxu0 0.0
    %1188 = vmatprep.subr.mxu0 0.0
    %1189 = vmatpush2.msra.mxu0 0.0
    %1190 = vmatprep.subr.mxu0 0.0
    %1191 = vmatpush2.msra.mxu0 0.0
    %1192 = vmatprep.subr.mxu0 0.0
    %1193 = vmatpush2.msra.mxu0 0.0
    %1194 = vmatprep.subr.mxu0 0.0
    %1195 = vmatpush2.msra.mxu0 0.0
    %1196 = vmatprep.subr.mxu0 0.0
    %1197 = vmatpush2.msra.mxu0 0.0
    %1198 = vmatprep.subr.mxu0 0.0
    %1199 = vmatpush2.msra.mxu0 0.0
    %1200 = vmatprep.subr.mxu0 0.0
    %1201 = vmatpush2.msra.mxu0 0.0
    %1202 = vmatprep.subr.mxu0 0.0
    %1203 = vmatpush2.msra.mxu0 0.0
    %1204 = vmatprep.subr.mxu0 0.0
    %1205 = vmatpush2.msra.mxu0 0.0
    %1206 = vmatprep.subr.mxu0 0.0
    %1207 = vmatpush2.msra.mxu0 0.0
    %1208 = vmatprep.subr.mxu0 0.0
    %1209 = vmatpush2.msra.mxu0 0.0
    %1210 = vmatprep.subr.mxu0 0.0
    %1211 = vmatpush2.msra.mxu0 0.0
    %1212 = vmatprep.subr.mxu0 0.0
    %1213 = vmatpush2.msra.mxu0 0.0
    %1214 = vmatprep.mubr.f32.mxu0 0.0
    %1215 = vmatmul.mubr.f32.gmra.mxu0 %v1148
    %v1216 = vpop.f32.mrf.mxu0
    %v1217 = vadd.f32 0.0, %v1216
    %v1218 = vpop.f32.mrf.mxu0
    %1219 = vdwg.mxu0
    %1220 = vmatprep.subr.mxu0 0.0
    %1221 = vmatpush1.msra.mxu0 0.0
    %1222 = vmatprep.subr.mxu0 0.0
    %1223 = vmatpush1.msra.mxu0 0.0
    %1224 = vmatprep.subr.mxu0 0.0
    %1225 = vmatpush1.msra.mxu0 0.0
    %1226 = vmatprep.subr.mxu0 0.0
    %1227 = vmatpush1.msra.mxu0 0.0
    %1228 = vmatprep.subr.mxu0 0.0
    %1229 = vmatpush1.msra.mxu0 0.0
    %1230 = vmatprep.subr.mxu0 0.0
    %1231 = vmatpush1.msra.mxu0 0.0
    %1232 = vmatprep.subr.mxu0 0.0
    %1233 = vmatpush1.msra.mxu0 0.0
    %1234 = vmatprep.subr.mxu0 0.0
    %1235 = vmatpush1.msra.mxu0 0.0
    %1236 = vmatprep.subr.mxu0 0.0
    %1237 = vmatpush1.msra.mxu0 0.0
    %1238 = vmatprep.subr.mxu0 0.0
    %1239 = vmatpush1.msra.mxu0 0.0
    %1240 = vmatprep.subr.mxu0 0.0
    %1241 = vmatpush1.msra.mxu0 0.0
    %1242 = vmatprep.subr.mxu0 0.0
    %1243 = vmatpush1.msra.mxu0 0.0
    %1244 = vmatprep.subr.mxu0 0.0
    %1245 = vmatpush1.msra.mxu0 %v435
    %1246 = vmatprep.subr.mxu0 0.0
    %1247 = vmatpush1.msra.mxu0 %v434
    %1248 = vmatprep.subr.mxu0 0.0
    %1249 = vmatpush1.msra.mxu0 %v433
    %1250 = vmatprep.subr.mxu0 0.0
    %1251 = vmatpush1.msra.mxu0 %v432
    %1252 = vmatprep.subr.mxu0 0.0
    %1253 = vmatpush2.msra.mxu0 0.0
    %1254 = vmatprep.subr.mxu0 0.0
    %1255 = vmatpush2.msra.mxu0 0.0
    %1256 = vmatprep.subr.mxu0 0.0
    %1257 = vmatpush2.msra.mxu0 0.0
    %1258 = vmatprep.subr.mxu0 0.0
    %1259 = vmatpush2.msra.mxu0 0.0
    %1260 = vmatprep.subr.mxu0 0.0
    %1261 = vmatpush2.msra.mxu0 0.0
    %1262 = vmatprep.subr.mxu0 0.0
    %1263 = vmatpush2.msra.mxu0 0.0
    %1264 = vmatprep.subr.mxu0 0.0
    %1265 = vmatpush2.msra.mxu0 0.0
    %1266 = vmatprep.subr.mxu0 0.0
    %1267 = vmatpush2.msra.mxu0 0.0
    %1268 = vmatprep.subr.mxu0 0.0
    %1269 = vmatpush2.msra.mxu0 0.0
    %1270 = vmatprep.subr.mxu0 0.0
    %1271 = vmatpush2.msra.mxu0 0.0
    %1272 = vmatprep.subr.mxu0 0.0
    %1273 = vmatpush2.msra.mxu0 0.0
    %1274 = vmatprep.subr.mxu0 0.0
    %1275 = vmatpush2.msra.mxu0 0.0
    %1276 = vmatprep.subr.mxu0 0.0
    %1277 = vmatpush2.msra.mxu0 0.0
    %1278 = vmatprep.subr.mxu0 0.0
    %1279 = vmatpush2.msra.mxu0 0.0
    %1280 = vmatprep.subr.mxu0 0.0
    %1281 = vmatpush2.msra.mxu0 0.0
    %1282 = vmatprep.subr.mxu0 0.0
    %1283 = vmatpush2.msra.mxu0 0.0
    %1284 = vmatprep.mubr.f32.mxu0 0.0
    %1285 = vmatmul.mubr.f32.gmra.mxu0 %v1148
    %v1286 = vpop.f32.mrf.mxu0
    %v1287 = vadd.f32 0.0, %v1286
    %v1288 = vpop.f32.mrf.mxu0
    %1289 = vdwg.mxu0
    %1290 = vmatprep.subr.mxu0 0.0
    %1291 = vmatpush1.msra.mxu0 0.0
    %1292 = vmatprep.subr.mxu0 0.0
    %1293 = vmatpush1.msra.mxu0 0.0
    %1294 = vmatprep.subr.mxu0 0.0
    %1295 = vmatpush1.msra.mxu0 0.0
    %1296 = vmatprep.subr.mxu0 0.0
    %1297 = vmatpush1.msra.mxu0 0.0
    %1298 = vmatprep.subr.mxu0 0.0
    %1299 = vmatpush1.msra.mxu0 0.0
    %1300 = vmatprep.subr.mxu0 0.0
    %1301 = vmatpush1.msra.mxu0 0.0
    %1302 = vmatprep.subr.mxu0 0.0
    %1303 = vmatpush1.msra.mxu0 0.0
    %1304 = vmatprep.subr.mxu0 0.0
    %1305 = vmatpush1.msra.mxu0 0.0
    %1306 = vmatprep.subr.mxu0 0.0
    %1307 = vmatpush1.msra.mxu0 0.0
    %1308 = vmatprep.subr.mxu0 0.0
    %1309 = vmatpush1.msra.mxu0 0.0
    %1310 = vmatprep.subr.mxu0 0.0
    %1311 = vmatpush1.msra.mxu0 0.0
    %1312 = vmatprep.subr.mxu0 0.0
    %1313 = vmatpush1.msra.mxu0 0.0
    %1314 = vmatprep.subr.mxu0 0.0
    %1315 = vmatpush1.msra.mxu0 %v440
    %1316 = vmatprep.subr.mxu0 0.0
    %1317 = vmatpush1.msra.mxu0 %v439
    %1318 = vmatprep.subr.mxu0 0.0
    %1319 = vmatpush1.msra.mxu0 %v438
    %1320 = vmatprep.subr.mxu0 0.0
    %1321 = vmatpush1.msra.mxu0 %v437
    %1322 = vmatprep.subr.mxu0 0.0
    %1323 = vmatpush2.msra.mxu0 0.0
    %1324 = vmatprep.subr.mxu0 0.0
    %1325 = vmatpush2.msra.mxu0 0.0
    %1326 = vmatprep.subr.mxu0 0.0
    %1327 = vmatpush2.msra.mxu0 0.0
    %1328 = vmatprep.subr.mxu0 0.0
    %1329 = vmatpush2.msra.mxu0 0.0
    %1330 = vmatprep.subr.mxu0 0.0
    %1331 = vmatpush2.msra.mxu0 0.0
    %1332 = vmatprep.subr.mxu0 0.0
    %1333 = vmatpush2.msra.mxu0 0.0
    %1334 = vmatprep.subr.mxu0 0.0
    %1335 = vmatpush2.msra.mxu0 0.0
    %1336 = vmatprep.subr.mxu0 0.0
    %1337 = vmatpush2.msra.mxu0 0.0
    %1338 = vmatprep.subr.mxu0 0.0
    %1339 = vmatpush2.msra.mxu0 0.0
    %1340 = vmatprep.subr.mxu0 0.0
    %1341 = vmatpush2.msra.mxu0 0.0
    %1342 = vmatprep.subr.mxu0 0.0
    %1343 = vmatpush2.msra.mxu0 0.0
    %1344 = vmatprep.subr.mxu0 0.0
    %1345 = vmatpush2.msra.mxu0 0.0
    %1346 = vmatprep.subr.mxu0 0.0
    %1347 = vmatpush2.msra.mxu0 0.0
    %1348 = vmatprep.subr.mxu0 0.0
    %1349 = vmatpush2.msra.mxu0 0.0
    %1350 = vmatprep.subr.mxu0 0.0
    %1351 = vmatpush2.msra.mxu0 0.0
    %1352 = vmatprep.subr.mxu0 0.0
    %1353 = vmatpush2.msra.mxu0 0.0
    %1354 = vmatprep.mubr.f32.mxu0 0.0
    %1355 = vmatmul.mubr.f32.gmra.mxu0 %v1148
    %v1356 = vpop.f32.mrf.mxu0
    %v1357 = vadd.f32 %v446, %v1356
    %v1358 = vpop.f32.mrf.mxu0
    %1359 = vdwg.mxu0
    %v1360 = vadd.f32 %v168, %v1217
    %v1361 = vxor.u32 %v1360, 2147483648
    %v1362 = vmul.f32 %v1361, 1.442695
    %v1363 = vpow.pop %v1362
    %v1364 = vadd.f32 %v1363, 1.0
    %v1365 = vrcp.pop %v1364
    %v1366 = vmul.f32 1.0, %v1365
    %v1367 = vadd.f32 %v286, %v1287
    %v1368 = vxor.u32 %v1367, 2147483648
    %v1369 = vmul.f32 %v1368, 1.442695
    %v1370 = vpow.pop %v1369
    %v1371 = vadd.f32 %v1370, 1.0
    %v1372 = vrcp.pop %v1371
    %v1373 = vmul.f32 1.0, %v1372
    %v1374 = vmul.f32 %v1366, %v1357
    %v1375 = vadd.f32 %v404, %v1374
    %v1376 = vtanh.pop %v1375
    %v1377 = vsub.f32 %v1146, %v1376
    %v1378 = vmul.f32 %v1373, %v1377
    %v1379 = vadd.f32 %v1376, %v1378
    %v1381 = vsel %vm61, %v1379, 0
    %1383 = vmatprep.subr.mxu0 0.0
    %1384 = vmatpush1.msra.mxu0 0.0
    %1385 = vmatprep.subr.mxu0 0.0
    %1386 = vmatpush1.msra.mxu0 0.0
    %1387 = vmatprep.subr.mxu0 0.0
    %1388 = vmatpush1.msra.mxu0 0.0
    %1389 = vmatprep.subr.mxu0 0.0
    %1390 = vmatpush1.msra.mxu0 0.0
    %1391 = vmatprep.subr.mxu0 0.0
    %1392 = vmatpush1.msra.mxu0 0.0
    %1393 = vmatprep.subr.mxu0 0.0
    %1394 = vmatpush1.msra.mxu0 0.0
    %1395 = vmatprep.subr.mxu0 0.0
    %1396 = vmatpush1.msra.mxu0 0.0
    %1397 = vmatprep.subr.mxu0 0.0
    %1398 = vmatpush1.msra.mxu0 0.0
    %1399 = vmatprep.subr.mxu0 0.0
    %1400 = vmatpush1.msra.mxu0 0.0
    %1401 = vmatprep.subr.mxu0 0.0
    %1402 = vmatpush1.msra.mxu0 0.0
    %1403 = vmatprep.subr.mxu0 0.0
    %1404 = vmatpush1.msra.mxu0 0.0
    %1405 = vmatprep.subr.mxu0 0.0
    %1406 = vmatpush1.msra.mxu0 0.0
    %1407 = vmatprep.subr.mxu0 0.0
    %1408 = vmatpush1.msra.mxu0 %v430
    %1409 = vmatprep.subr.mxu0 0.0
    %1410 = vmatpush1.msra.mxu0 %v429
    %1411 = vmatprep.subr.mxu0 0.0
    %1412 = vmatpush1.msra.mxu0 %v428
    %1413 = vmatprep.subr.mxu0 0.0
    %1414 = vmatpush1.msra.mxu0 %v427
    %1415 = vmatprep.subr.mxu0 0.0
    %1416 = vmatpush2.msra.mxu0 0.0
    %1417 = vmatprep.subr.mxu0 0.0
    %1418 = vmatpush2.msra.mxu0 0.0
    %1419 = vmatprep.subr.mxu0 0.0
    %1420 = vmatpush2.msra.mxu0 0.0
    %1421 = vmatprep.subr.mxu0 0.0
    %1422 = vmatpush2.msra.mxu0 0.0
    %1423 = vmatprep.subr.mxu0 0.0
    %1424 = vmatpush2.msra.mxu0 0.0
    %1425 = vmatprep.subr.mxu0 0.0
    %1426 = vmatpush2.msra.mxu0 0.0
    %1427 = vmatprep.subr.mxu0 0.0
    %1428 = vmatpush2.msra.mxu0 0.0
    %1429 = vmatprep.subr.mxu0 0.0
    %1430 = vmatpush2.msra.mxu0 0.0
    %1431 = vmatprep.subr.mxu0 0.0
    %1432 = vmatpush2.msra.mxu0 0.0
    %1433 = vmatprep.subr.mxu0 0.0
    %1434 = vmatpush2.msra.mxu0 0.0
    %1435 = vmatprep.subr.mxu0 0.0
    %1436 = vmatpush2.msra.mxu0 0.0
    %1437 = vmatprep.subr.mxu0 0.0
    %1438 = vmatpush2.msra.mxu0 0.0
    %1439 = vmatprep.subr.mxu0 0.0
    %1440 = vmatpush2.msra.mxu0 0.0
    %1441 = vmatprep.subr.mxu0 0.0
    %1442 = vmatpush2.msra.mxu0 0.0
    %1443 = vmatprep.subr.mxu0 0.0
    %1444 = vmatpush2.msra.mxu0 0.0
    %1445 = vmatprep.subr.mxu0 0.0
    %1446 = vmatpush2.msra.mxu0 0.0
    %1447 = vmatprep.mubr.f32.mxu0 0.0
    %1448 = vmatmul.mubr.f32.gmra.mxu0 %v1381
    %v1449 = vpop.f32.mrf.mxu0
    %v1450 = vadd.f32 0.0, %v1449
    %v1451 = vpop.f32.mrf.mxu0
    %1452 = vdwg.mxu0
    %1453 = vmatprep.subr.mxu0 0.0
    %1454 = vmatpush1.msra.mxu0 0.0
    %1455 = vmatprep.subr.mxu0 0.0
    %1456 = vmatpush1.msra.mxu0 0.0
    %1457 = vmatprep.subr.mxu0 0.0
    %1458 = vmatpush1.msra.mxu0 0.0
    %1459 = vmatprep.subr.mxu0 0.0
    %1460 = vmatpush1.msra.mxu0 0.0
    %1461 = vmatprep.subr.mxu0 0.0
    %1462 = vmatpush1.msra.mxu0 0.0
    %1463 = vmatprep.subr.mxu0 0.0
    %1464 = vmatpush1.msra.mxu0 0.0
    %1465 = vmatprep.subr.mxu0 0.0
    %1466 = vmatpush1.msra.mxu0 0.0
    %1467 = vmatprep.subr.mxu0 0.0
    %1468 = vmatpush1.msra.mxu0 0.0
    %1469 = vmatprep.subr.mxu0 0.0
    %1470 = vmatpush1.msra.mxu0 0.0
    %1471 = vmatprep.subr.mxu0 0.0
    %1472 = vmatpush1.msra.mxu0 0.0
    %1473 = vmatprep.subr.mxu0 0.0
    %1474 = vmatpush1.msra.mxu0 0.0
    %1475 = vmatprep.subr.mxu0 0.0
    %1476 = vmatpush1.msra.mxu0 0.0
    %1477 = vmatprep.subr.mxu0 0.0
    %1478 = vmatpush1.msra.mxu0 %v435
    %1479 = vmatprep.subr.mxu0 0.0
    %1480 = vmatpush1.msra.mxu0 %v434
    %1481 = vmatprep.subr.mxu0 0.0
    %1482 = vmatpush1.msra.mxu0 %v433
    %1483 = vmatprep.subr.mxu0 0.0
    %1484 = vmatpush1.msra.mxu0 %v432
    %1485 = vmatprep.subr.mxu0 0.0
    %1486 = vmatpush2.msra.mxu0 0.0
    %1487 = vmatprep.subr.mxu0 0.0
    %1488 = vmatpush2.msra.mxu0 0.0
    %1489 = vmatprep.subr.mxu0 0.0
    %1490 = vmatpush2.msra.mxu0 0.0
    %1491 = vmatprep.subr.mxu0 0.0
    %1492 = vmatpush2.msra.mxu0 0.0
    %1493 = vmatprep.subr.mxu0 0.0
    %1494 = vmatpush2.msra.mxu0 0.0
    %1495 = vmatprep.subr.mxu0 0.0
    %1496 = vmatpush2.msra.mxu0 0.0
    %1497 = vmatprep.subr.mxu0 0.0
    %1498 = vmatpush2.msra.mxu0 0.0
    %1499 = vmatprep.subr.mxu0 0.0
    %1500 = vmatpush2.msra.mxu0 0.0
    %1501 = vmatprep.subr.mxu0 0.0
    %1502 = vmatpush2.msra.mxu0 0.0
    %1503 = vmatprep.subr.mxu0 0.0
    %1504 = vmatpush2.msra.mxu0 0.0
    %1505 = vmatprep.subr.mxu0 0.0
    %1506 = vmatpush2.msra.mxu0 0.0
    %1507 = vmatprep.subr.mxu0 0.0
    %1508 = vmatpush2.msra.mxu0 0.0
    %1509 = vmatprep.subr.mxu0 0.0
    %1510 = vmatpush2.msra.mxu0 0.0
    %1511 = vmatprep.subr.mxu0 0.0
    %1512 = vmatpush2.msra.mxu0 0.0
    %1513 = vmatprep.subr.mxu0 0.0
    %1514 = vmatpush2.msra.mxu0 0.0
    %1515 = vmatprep.subr.mxu0 0.0
    %1516 = vmatpush2.msra.mxu0 0.0
    %1517 = vmatprep.mubr.f32.mxu0 0.0
    %1518 = vmatmul.mubr.f32.gmra.mxu0 %v1381
    %v1519 = vpop.f32.mrf.mxu0
    %v1520 = vadd.f32 0.0, %v1519
    %v1521 = vpop.f32.mrf.mxu0
    %1522 = vdwg.mxu0
    %1523 = vmatprep.subr.mxu0 0.0
    %1524 = vmatpush1.msra.mxu0 0.0
    %1525 = vmatprep.subr.mxu0 0.0
    %1526 = vmatpush1.msra.mxu0 0.0
    %1527 = vmatprep.subr.mxu0 0.0
    %1528 = vmatpush1.msra.mxu0 0.0
    %1529 = vmatprep.subr.mxu0 0.0
    %1530 = vmatpush1.msra.mxu0 0.0
    %1531 = vmatprep.subr.mxu0 0.0
    %1532 = vmatpush1.msra.mxu0 0.0
    %1533 = vmatprep.subr.mxu0 0.0
    %1534 = vmatpush1.msra.mxu0 0.0
    %1535 = vmatprep.subr.mxu0 0.0
    %1536 = vmatpush1.msra.mxu0 0.0
    %1537 = vmatprep.subr.mxu0 0.0
    %1538 = vmatpush1.msra.mxu0 0.0
    %1539 = vmatprep.subr.mxu0 0.0
    %1540 = vmatpush1.msra.mxu0 0.0
    %1541 = vmatprep.subr.mxu0 0.0
    %1542 = vmatpush1.msra.mxu0 0.0
    %1543 = vmatprep.subr.mxu0 0.0
    %1544 = vmatpush1.msra.mxu0 0.0
    %1545 = vmatprep.subr.mxu0 0.0
    %1546 = vmatpush1.msra.mxu0 0.0
    %1547 = vmatprep.subr.mxu0 0.0
    %1548 = vmatpush1.msra.mxu0 %v440
    %1549 = vmatprep.subr.mxu0 0.0
    %1550 = vmatpush1.msra.mxu0 %v439
    %1551 = vmatprep.subr.mxu0 0.0
    %1552 = vmatpush1.msra.mxu0 %v438
    %1553 = vmatprep.subr.mxu0 0.0
    %1554 = vmatpush1.msra.mxu0 %v437
    %1555 = vmatprep.subr.mxu0 0.0
    %1556 = vmatpush2.msra.mxu0 0.0
    %1557 = vmatprep.subr.mxu0 0.0
    %1558 = vmatpush2.msra.mxu0 0.0
    %1559 = vmatprep.subr.mxu0 0.0
    %1560 = vmatpush2.msra.mxu0 0.0
    %1561 = vmatprep.subr.mxu0 0.0
    %1562 = vmatpush2.msra.mxu0 0.0
    %1563 = vmatprep.subr.mxu0 0.0
    %1564 = vmatpush2.msra.mxu0 0.0
    %1565 = vmatprep.subr.mxu0 0.0
    %1566 = vmatpush2.msra.mxu0 0.0
    %1567 = vmatprep.subr.mxu0 0.0
    %1568 = vmatpush2.msra.mxu0 0.0
    %1569 = vmatprep.subr.mxu0 0.0
    %1570 = vmatpush2.msra.mxu0 0.0
    %1571 = vmatprep.subr.mxu0 0.0
    %1572 = vmatpush2.msra.mxu0 0.0
    %1573 = vmatprep.subr.mxu0 0.0
    %1574 = vmatpush2.msra.mxu0 0.0
    %1575 = vmatprep.subr.mxu0 0.0
    %1576 = vmatpush2.msra.mxu0 0.0
    %1577 = vmatprep.subr.mxu0 0.0
    %1578 = vmatpush2.msra.mxu0 0.0
    %1579 = vmatprep.subr.mxu0 0.0
    %1580 = vmatpush2.msra.mxu0 0.0
    %1581 = vmatprep.subr.mxu0 0.0
    %1582 = vmatpush2.msra.mxu0 0.0
    %1583 = vmatprep.subr.mxu0 0.0
    %1584 = vmatpush2.msra.mxu0 0.0
    %1585 = vmatprep.subr.mxu0 0.0
    %1586 = vmatpush2.msra.mxu0 0.0
    %1587 = vmatprep.mubr.f32.mxu0 0.0
    %1588 = vmatmul.mubr.f32.gmra.mxu0 %v1381
    %v1589 = vpop.f32.mrf.mxu0
    %v1590 = vadd.f32 %v446, %v1589
    %v1591 = vpop.f32.mrf.mxu0
    %1592 = vdwg.mxu0
    %v1593 = vadd.f32 %v173, %v1450
    %v1594 = vxor.u32 %v1593, 2147483648
    %v1595 = vmul.f32 %v1594, 1.442695
    %v1596 = vpow.pop %v1595
    %v1597 = vadd.f32 %v1596, 1.0
    %v1598 = vrcp.pop %v1597
    %v1599 = vmul.f32 1.0, %v1598
    %v1600 = vadd.f32 %v291, %v1520
    %v1601 = vxor.u32 %v1600, 2147483648
    %v1602 = vmul.f32 %v1601, 1.442695
    %v1603 = vpow.pop %v1602
    %v1604 = vadd.f32 %v1603, 1.0
    %v1605 = vrcp.pop %v1604
    %v1606 = vmul.f32 1.0, %v1605
    %v1607 = vmul.f32 %v1599, %v1590
    %v1608 = vadd.f32 %v409, %v1607
    %v1609 = vtanh.pop %v1608
    %v1610 = vsub.f32 %v1379, %v1609
    %v1611 = vmul.f32 %v1606, %v1610
    %v1612 = vadd.f32 %v1609, %v1611
    %v1614 = vsel %vm61, %v1612, 0
    %1616 = vmatprep.subr.mxu0 0.0
    %1617 = vmatpush1.msra.mxu0 0.0
    %1618 = vmatprep.subr.mxu0 0.0
    %1619 = vmatpush1.msra.mxu0 0.0
    %1620 = vmatprep.subr.mxu0 0.0
    %1621 = vmatpush1.msra.mxu0 0.0
    %1622 = vmatprep.subr.mxu0 0.0
    %1623 = vmatpush1.msra.mxu0 0.0
    %1624 = vmatprep.subr.mxu0 0.0
    %1625 = vmatpush1.msra.mxu0 0.0
    %1626 = vmatprep.subr.mxu0 0.0
    %1627 = vmatpush1.msra.mxu0 0.0
    %1628 = vmatprep.subr.mxu0 0.0
    %1629 = vmatpush1.msra.mxu0 0.0
    %1630 = vmatprep.subr.mxu0 0.0
    %1631 = vmatpush1.msra.mxu0 0.0
    %1632 = vmatprep.subr.mxu0 0.0
    %1633 = vmatpush1.msra.mxu0 0.0
    %1634 = vmatprep.subr.mxu0 0.0
    %1635 = vmatpush1.msra.mxu0 0.0
    %1636 = vmatprep.subr.mxu0 0.0
    %1637 = vmatpush1.msra.mxu0 0.0
    %1638 = vmatprep.subr.mxu0 0.0
    %1639 = vmatpush1.msra.mxu0 0.0
    %1640 = vmatprep.subr.mxu0 0.0
    %1641 = vmatpush1.msra.mxu0 %v430
    %1642 = vmatprep.subr.mxu0 0.0
    %1643 = vmatpush1.msra.mxu0 %v429
    %1644 = vmatprep.subr.mxu0 0.0
    %1645 = vmatpush1.msra.mxu0 %v428
    %1646 = vmatprep.subr.mxu0 0.0
    %1647 = vmatpush1.msra.mxu0 %v427
    %1648 = vmatprep.subr.mxu0 0.0
    %1649 = vmatpush2.msra.mxu0 0.0
    %1650 = vmatprep.subr.mxu0 0.0
    %1651 = vmatpush2.msra.mxu0 0.0
    %1652 = vmatprep.subr.mxu0 0.0
    %1653 = vmatpush2.msra.mxu0 0.0
    %1654 = vmatprep.subr.mxu0 0.0
    %1655 = vmatpush2.msra.mxu0 0.0
    %1656 = vmatprep.subr.mxu0 0.0
    %1657 = vmatpush2.msra.mxu0 0.0
    %1658 = vmatprep.subr.mxu0 0.0
    %1659 = vmatpush2.msra.mxu0 0.0
    %1660 = vmatprep.subr.mxu0 0.0
    %1661 = vmatpush2.msra.mxu0 0.0
    %1662 = vmatprep.subr.mxu0 0.0
    %1663 = vmatpush2.msra.mxu0 0.0
    %1664 = vmatprep.subr.mxu0 0.0
    %1665 = vmatpush2.msra.mxu0 0.0
    %1666 = vmatprep.subr.mxu0 0.0
    %1667 = vmatpush2.msra.mxu0 0.0
    %1668 = vmatprep.subr.mxu0 0.0
    %1669 = vmatpush2.msra.mxu0 0.0
    %1670 = vmatprep.subr.mxu0 0.0
    %1671 = vmatpush2.msra.mxu0 0.0
    %1672 = vmatprep.subr.mxu0 0.0
    %1673 = vmatpush2.msra.mxu0 0.0
    %1674 = vmatprep.subr.mxu0 0.0
    %1675 = vmatpush2.msra.mxu0 0.0
    %1676 = vmatprep.subr.mxu0 0.0
    %1677 = vmatpush2.msra.mxu0 0.0
    %1678 = vmatprep.subr.mxu0 0.0
    %1679 = vmatpush2.msra.mxu0 0.0
    %1680 = vmatprep.mubr.f32.mxu0 0.0
    %1681 = vmatmul.mubr.f32.gmra.mxu0 %v1614
    %v1682 = vpop.f32.mrf.mxu0
    %v1683 = vadd.f32 0.0, %v1682
    %v1684 = vpop.f32.mrf.mxu0
    %1685 = vdwg.mxu0
    %1686 = vmatprep.subr.mxu0 0.0
    %1687 = vmatpush1.msra.mxu0 0.0
    %1688 = vmatprep.subr.mxu0 0.0
    %1689 = vmatpush1.msra.mxu0 0.0
    %1690 = vmatprep.subr.mxu0 0.0
    %1691 = vmatpush1.msra.mxu0 0.0
    %1692 = vmatprep.subr.mxu0 0.0
    %1693 = vmatpush1.msra.mxu0 0.0
    %1694 = vmatprep.subr.mxu0 0.0
    %1695 = vmatpush1.msra.mxu0 0.0
    %1696 = vmatprep.subr.mxu0 0.0
    %1697 = vmatpush1.msra.mxu0 0.0
    %1698 = vmatprep.subr.mxu0 0.0
    %1699 = vmatpush1.msra.mxu0 0.0
    %1700 = vmatprep.subr.mxu0 0.0
    %1701 = vmatpush1.msra.mxu0 0.0
    %1702 = vmatprep.subr.mxu0 0.0
    %1703 = vmatpush1.msra.mxu0 0.0
    %1704 = vmatprep.subr.mxu0 0.0
    %1705 = vmatpush1.msra.mxu0 0.0
    %1706 = vmatprep.subr.mxu0 0.0
    %1707 = vmatpush1.msra.mxu0 0.0
    %1708 = vmatprep.subr.mxu0 0.0
    %1709 = vmatpush1.msra.mxu0 0.0
    %1710 = vmatprep.subr.mxu0 0.0
    %1711 = vmatpush1.msra.mxu0 %v435
    %1712 = vmatprep.subr.mxu0 0.0
    %1713 = vmatpush1.msra.mxu0 %v434
    %1714 = vmatprep.subr.mxu0 0.0
    %1715 = vmatpush1.msra.mxu0 %v433
    %1716 = vmatprep.subr.mxu0 0.0
    %1717 = vmatpush1.msra.mxu0 %v432
    %1718 = vmatprep.subr.mxu0 0.0
    %1719 = vmatpush2.msra.mxu0 0.0
    %1720 = vmatprep.subr.mxu0 0.0
    %1721 = vmatpush2.msra.mxu0 0.0
    %1722 = vmatprep.subr.mxu0 0.0
    %1723 = vmatpush2.msra.mxu0 0.0
    %1724 = vmatprep.subr.mxu0 0.0
    %1725 = vmatpush2.msra.mxu0 0.0
    %1726 = vmatprep.subr.mxu0 0.0
    %1727 = vmatpush2.msra.mxu0 0.0
    %1728 = vmatprep.subr.mxu0 0.0
    %1729 = vmatpush2.msra.mxu0 0.0
    %1730 = vmatprep.subr.mxu0 0.0
    %1731 = vmatpush2.msra.mxu0 0.0
    %1732 = vmatprep.subr.mxu0 0.0
    %1733 = vmatpush2.msra.mxu0 0.0
    %1734 = vmatprep.subr.mxu0 0.0
    %1735 = vmatpush2.msra.mxu0 0.0
    %1736 = vmatprep.subr.mxu0 0.0
    %1737 = vmatpush2.msra.mxu0 0.0
    %1738 = vmatprep.subr.mxu0 0.0
    %1739 = vmatpush2.msra.mxu0 0.0
    %1740 = vmatprep.subr.mxu0 0.0
    %1741 = vmatpush2.msra.mxu0 0.0
    %1742 = vmatprep.subr.mxu0 0.0
    %1743 = vmatpush2.msra.mxu0 0.0
    %1744 = vmatprep.subr.mxu0 0.0
    %1745 = vmatpush2.msra.mxu0 0.0
    %1746 = vmatprep.subr.mxu0 0.0
    %1747 = vmatpush2.msra.mxu0 0.0
    %1748 = vmatprep.subr.mxu0 0.0
    %1749 = vmatpush2.msra.mxu0 0.0
    %1750 = vmatprep.mubr.f32.mxu0 0.0
    %1751 = vmatmul.mubr.f32.gmra.mxu0 %v1614
    %v1752 = vpop.f32.mrf.mxu0
    %v1753 = vadd.f32 0.0, %v1752
    %v1754 = vpop.f32.mrf.mxu0
    %1755 = vdwg.mxu0
    %1756 = vmatprep.subr.mxu0 0.0
    %1757 = vmatpush1.msra.mxu0 0.0
    %1758 = vmatprep.subr.mxu0 0.0
    %1759 = vmatpush1.msra.mxu0 0.0
    %1760 = vmatprep.subr.mxu0 0.0
    %1761 = vmatpush1.msra.mxu0 0.0
    %1762 = vmatprep.subr.mxu0 0.0
    %1763 = vmatpush1.msra.mxu0 0.0
    %1764 = vmatprep.subr.mxu0 0.0
    %1765 = vmatpush1.msra.mxu0 0.0
    %1766 = vmatprep.subr.mxu0 0.0
    %1767 = vmatpush1.msra.mxu0 0.0
    %1768 = vmatprep.subr.mxu0 0.0
    %1769 = vmatpush1.msra.mxu0 0.0
    %1770 = vmatprep.subr.mxu0 0.0
    %1771 = vmatpush1.msra.mxu0 0.0
    %1772 = vmatprep.subr.mxu0 0.0
    %1773 = vmatpush1.msra.mxu0 0.0
    %1774 = vmatprep.subr.mxu0 0.0
    %1775 = vmatpush1.msra.mxu0 0.0
    %1776 = vmatprep.subr.mxu0 0.0
    %1777 = vmatpush1.msra.mxu0 0.0
    %1778 = vmatprep.subr.mxu0 0.0
    %1779 = vmatpush1.msra.mxu0 0.0
    %1780 = vmatprep.subr.mxu0 0.0
    %1781 = vmatpush1.msra.mxu0 %v440
    %1782 = vmatprep.subr.mxu0 0.0
    %1783 = vmatpush1.msra.mxu0 %v439
    %1784 = vmatprep.subr.mxu0 0.0
    %1785 = vmatpush1.msra.mxu0 %v438
    %1786 = vmatprep.subr.mxu0 0.0
    %1787 = vmatpush1.msra.mxu0 %v437
    %1788 = vmatprep.subr.mxu0 0.0
    %1789 = vmatpush2.msra.mxu0 0.0
    %1790 = vmatprep.subr.mxu0 0.0
    %1791 = vmatpush2.msra.mxu0 0.0
    %1792 = vmatprep.subr.mxu0 0.0
    %1793 = vmatpush2.msra.mxu0 0.0
    %1794 = vmatprep.subr.mxu0 0.0
    %1795 = vmatpush2.msra.mxu0 0.0
    %1796 = vmatprep.subr.mxu0 0.0
    %1797 = vmatpush2.msra.mxu0 0.0
    %1798 = vmatprep.subr.mxu0 0.0
    %1799 = vmatpush2.msra.mxu0 0.0
    %1800 = vmatprep.subr.mxu0 0.0
    %1801 = vmatpush2.msra.mxu0 0.0
    %1802 = vmatprep.subr.mxu0 0.0
    %1803 = vmatpush2.msra.mxu0 0.0
    %1804 = vmatprep.subr.mxu0 0.0
    %1805 = vmatpush2.msra.mxu0 0.0
    %1806 = vmatprep.subr.mxu0 0.0
    %1807 = vmatpush2.msra.mxu0 0.0
    %1808 = vmatprep.subr.mxu0 0.0
    %1809 = vmatpush2.msra.mxu0 0.0
    %1810 = vmatprep.subr.mxu0 0.0
    %1811 = vmatpush2.msra.mxu0 0.0
    %1812 = vmatprep.subr.mxu0 0.0
    %1813 = vmatpush2.msra.mxu0 0.0
    %1814 = vmatprep.subr.mxu0 0.0
    %1815 = vmatpush2.msra.mxu0 0.0
    %1816 = vmatprep.subr.mxu0 0.0
    %1817 = vmatpush2.msra.mxu0 0.0
    %1818 = vmatprep.subr.mxu0 0.0
    %1819 = vmatpush2.msra.mxu0 0.0
    %1820 = vmatprep.mubr.f32.mxu0 0.0
    %1821 = vmatmul.mubr.f32.gmra.mxu0 %v1614
    %v1822 = vpop.f32.mrf.mxu0
    %v1823 = vadd.f32 %v446, %v1822
    %v1824 = vpop.f32.mrf.mxu0
    %1825 = vdwg.mxu0
    %v1826 = vadd.f32 %v178, %v1683
    %v1827 = vxor.u32 %v1826, 2147483648
    %v1828 = vmul.f32 %v1827, 1.442695
    %v1829 = vpow.pop %v1828
    %v1830 = vadd.f32 %v1829, 1.0
    %v1831 = vrcp.pop %v1830
    %v1832 = vmul.f32 1.0, %v1831
    %v1833 = vadd.f32 %v296, %v1753
    %v1834 = vxor.u32 %v1833, 2147483648
    %v1835 = vmul.f32 %v1834, 1.442695
    %v1836 = vpow.pop %v1835
    %v1837 = vadd.f32 %v1836, 1.0
    %v1838 = vrcp.pop %v1837
    %v1839 = vmul.f32 1.0, %v1838
    %v1840 = vmul.f32 %v1832, %v1823
    %v1841 = vadd.f32 %v414, %v1840
    %v1842 = vtanh.pop %v1841
    %v1843 = vsub.f32 %v1612, %v1842
    %v1844 = vmul.f32 %v1839, %v1843
    %v1845 = vadd.f32 %v1842, %v1844
    %v1847 = vsel %vm61, %v1845, 0
    %1849 = vmatprep.subr.mxu0 0.0
    %1850 = vmatpush1.msra.mxu0 0.0
    %1851 = vmatprep.subr.mxu0 0.0
    %1852 = vmatpush1.msra.mxu0 0.0
    %1853 = vmatprep.subr.mxu0 0.0
    %1854 = vmatpush1.msra.mxu0 0.0
    %1855 = vmatprep.subr.mxu0 0.0
    %1856 = vmatpush1.msra.mxu0 0.0
    %1857 = vmatprep.subr.mxu0 0.0
    %1858 = vmatpush1.msra.mxu0 0.0
    %1859 = vmatprep.subr.mxu0 0.0
    %1860 = vmatpush1.msra.mxu0 0.0
    %1861 = vmatprep.subr.mxu0 0.0
    %1862 = vmatpush1.msra.mxu0 0.0
    %1863 = vmatprep.subr.mxu0 0.0
    %1864 = vmatpush1.msra.mxu0 0.0
    %1865 = vmatprep.subr.mxu0 0.0
    %1866 = vmatpush1.msra.mxu0 0.0
    %1867 = vmatprep.subr.mxu0 0.0
    %1868 = vmatpush1.msra.mxu0 0.0
    %1869 = vmatprep.subr.mxu0 0.0
    %1870 = vmatpush1.msra.mxu0 0.0
    %1871 = vmatprep.subr.mxu0 0.0
    %1872 = vmatpush1.msra.mxu0 0.0
    %1873 = vmatprep.subr.mxu0 0.0
    %1874 = vmatpush1.msra.mxu0 %v430
    %1875 = vmatprep.subr.mxu0 0.0
    %1876 = vmatpush1.msra.mxu0 %v429
    %1877 = vmatprep.subr.mxu0 0.0
    %1878 = vmatpush1.msra.mxu0 %v428
    %1879 = vmatprep.subr.mxu0 0.0
    %1880 = vmatpush1.msra.mxu0 %v427
    %1881 = vmatprep.subr.mxu0 0.0
    %1882 = vmatpush2.msra.mxu0 0.0
    %1883 = vmatprep.subr.mxu0 0.0
    %1884 = vmatpush2.msra.mxu0 0.0
    %1885 = vmatprep.subr.mxu0 0.0
    %1886 = vmatpush2.msra.mxu0 0.0
    %1887 = vmatprep.subr.mxu0 0.0
    %1888 = vmatpush2.msra.mxu0 0.0
    %1889 = vmatprep.subr.mxu0 0.0
    %1890 = vmatpush2.msra.mxu0 0.0
    %1891 = vmatprep.subr.mxu0 0.0
    %1892 = vmatpush2.msra.mxu0 0.0
    %1893 = vmatprep.subr.mxu0 0.0
    %1894 = vmatpush2.msra.mxu0 0.0
    %1895 = vmatprep.subr.mxu0 0.0
    %1896 = vmatpush2.msra.mxu0 0.0
    %1897 = vmatprep.subr.mxu0 0.0
    %1898 = vmatpush2.msra.mxu0 0.0
    %1899 = vmatprep.subr.mxu0 0.0
    %1900 = vmatpush2.msra.mxu0 0.0
    %1901 = vmatprep.subr.mxu0 0.0
    %1902 = vmatpush2.msra.mxu0 0.0
    %1903 = vmatprep.subr.mxu0 0.0
    %1904 = vmatpush2.msra.mxu0 0.0
    %1905 = vmatprep.subr.mxu0 0.0
    %1906 = vmatpush2.msra.mxu0 0.0
    %1907 = vmatprep.subr.mxu0 0.0
    %1908 = vmatpush2.msra.mxu0 0.0
    %1909 = vmatprep.subr.mxu0 0.0
    %1910 = vmatpush2.msra.mxu0 0.0
    %1911 = vmatprep.subr.mxu0 0.0
    %1912 = vmatpush2.msra.mxu0 0.0
    %1913 = vmatprep.mubr.f32.mxu0 0.0
    %1914 = vmatmul.mubr.f32.gmra.mxu0 %v1847
    %v1915 = vpop.f32.mrf.mxu0
    %v1916 = vadd.f32 0.0, %v1915
    %v1917 = vpop.f32.mrf.mxu0
    %1918 = vdwg.mxu0
    %1919 = vmatprep.subr.mxu0 0.0
    %1920 = vmatpush1.msra.mxu0 0.0
    %1921 = vmatprep.subr.mxu0 0.0
    %1922 = vmatpush1.msra.mxu0 0.0
    %1923 = vmatprep.subr.mxu0 0.0
    %1924 = vmatpush1.msra.mxu0 0.0
    %1925 = vmatprep.subr.mxu0 0.0
    %1926 = vmatpush1.msra.mxu0 0.0
    %1927 = vmatprep.subr.mxu0 0.0
    %1928 = vmatpush1.msra.mxu0 0.0
    %1929 = vmatprep.subr.mxu0 0.0
    %1930 = vmatpush1.msra.mxu0 0.0
    %1931 = vmatprep.subr.mxu0 0.0
    %1932 = vmatpush1.msra.mxu0 0.0
    %1933 = vmatprep.subr.mxu0 0.0
    %1934 = vmatpush1.msra.mxu0 0.0
    %1935 = vmatprep.subr.mxu0 0.0
    %1936 = vmatpush1.msra.mxu0 0.0
    %1937 = vmatprep.subr.mxu0 0.0
    %1938 = vmatpush1.msra.mxu0 0.0
    %1939 = vmatprep.subr.mxu0 0.0
    %1940 = vmatpush1.msra.mxu0 0.0
    %1941 = vmatprep.subr.mxu0 0.0
    %1942 = vmatpush1.msra.mxu0 0.0
    %1943 = vmatprep.subr.mxu0 0.0
    %1944 = vmatpush1.msra.mxu0 %v435
    %1945 = vmatprep.subr.mxu0 0.0
    %1946 = vmatpush1.msra.mxu0 %v434
    %1947 = vmatprep.subr.mxu0 0.0
    %1948 = vmatpush1.msra.mxu0 %v433
    %1949 = vmatprep.subr.mxu0 0.0
    %1950 = vmatpush1.msra.mxu0 %v432
    %1951 = vmatprep.subr.mxu0 0.0
    %1952 = vmatpush2.msra.mxu0 0.0
    %1953 = vmatprep.subr.mxu0 0.0
    %1954 = vmatpush2.msra.mxu0 0.0
    %1955 = vmatprep.subr.mxu0 0.0
    %1956 = vmatpush2.msra.mxu0 0.0
    %1957 = vmatprep.subr.mxu0 0.0
    %1958 = vmatpush2.msra.mxu0 0.0
    %1959 = vmatprep.subr.mxu0 0.0
    %1960 = vmatpush2.msra.mxu0 0.0
    %1961 = vmatprep.subr.mxu0 0.0
    %1962 = vmatpush2.msra.mxu0 0.0
    %1963 = vmatprep.subr.mxu0 0.0
    %1964 = vmatpush2.msra.mxu0 0.0
    %1965 = vmatprep.subr.mxu0 0.0
    %1966 = vmatpush2.msra.mxu0 0.0
    %1967 = vmatprep.subr.mxu0 0.0
    %1968 = vmatpush2.msra.mxu0 0.0
    %1969 = vmatprep.subr.mxu0 0.0
    %1970 = vmatpush2.msra.mxu0 0.0
    %1971 = vmatprep.subr.mxu0 0.0
    %1972 = vmatpush2.msra.mxu0 0.0
    %1973 = vmatprep.subr.mxu0 0.0
    %1974 = vmatpush2.msra.mxu0 0.0
    %1975 = vmatprep.subr.mxu0 0.0
    %1976 = vmatpush2.msra.mxu0 0.0
    %1977 = vmatprep.subr.mxu0 0.0
    %1978 = vmatpush2.msra.mxu0 0.0
    %1979 = vmatprep.subr.mxu0 0.0
    %1980 = vmatpush2.msra.mxu0 0.0
    %1981 = vmatprep.subr.mxu0 0.0
    %1982 = vmatpush2.msra.mxu0 0.0
    %1983 = vmatprep.mubr.f32.mxu0 0.0
    %1984 = vmatmul.mubr.f32.gmra.mxu0 %v1847
    %v1985 = vpop.f32.mrf.mxu0
    %v1986 = vadd.f32 0.0, %v1985
    %v1987 = vpop.f32.mrf.mxu0
    %1988 = vdwg.mxu0
    %1989 = vmatprep.subr.mxu0 0.0
    %1990 = vmatpush1.msra.mxu0 0.0
    %1991 = vmatprep.subr.mxu0 0.0
    %1992 = vmatpush1.msra.mxu0 0.0
    %1993 = vmatprep.subr.mxu0 0.0
    %1994 = vmatpush1.msra.mxu0 0.0
    %1995 = vmatprep.subr.mxu0 0.0
    %1996 = vmatpush1.msra.mxu0 0.0
    %1997 = vmatprep.subr.mxu0 0.0
    %1998 = vmatpush1.msra.mxu0 0.0
    %1999 = vmatprep.subr.mxu0 0.0
    %2000 = vmatpush1.msra.mxu0 0.0
    %2001 = vmatprep.subr.mxu0 0.0
    %2002 = vmatpush1.msra.mxu0 0.0
    %2003 = vmatprep.subr.mxu0 0.0
    %2004 = vmatpush1.msra.mxu0 0.0
    %2005 = vmatprep.subr.mxu0 0.0
    %2006 = vmatpush1.msra.mxu0 0.0
    %2007 = vmatprep.subr.mxu0 0.0
    %2008 = vmatpush1.msra.mxu0 0.0
    %2009 = vmatprep.subr.mxu0 0.0
    %2010 = vmatpush1.msra.mxu0 0.0
    %2011 = vmatprep.subr.mxu0 0.0
    %2012 = vmatpush1.msra.mxu0 0.0
    %2013 = vmatprep.subr.mxu0 0.0
    %2014 = vmatpush1.msra.mxu0 %v440
    %2015 = vmatprep.subr.mxu0 0.0
    %2016 = vmatpush1.msra.mxu0 %v439
    %2017 = vmatprep.subr.mxu0 0.0
    %2018 = vmatpush1.msra.mxu0 %v438
    %2019 = vmatprep.subr.mxu0 0.0
    %2020 = vmatpush1.msra.mxu0 %v437
    %2021 = vmatprep.subr.mxu0 0.0
    %2022 = vmatpush2.msra.mxu0 0.0
    %2023 = vmatprep.subr.mxu0 0.0
    %2024 = vmatpush2.msra.mxu0 0.0
    %2025 = vmatprep.subr.mxu0 0.0
    %2026 = vmatpush2.msra.mxu0 0.0
    %2027 = vmatprep.subr.mxu0 0.0
    %2028 = vmatpush2.msra.mxu0 0.0
    %2029 = vmatprep.subr.mxu0 0.0
    %2030 = vmatpush2.msra.mxu0 0.0
    %2031 = vmatprep.subr.mxu0 0.0
    %2032 = vmatpush2.msra.mxu0 0.0
    %2033 = vmatprep.subr.mxu0 0.0
    %2034 = vmatpush2.msra.mxu0 0.0
    %2035 = vmatprep.subr.mxu0 0.0
    %2036 = vmatpush2.msra.mxu0 0.0
    %2037 = vmatprep.subr.mxu0 0.0
    %2038 = vmatpush2.msra.mxu0 0.0
    %2039 = vmatprep.subr.mxu0 0.0
    %2040 = vmatpush2.msra.mxu0 0.0
    %2041 = vmatprep.subr.mxu0 0.0
    %2042 = vmatpush2.msra.mxu0 0.0
    %2043 = vmatprep.subr.mxu0 0.0
    %2044 = vmatpush2.msra.mxu0 0.0
    %2045 = vmatprep.subr.mxu0 0.0
    %2046 = vmatpush2.msra.mxu0 0.0
    %2047 = vmatprep.subr.mxu0 0.0
    %2048 = vmatpush2.msra.mxu0 0.0
    %2049 = vmatprep.subr.mxu0 0.0
    %2050 = vmatpush2.msra.mxu0 0.0
    %2051 = vmatprep.subr.mxu0 0.0
    %2052 = vmatpush2.msra.mxu0 0.0
    %2053 = vmatprep.mubr.f32.mxu0 0.0
    %2054 = vmatmul.mubr.f32.gmra.mxu0 %v1847
    %v2055 = vpop.f32.mrf.mxu0
    %v2056 = vadd.f32 %v446, %v2055
    %v2057 = vpop.f32.mrf.mxu0
    %2058 = vdwg.mxu0
    %v2059 = vadd.f32 %v183, %v1916
    %v2060 = vxor.u32 %v2059, 2147483648
    %v2061 = vmul.f32 %v2060, 1.442695
    %v2062 = vpow.pop %v2061
    %v2063 = vadd.f32 %v2062, 1.0
    %v2064 = vrcp.pop %v2063
    %v2065 = vmul.f32 1.0, %v2064
    %v2066 = vadd.f32 %v301, %v1986
    %v2067 = vxor.u32 %v2066, 2147483648
    %v2068 = vmul.f32 %v2067, 1.442695
    %v2069 = vpow.pop %v2068
    %v2070 = vadd.f32 %v2069, 1.0
    %v2071 = vrcp.pop %v2070
    %v2072 = vmul.f32 1.0, %v2071
    %v2073 = vmul.f32 %v2065, %v2056
    %v2074 = vadd.f32 %v419, %v2073
    %v2075 = vtanh.pop %v2074
    %v2076 = vsub.f32 %v1845, %v2075
    %v2077 = vmul.f32 %v2072, %v2076
    %v2078 = vadd.f32 %v2075, %v2077
    %v2080 = vsel %vm61, %v2078, 0
    %2082 = vmatprep.subr.mxu0 0.0
    %2083 = vmatpush1.msra.mxu0 0.0
    %2084 = vmatprep.subr.mxu0 0.0
    %2085 = vmatpush1.msra.mxu0 0.0
    %2086 = vmatprep.subr.mxu0 0.0
    %2087 = vmatpush1.msra.mxu0 0.0
    %2088 = vmatprep.subr.mxu0 0.0
    %2089 = vmatpush1.msra.mxu0 0.0
    %2090 = vmatprep.subr.mxu0 0.0
    %2091 = vmatpush1.msra.mxu0 0.0
    %2092 = vmatprep.subr.mxu0 0.0
    %2093 = vmatpush1.msra.mxu0 0.0
    %2094 = vmatprep.subr.mxu0 0.0
    %2095 = vmatpush1.msra.mxu0 0.0
    %2096 = vmatprep.subr.mxu0 0.0
    %2097 = vmatpush1.msra.mxu0 0.0
    %2098 = vmatprep.subr.mxu0 0.0
    %2099 = vmatpush1.msra.mxu0 0.0
    %2100 = vmatprep.subr.mxu0 0.0
    %2101 = vmatpush1.msra.mxu0 0.0
    %2102 = vmatprep.subr.mxu0 0.0
    %2103 = vmatpush1.msra.mxu0 0.0
    %2104 = vmatprep.subr.mxu0 0.0
    %2105 = vmatpush1.msra.mxu0 0.0
    %2106 = vmatprep.subr.mxu0 0.0
    %2107 = vmatpush1.msra.mxu0 %v430
    %2108 = vmatprep.subr.mxu0 0.0
    %2109 = vmatpush1.msra.mxu0 %v429
    %2110 = vmatprep.subr.mxu0 0.0
    %2111 = vmatpush1.msra.mxu0 %v428
    %2112 = vmatprep.subr.mxu0 0.0
    %2113 = vmatpush1.msra.mxu0 %v427
    %2114 = vmatprep.subr.mxu0 0.0
    %2115 = vmatpush2.msra.mxu0 0.0
    %2116 = vmatprep.subr.mxu0 0.0
    %2117 = vmatpush2.msra.mxu0 0.0
    %2118 = vmatprep.subr.mxu0 0.0
    %2119 = vmatpush2.msra.mxu0 0.0
    %2120 = vmatprep.subr.mxu0 0.0
    %2121 = vmatpush2.msra.mxu0 0.0
    %2122 = vmatprep.subr.mxu0 0.0
    %2123 = vmatpush2.msra.mxu0 0.0
    %2124 = vmatprep.subr.mxu0 0.0
    %2125 = vmatpush2.msra.mxu0 0.0
    %2126 = vmatprep.subr.mxu0 0.0
    %2127 = vmatpush2.msra.mxu0 0.0
    %2128 = vmatprep.subr.mxu0 0.0
    %2129 = vmatpush2.msra.mxu0 0.0
    %2130 = vmatprep.subr.mxu0 0.0
    %2131 = vmatpush2.msra.mxu0 0.0
    %2132 = vmatprep.subr.mxu0 0.0
    %2133 = vmatpush2.msra.mxu0 0.0
    %2134 = vmatprep.subr.mxu0 0.0
    %2135 = vmatpush2.msra.mxu0 0.0
    %2136 = vmatprep.subr.mxu0 0.0
    %2137 = vmatpush2.msra.mxu0 0.0
    %2138 = vmatprep.subr.mxu0 0.0
    %2139 = vmatpush2.msra.mxu0 0.0
    %2140 = vmatprep.subr.mxu0 0.0
    %2141 = vmatpush2.msra.mxu0 0.0
    %2142 = vmatprep.subr.mxu0 0.0
    %2143 = vmatpush2.msra.mxu0 0.0
    %2144 = vmatprep.subr.mxu0 0.0
    %2145 = vmatpush2.msra.mxu0 0.0
    %2146 = vmatprep.mubr.f32.mxu0 0.0
    %2147 = vmatmul.mubr.f32.gmra.mxu0 %v2080
    %v2148 = vpop.f32.mrf.mxu0
    %v2149 = vadd.f32 0.0, %v2148
    %v2150 = vpop.f32.mrf.mxu0
    %2151 = vdwg.mxu0
    %2152 = vmatprep.subr.mxu0 0.0
    %2153 = vmatpush1.msra.mxu0 0.0
    %2154 = vmatprep.subr.mxu0 0.0
    %2155 = vmatpush1.msra.mxu0 0.0
    %2156 = vmatprep.subr.mxu0 0.0
    %2157 = vmatpush1.msra.mxu0 0.0
    %2158 = vmatprep.subr.mxu0 0.0
    %2159 = vmatpush1.msra.mxu0 0.0
    %2160 = vmatprep.subr.mxu0 0.0
    %2161 = vmatpush1.msra.mxu0 0.0
    %2162 = vmatprep.subr.mxu0 0.0
    %2163 = vmatpush1.msra.mxu0 0.0
    %2164 = vmatprep.subr.mxu0 0.0
    %2165 = vmatpush1.msra.mxu0 0.0
    %2166 = vmatprep.subr.mxu0 0.0
    %2167 = vmatpush1.msra.mxu0 0.0
    %2168 = vmatprep.subr.mxu0 0.0
    %2169 = vmatpush1.msra.mxu0 0.0
    %2170 = vmatprep.subr.mxu0 0.0
    %2171 = vmatpush1.msra.mxu0 0.0
    %2172 = vmatprep.subr.mxu0 0.0
    %2173 = vmatpush1.msra.mxu0 0.0
    %2174 = vmatprep.subr.mxu0 0.0
    %2175 = vmatpush1.msra.mxu0 0.0
    %2176 = vmatprep.subr.mxu0 0.0
    %2177 = vmatpush1.msra.mxu0 %v435
    %2178 = vmatprep.subr.mxu0 0.0
    %2179 = vmatpush1.msra.mxu0 %v434
    %2180 = vmatprep.subr.mxu0 0.0
    %2181 = vmatpush1.msra.mxu0 %v433
    %2182 = vmatprep.subr.mxu0 0.0
    %2183 = vmatpush1.msra.mxu0 %v432
    %2184 = vmatprep.subr.mxu0 0.0
    %2185 = vmatpush2.msra.mxu0 0.0
    %2186 = vmatprep.subr.mxu0 0.0
    %2187 = vmatpush2.msra.mxu0 0.0
    %2188 = vmatprep.subr.mxu0 0.0
    %2189 = vmatpush2.msra.mxu0 0.0
    %2190 = vmatprep.subr.mxu0 0.0
    %2191 = vmatpush2.msra.mxu0 0.0
    %2192 = vmatprep.subr.mxu0 0.0
    %2193 = vmatpush2.msra.mxu0 0.0
    %2194 = vmatprep.subr.mxu0 0.0
    %2195 = vmatpush2.msra.mxu0 0.0
    %2196 = vmatprep.subr.mxu0 0.0
    %2197 = vmatpush2.msra.mxu0 0.0
    %2198 = vmatprep.subr.mxu0 0.0
    %2199 = vmatpush2.msra.mxu0 0.0
    %2200 = vmatprep.subr.mxu0 0.0
    %2201 = vmatpush2.msra.mxu0 0.0
    %2202 = vmatprep.subr.mxu0 0.0
    %2203 = vmatpush2.msra.mxu0 0.0
    %2204 = vmatprep.subr.mxu0 0.0
    %2205 = vmatpush2.msra.mxu0 0.0
    %2206 = vmatprep.subr.mxu0 0.0
    %2207 = vmatpush2.msra.mxu0 0.0
    %2208 = vmatprep.subr.mxu0 0.0
    %2209 = vmatpush2.msra.mxu0 0.0
    %2210 = vmatprep.subr.mxu0 0.0
    %2211 = vmatpush2.msra.mxu0 0.0
    %2212 = vmatprep.subr.mxu0 0.0
    %2213 = vmatpush2.msra.mxu0 0.0
    %2214 = vmatprep.subr.mxu0 0.0
    %2215 = vmatpush2.msra.mxu0 0.0
    %2216 = vmatprep.mubr.f32.mxu0 0.0
    %2217 = vmatmul.mubr.f32.gmra.mxu0 %v2080
    %v2218 = vpop.f32.mrf.mxu0
    %v2219 = vadd.f32 0.0, %v2218
    %v2220 = vpop.f32.mrf.mxu0
    %2221 = vdwg.mxu0
    %2222 = vmatprep.subr.mxu0 0.0
    %2223 = vmatpush1.msra.mxu0 0.0
    %2224 = vmatprep.subr.mxu0 0.0
    %2225 = vmatpush1.msra.mxu0 0.0
    %2226 = vmatprep.subr.mxu0 0.0
    %2227 = vmatpush1.msra.mxu0 0.0
    %2228 = vmatprep.subr.mxu0 0.0
    %2229 = vmatpush1.msra.mxu0 0.0
    %2230 = vmatprep.subr.mxu0 0.0
    %2231 = vmatpush1.msra.mxu0 0.0
    %2232 = vmatprep.subr.mxu0 0.0
    %2233 = vmatpush1.msra.mxu0 0.0
    %2234 = vmatprep.subr.mxu0 0.0
    %2235 = vmatpush1.msra.mxu0 0.0
    %2236 = vmatprep.subr.mxu0 0.0
    %2237 = vmatpush1.msra.mxu0 0.0
    %2238 = vmatprep.subr.mxu0 0.0
    %2239 = vmatpush1.msra.mxu0 0.0
    %2240 = vmatprep.subr.mxu0 0.0
    %2241 = vmatpush1.msra.mxu0 0.0
    %2242 = vmatprep.subr.mxu0 0.0
    %2243 = vmatpush1.msra.mxu0 0.0
    %2244 = vmatprep.subr.mxu0 0.0
    %2245 = vmatpush1.msra.mxu0 0.0
    %2246 = vmatprep.subr.mxu0 0.0
    %2247 = vmatpush1.msra.mxu0 %v440
    %2248 = vmatprep.subr.mxu0 0.0
    %2249 = vmatpush1.msra.mxu0 %v439
    %2250 = vmatprep.subr.mxu0 0.0
    %2251 = vmatpush1.msra.mxu0 %v438
    %2252 = vmatprep.subr.mxu0 0.0
    %2253 = vmatpush1.msra.mxu0 %v437
    %2254 = vmatprep.subr.mxu0 0.0
    %2255 = vmatpush2.msra.mxu0 0.0
    %2256 = vmatprep.subr.mxu0 0.0
    %2257 = vmatpush2.msra.mxu0 0.0
    %2258 = vmatprep.subr.mxu0 0.0
    %2259 = vmatpush2.msra.mxu0 0.0
    %2260 = vmatprep.subr.mxu0 0.0
    %2261 = vmatpush2.msra.mxu0 0.0
    %2262 = vmatprep.subr.mxu0 0.0
    %2263 = vmatpush2.msra.mxu0 0.0
    %2264 = vmatprep.subr.mxu0 0.0
    %2265 = vmatpush2.msra.mxu0 0.0
    %2266 = vmatprep.subr.mxu0 0.0
    %2267 = vmatpush2.msra.mxu0 0.0
    %2268 = vmatprep.subr.mxu0 0.0
    %2269 = vmatpush2.msra.mxu0 0.0
    %2270 = vmatprep.subr.mxu0 0.0
    %2271 = vmatpush2.msra.mxu0 0.0
    %2272 = vmatprep.subr.mxu0 0.0
    %2273 = vmatpush2.msra.mxu0 0.0
    %2274 = vmatprep.subr.mxu0 0.0
    %2275 = vmatpush2.msra.mxu0 0.0
    %2276 = vmatprep.subr.mxu0 0.0
    %2277 = vmatpush2.msra.mxu0 0.0
    %2278 = vmatprep.subr.mxu0 0.0
    %2279 = vmatpush2.msra.mxu0 0.0
    %2280 = vmatprep.subr.mxu0 0.0
    %2281 = vmatpush2.msra.mxu0 0.0
    %2282 = vmatprep.subr.mxu0 0.0
    %2283 = vmatpush2.msra.mxu0 0.0
    %2284 = vmatprep.subr.mxu0 0.0
    %2285 = vmatpush2.msra.mxu0 0.0
    %2286 = vmatprep.mubr.f32.mxu0 0.0
    %2287 = vmatmul.mubr.f32.gmra.mxu0 %v2080
    %v2288 = vpop.f32.mrf.mxu0
    %v2289 = vadd.f32 %v446, %v2288
    %v2290 = vpop.f32.mrf.mxu0
    %2291 = vdwg.mxu0
    %v2292 = vadd.f32 %v188, %v2149
    %v2293 = vxor.u32 %v2292, 2147483648
    %v2294 = vmul.f32 %v2293, 1.442695
    %v2295 = vpow.pop %v2294
    %v2296 = vadd.f32 %v2295, 1.0
    %v2297 = vrcp.pop %v2296
    %v2298 = vmul.f32 1.0, %v2297
    %v2299 = vadd.f32 %v306, %v2219
    %v2300 = vxor.u32 %v2299, 2147483648
    %v2301 = vmul.f32 %v2300, 1.442695
    %v2302 = vpow.pop %v2301
    %v2303 = vadd.f32 %v2302, 1.0
    %v2304 = vrcp.pop %v2303
    %v2305 = vmul.f32 1.0, %v2304
    %v2306 = vmul.f32 %v2298, %v2289
    %v2307 = vadd.f32 %v424, %v2306
    %v2308 = vtanh.pop %v2307
    %v2309 = vsub.f32 %v2078, %v2308
    %v2310 = vmul.f32 %v2305, %v2309
    %v2311 = vadd.f32 %v2308, %v2310
    %s2312 = scalar_lea.vmem %s1, 96
    %v2313 = vld [vmem:[%s2312] sm:$0xff]
    %v2314 = vld [vmem:[%s2312 + $0x8] sm:$0xff]
    %v2315 = vld [vmem:[%s2312 + $0x10] sm:$0xff]
    %v2316 = vld [vmem:[%s2312 + $0x18] sm:$0xff]
    %s2317 = scalar_lea.vmem %s3, 3
    %v2318 = vld [vmem:[%s2317] sm:$0x1]
    %v2320 = vlaneseq
    %v2321 = vshrl.u32 %v2320, 7
    %v2322 = vsub.s32 0, %v2321
    %v2323 = vrot.slane %v2318, %v2322
    %v2326 = vsel %vm61, %v2311, 0
    %2328 = vmatprep.subr.mxu0 0.0
    %2329 = vmatpush1.msra.mxu0 0.0
    %2330 = vmatprep.subr.mxu0 0.0
    %2331 = vmatpush1.msra.mxu0 0.0
    %2332 = vmatprep.subr.mxu0 0.0
    %2333 = vmatpush1.msra.mxu0 0.0
    %2334 = vmatprep.subr.mxu0 0.0
    %2335 = vmatpush1.msra.mxu0 0.0
    %2336 = vmatprep.subr.mxu0 0.0
    %2337 = vmatpush1.msra.mxu0 0.0
    %2338 = vmatprep.subr.mxu0 0.0
    %2339 = vmatpush1.msra.mxu0 0.0
    %2340 = vmatprep.subr.mxu0 0.0
    %2341 = vmatpush1.msra.mxu0 0.0
    %2342 = vmatprep.subr.mxu0 0.0
    %2343 = vmatpush1.msra.mxu0 0.0
    %2344 = vmatprep.subr.mxu0 0.0
    %2345 = vmatpush1.msra.mxu0 0.0
    %2346 = vmatprep.subr.mxu0 0.0
    %2347 = vmatpush1.msra.mxu0 0.0
    %2348 = vmatprep.subr.mxu0 0.0
    %2349 = vmatpush1.msra.mxu0 0.0
    %2350 = vmatprep.subr.mxu0 0.0
    %2351 = vmatpush1.msra.mxu0 0.0
    %2352 = vmatprep.subr.mxu0 0.0
    %2353 = vmatpush1.msra.mxu0 %v2316
    %2354 = vmatprep.subr.mxu0 0.0
    %2355 = vmatpush1.msra.mxu0 %v2315
    %2356 = vmatprep.subr.mxu0 0.0
    %2357 = vmatpush1.msra.mxu0 %v2314
    %2358 = vmatprep.subr.mxu0 0.0
    %2359 = vmatpush1.msra.mxu0 %v2313
    %2360 = vmatprep.subr.mxu0 0.0
    %2361 = vmatpush2.msra.mxu0 0.0
    %2362 = vmatprep.subr.mxu0 0.0
    %2363 = vmatpush2.msra.mxu0 0.0
    %2364 = vmatprep.subr.mxu0 0.0
    %2365 = vmatpush2.msra.mxu0 0.0
    %2366 = vmatprep.subr.mxu0 0.0
    %2367 = vmatpush2.msra.mxu0 0.0
    %2368 = vmatprep.subr.mxu0 0.0
    %2369 = vmatpush2.msra.mxu0 0.0
    %2370 = vmatprep.subr.mxu0 0.0
    %2371 = vmatpush2.msra.mxu0 0.0
    %2372 = vmatprep.subr.mxu0 0.0
    %2373 = vmatpush2.msra.mxu0 0.0
    %2374 = vmatprep.subr.mxu0 0.0
    %2375 = vmatpush2.msra.mxu0 0.0
    %2376 = vmatprep.subr.mxu0 0.0
    %2377 = vmatpush2.msra.mxu0 0.0
    %2378 = vmatprep.subr.mxu0 0.0
    %2379 = vmatpush2.msra.mxu0 0.0
    %2380 = vmatprep.subr.mxu0 0.0
    %2381 = vmatpush2.msra.mxu0 0.0
    %2382 = vmatprep.subr.mxu0 0.0
    %2383 = vmatpush2.msra.mxu0 0.0
    %2384 = vmatprep.subr.mxu0 0.0
    %2385 = vmatpush2.msra.mxu0 0.0
    %2386 = vmatprep.subr.mxu0 0.0
    %2387 = vmatpush2.msra.mxu0 0.0
    %2388 = vmatprep.subr.mxu0 0.0
    %2389 = vmatpush2.msra.mxu0 0.0
    %2390 = vmatprep.subr.mxu0 0.0
    %2391 = vmatpush2.msra.mxu0 0.0
    %2392 = vmatprep.mubr.f32.mxu0 0.0
    %2393 = vmatmul.mubr.f32.gmra.mxu0 %v682
    %v2394 = vpop.f32.mrf.mxu0
    %v2395 = vadd.f32 %v2323, %v2394
    %v2396 = vpop.f32.mrf.mxu0
    %2397 = vmatprep.mubr.f32.mxu0 0.0
    %2398 = vmatmul.mubr.f32.gmra.mxu0 %v915
    %v2399 = vpop.f32.mrf.mxu0
    %v2400 = vadd.f32 %v2323, %v2399
    %v2401 = vpop.f32.mrf.mxu0
    %2402 = vmatprep.mubr.f32.mxu0 0.0
    %2403 = vmatmul.mubr.f32.gmra.mxu0 %v1148
    %v2404 = vpop.f32.mrf.mxu0
    %v2405 = vadd.f32 %v2323, %v2404
    %v2406 = vpop.f32.mrf.mxu0
    %2407 = vmatprep.mubr.f32.mxu0 0.0
    %2408 = vmatmul.mubr.f32.gmra.mxu0 %v1381
    %v2409 = vpop.f32.mrf.mxu0
    %v2410 = vadd.f32 %v2323, %v2409
    %v2411 = vpop.f32.mrf.mxu0
    %2412 = vmatprep.mubr.f32.mxu0 0.0
    %2413 = vmatmul.mubr.f32.gmra.mxu0 %v1614
    %v2414 = vpop.f32.mrf.mxu0
    %v2415 = vadd.f32 %v2323, %v2414
    %v2416 = vpop.f32.mrf.mxu0
    %2417 = vmatprep.mubr.f32.mxu0 0.0
    %2418 = vmatmul.mubr.f32.gmra.mxu0 %v1847
    %v2419 = vpop.f32.mrf.mxu0
    %v2420 = vadd.f32 %v2323, %v2419
    %v2421 = vpop.f32.mrf.mxu0
    %2422 = vmatprep.mubr.f32.mxu0 0.0
    %2423 = vmatmul.mubr.f32.gmra.mxu0 %v2080
    %v2424 = vpop.f32.mrf.mxu0
    %v2425 = vadd.f32 %v2323, %v2424
    %v2426 = vpop.f32.mrf.mxu0
    %2427 = vmatprep.mubr.f32.mxu0 0.0
    %2428 = vmatmul.mubr.f32.gmra.mxu0 %v2326
    %v2429 = vpop.f32.mrf.mxu0
    %v2430 = vadd.f32 %v2323, %v2429
    %v2431 = vpop.f32.mrf.mxu0
    %2432 = vdwg.mxu0
    %s2433 = scalar_lea.vmem %s1, 128
    %v2434 = vld [vmem:[%s2433] sm:$0xff]
    %v2435 = vld [vmem:[%s2433 + $0x8] sm:$0xff]
    %v2436 = vld [vmem:[%s2433 + $0x10] sm:$0xff]
    %v2437 = vld [vmem:[%s2433 + $0x18] sm:$0xff]
    %s2438 = scalar_lea.vmem %s3, 4
    %v2439 = vld [vmem:[%s2438] sm:$0x1]
    %v2441 = vlaneseq
    %v2442 = vshrl.u32 %v2441, 7
    %v2443 = vsub.s32 0, %v2442
    %v2444 = vrot.slane %v2439, %v2443
    %2446 = vmatprep.subr.mxu0 0.0
    %2447 = vmatpush1.msra.mxu0 0.0
    %2448 = vmatprep.subr.mxu0 0.0
    %2449 = vmatpush1.msra.mxu0 0.0
    %2450 = vmatprep.subr.mxu0 0.0
    %2451 = vmatpush1.msra.mxu0 0.0
    %2452 = vmatprep.subr.mxu0 0.0
    %2453 = vmatpush1.msra.mxu0 0.0
    %2454 = vmatprep.subr.mxu0 0.0
    %2455 = vmatpush1.msra.mxu0 0.0
    %2456 = vmatprep.subr.mxu0 0.0
    %2457 = vmatpush1.msra.mxu0 0.0
    %2458 = vmatprep.subr.mxu0 0.0
    %2459 = vmatpush1.msra.mxu0 0.0
    %2460 = vmatprep.subr.mxu0 0.0
    %2461 = vmatpush1.msra.mxu0 0.0
    %2462 = vmatprep.subr.mxu0 0.0
    %2463 = vmatpush1.msra.mxu0 0.0
    %2464 = vmatprep.subr.mxu0 0.0
    %2465 = vmatpush1.msra.mxu0 0.0
    %2466 = vmatprep.subr.mxu0 0.0
    %2467 = vmatpush1.msra.mxu0 0.0
    %2468 = vmatprep.subr.mxu0 0.0
    %2469 = vmatpush1.msra.mxu0 0.0
    %2470 = vmatprep.subr.mxu0 0.0
    %2471 = vmatpush1.msra.mxu0 %v2437
    %2472 = vmatprep.subr.mxu0 0.0
    %2473 = vmatpush1.msra.mxu0 %v2436
    %2474 = vmatprep.subr.mxu0 0.0
    %2475 = vmatpush1.msra.mxu0 %v2435
    %2476 = vmatprep.subr.mxu0 0.0
    %2477 = vmatpush1.msra.mxu0 %v2434
    %2478 = vmatprep.subr.mxu0 0.0
    %2479 = vmatpush2.msra.mxu0 0.0
    %2480 = vmatprep.subr.mxu0 0.0
    %2481 = vmatpush2.msra.mxu0 0.0
    %2482 = vmatprep.subr.mxu0 0.0
    %2483 = vmatpush2.msra.mxu0 0.0
    %2484 = vmatprep.subr.mxu0 0.0
    %2485 = vmatpush2.msra.mxu0 0.0
    %2486 = vmatprep.subr.mxu0 0.0
    %2487 = vmatpush2.msra.mxu0 0.0
    %2488 = vmatprep.subr.mxu0 0.0
    %2489 = vmatpush2.msra.mxu0 0.0
    %2490 = vmatprep.subr.mxu0 0.0
    %2491 = vmatpush2.msra.mxu0 0.0
    %2492 = vmatprep.subr.mxu0 0.0
    %2493 = vmatpush2.msra.mxu0 0.0
    %2494 = vmatprep.subr.mxu0 0.0
    %2495 = vmatpush2.msra.mxu0 0.0
    %2496 = vmatprep.subr.mxu0 0.0
    %2497 = vmatpush2.msra.mxu0 0.0
    %2498 = vmatprep.subr.mxu0 0.0
    %2499 = vmatpush2.msra.mxu0 0.0
    %2500 = vmatprep.subr.mxu0 0.0
    %2501 = vmatpush2.msra.mxu0 0.0
    %2502 = vmatprep.subr.mxu0 0.0
    %2503 = vmatpush2.msra.mxu0 0.0
    %2504 = vmatprep.subr.mxu0 0.0
    %2505 = vmatpush2.msra.mxu0 0.0
    %2506 = vmatprep.subr.mxu0 0.0
    %2507 = vmatpush2.msra.mxu0 0.0
    %2508 = vmatprep.subr.mxu0 0.0
    %2509 = vmatpush2.msra.mxu0 0.0
    %2510 = vmatprep.mubr.f32.mxu0 0.0
    %2511 = vmatmul.mubr.f32.gmra.mxu0 %v682
    %v2512 = vpop.f32.mrf.mxu0
    %v2513 = vadd.f32 %v2444, %v2512
    %v2514 = vpop.f32.mrf.mxu0
    %2515 = vmatprep.mubr.f32.mxu0 0.0
    %2516 = vmatmul.mubr.f32.gmra.mxu0 %v915
    %v2517 = vpop.f32.mrf.mxu0
    %v2518 = vadd.f32 %v2444, %v2517
    %v2519 = vpop.f32.mrf.mxu0
    %2520 = vmatprep.mubr.f32.mxu0 0.0
    %2521 = vmatmul.mubr.f32.gmra.mxu0 %v1148
    %v2522 = vpop.f32.mrf.mxu0
    %v2523 = vadd.f32 %v2444, %v2522
    %v2524 = vpop.f32.mrf.mxu0
    %2525 = vmatprep.mubr.f32.mxu0 0.0
    %2526 = vmatmul.mubr.f32.gmra.mxu0 %v1381
    %v2527 = vpop.f32.mrf.mxu0
    %v2528 = vadd.f32 %v2444, %v2527
    %v2529 = vpop.f32.mrf.mxu0
    %2530 = vmatprep.mubr.f32.mxu0 0.0
    %2531 = vmatmul.mubr.f32.gmra.mxu0 %v1614
    %v2532 = vpop.f32.mrf.mxu0
    %v2533 = vadd.f32 %v2444, %v2532
    %v2534 = vpop.f32.mrf.mxu0
    %2535 = vmatprep.mubr.f32.mxu0 0.0
    %2536 = vmatmul.mubr.f32.gmra.mxu0 %v1847
    %v2537 = vpop.f32.mrf.mxu0
    %v2538 = vadd.f32 %v2444, %v2537
    %v2539 = vpop.f32.mrf.mxu0
    %2540 = vmatprep.mubr.f32.mxu0 0.0
    %2541 = vmatmul.mubr.f32.gmra.mxu0 %v2080
    %v2542 = vpop.f32.mrf.mxu0
    %v2543 = vadd.f32 %v2444, %v2542
    %v2544 = vpop.f32.mrf.mxu0
    %2545 = vmatprep.mubr.f32.mxu0 0.0
    %2546 = vmatmul.mubr.f32.gmra.mxu0 %v2326
    %v2547 = vpop.f32.mrf.mxu0
    %v2548 = vadd.f32 %v2444, %v2547
    %v2549 = vpop.f32.mrf.mxu0
    %2550 = vdwg.mxu0
    %s2551 = scalar_lea.vmem %s1, 160
    %v2552 = vld [vmem:[%s2551] sm:$0xff]
    %v2553 = vld [vmem:[%s2551 + $0x8] sm:$0xff]
    %v2554 = vld [vmem:[%s2551 + $0x10] sm:$0xff]
    %v2555 = vld [vmem:[%s2551 + $0x18] sm:$0xff]
    %s2556 = scalar_lea.vmem %s3, 5
    %v2557 = vld [vmem:[%s2556] sm:$0x1]
    %v2559 = vlaneseq
    %v2560 = vshrl.u32 %v2559, 7
    %v2561 = vsub.s32 0, %v2560
    %v2562 = vrot.slane %v2557, %v2561
    %2564 = vmatprep.subr.mxu0 0.0
    %2565 = vmatpush1.msra.mxu0 0.0
    %2566 = vmatprep.subr.mxu0 0.0
    %2567 = vmatpush1.msra.mxu0 0.0
    %2568 = vmatprep.subr.mxu0 0.0
    %2569 = vmatpush1.msra.mxu0 0.0
    %2570 = vmatprep.subr.mxu0 0.0
    %2571 = vmatpush1.msra.mxu0 0.0
    %2572 = vmatprep.subr.mxu0 0.0
    %2573 = vmatpush1.msra.mxu0 0.0
    %2574 = vmatprep.subr.mxu0 0.0
    %2575 = vmatpush1.msra.mxu0 0.0
    %2576 = vmatprep.subr.mxu0 0.0
    %2577 = vmatpush1.msra.mxu0 0.0
    %2578 = vmatprep.subr.mxu0 0.0
    %2579 = vmatpush1.msra.mxu0 0.0
    %2580 = vmatprep.subr.mxu0 0.0
    %2581 = vmatpush1.msra.mxu0 0.0
    %2582 = vmatprep.subr.mxu0 0.0
    %2583 = vmatpush1.msra.mxu0 0.0
    %2584 = vmatprep.subr.mxu0 0.0
    %2585 = vmatpush1.msra.mxu0 0.0
    %2586 = vmatprep.subr.mxu0 0.0
    %2587 = vmatpush1.msra.mxu0 0.0
    %2588 = vmatprep.subr.mxu0 0.0
    %2589 = vmatpush1.msra.mxu0 %v2555
    %2590 = vmatprep.subr.mxu0 0.0
    %2591 = vmatpush1.msra.mxu0 %v2554
    %2592 = vmatprep.subr.mxu0 0.0
    %2593 = vmatpush1.msra.mxu0 %v2553
    %2594 = vmatprep.subr.mxu0 0.0
    %2595 = vmatpush1.msra.mxu0 %v2552
    %2596 = vmatprep.subr.mxu0 0.0
    %2597 = vmatpush2.msra.mxu0 0.0
    %2598 = vmatprep.subr.mxu0 0.0
    %2599 = vmatpush2.msra.mxu0 0.0
    %2600 = vmatprep.subr.mxu0 0.0
    %2601 = vmatpush2.msra.mxu0 0.0
    %2602 = vmatprep.subr.mxu0 0.0
    %2603 = vmatpush2.msra.mxu0 0.0
    %2604 = vmatprep.subr.mxu0 0.0
    %2605 = vmatpush2.msra.mxu0 0.0
    %2606 = vmatprep.subr.mxu0 0.0
    %2607 = vmatpush2.msra.mxu0 0.0
    %2608 = vmatprep.subr.mxu0 0.0
    %2609 = vmatpush2.msra.mxu0 0.0
    %2610 = vmatprep.subr.mxu0 0.0
    %2611 = vmatpush2.msra.mxu0 0.0
    %2612 = vmatprep.subr.mxu0 0.0
    %2613 = vmatpush2.msra.mxu0 0.0
    %2614 = vmatprep.subr.mxu0 0.0
    %2615 = vmatpush2.msra.mxu0 0.0
    %2616 = vmatprep.subr.mxu0 0.0
    %2617 = vmatpush2.msra.mxu0 0.0
    %2618 = vmatprep.subr.mxu0 0.0
    %2619 = vmatpush2.msra.mxu0 0.0
    %2620 = vmatprep.subr.mxu0 0.0
    %2621 = vmatpush2.msra.mxu0 0.0
    %2622 = vmatprep.subr.mxu0 0.0
    %2623 = vmatpush2.msra.mxu0 0.0
    %2624 = vmatprep.subr.mxu0 0.0
    %2625 = vmatpush2.msra.mxu0 0.0
    %2626 = vmatprep.subr.mxu0 0.0
    %2627 = vmatpush2.msra.mxu0 0.0
    %2628 = vmatprep.mubr.f32.mxu0 0.0
    %2629 = vmatmul.mubr.f32.gmra.mxu0 %v682
    %v2630 = vpop.f32.mrf.mxu0
    %v2631 = vadd.f32 %v2562, %v2630
    %v2632 = vpop.f32.mrf.mxu0
    %2633 = vmatprep.mubr.f32.mxu0 0.0
    %2634 = vmatmul.mubr.f32.gmra.mxu0 %v915
    %v2635 = vpop.f32.mrf.mxu0
    %v2636 = vadd.f32 %v2562, %v2635
    %v2637 = vpop.f32.mrf.mxu0
    %2638 = vmatprep.mubr.f32.mxu0 0.0
    %2639 = vmatmul.mubr.f32.gmra.mxu0 %v1148
    %v2640 = vpop.f32.mrf.mxu0
    %v2641 = vadd.f32 %v2562, %v2640
    %v2642 = vpop.f32.mrf.mxu0
    %2643 = vmatprep.mubr.f32.mxu0 0.0
    %2644 = vmatmul.mubr.f32.gmra.mxu0 %v1381
    %v2645 = vpop.f32.mrf.mxu0
    %v2646 = vadd.f32 %v2562, %v2645
    %v2647 = vpop.f32.mrf.mxu0
    %2648 = vmatprep.mubr.f32.mxu0 0.0
    %2649 = vmatmul.mubr.f32.gmra.mxu0 %v1614
    %v2650 = vpop.f32.mrf.mxu0
    %v2651 = vadd.f32 %v2562, %v2650
    %v2652 = vpop.f32.mrf.mxu0
    %2653 = vmatprep.mubr.f32.mxu0 0.0
    %2654 = vmatmul.mubr.f32.gmra.mxu0 %v1847
    %v2655 = vpop.f32.mrf.mxu0
    %v2656 = vadd.f32 %v2562, %v2655
    %v2657 = vpop.f32.mrf.mxu0
    %2658 = vmatprep.mubr.f32.mxu0 0.0
    %2659 = vmatmul.mubr.f32.gmra.mxu0 %v2080
    %v2660 = vpop.f32.mrf.mxu0
    %v2661 = vadd.f32 %v2562, %v2660
    %v2662 = vpop.f32.mrf.mxu0
    %2663 = vmatprep.mubr.f32.mxu0 0.0
    %2664 = vmatmul.mubr.f32.gmra.mxu0 %v2326
    %v2665 = vpop.f32.mrf.mxu0
    %v2666 = vadd.f32 %v2562, %v2665
    %v2667 = vpop.f32.mrf.mxu0
    %2668 = vdwg.mxu0
    %s2669 = scalar_lea.vmem [#allocation3], 96
    %v2670 = vld [vmem:[%s2669] sm:$0xff]
    %v2671 = vld [vmem:[%s2669 + $0x8] sm:$0xff]
    %v2672 = vld [vmem:[%s2669 + $0x10] sm:$0xff]
    %v2673 = vld [vmem:[%s2669 + $0x18] sm:$0xff]
    %s2674 = scalar_lea.vmem [#allocation3], 128
    %v2675 = vld [vmem:[%s2674] sm:$0xff]
    %v2676 = vld [vmem:[%s2674 + $0x8] sm:$0xff]
    %v2677 = vld [vmem:[%s2674 + $0x10] sm:$0xff]
    %v2678 = vld [vmem:[%s2674 + $0x18] sm:$0xff]
    %s2679 = scalar_lea.vmem [#allocation3], 160
    %v2680 = vld [vmem:[%s2679] sm:$0xff]
    %v2681 = vld [vmem:[%s2679 + $0x8] sm:$0xff]
    %v2682 = vld [vmem:[%s2679 + $0x10] sm:$0xff]
    %v2683 = vld [vmem:[%s2679 + $0x18] sm:$0xff]
    %s2684 = scalar_lea.vmem %s4, 1
    %v2685 = vld [vmem:[%s2684] sm:$0x1]
    %v2687 = vlaneseq
    %v2688 = vshrl.u32 %v2687, 7
    %v2689 = vsub.s32 0, %v2688
    %v2690 = vrot.slane %v2685, %v2689
    %2692 = vmatprep.subr.mxu0 0.0
    %2693 = vmatpush1.msra.mxu0 0.0
    %2694 = vmatprep.subr.mxu0 0.0
    %2695 = vmatpush1.msra.mxu0 0.0
    %2696 = vmatprep.subr.mxu0 0.0
    %2697 = vmatpush1.msra.mxu0 0.0
    %2698 = vmatprep.subr.mxu0 0.0
    %2699 = vmatpush1.msra.mxu0 0.0
    %2700 = vmatprep.subr.mxu0 0.0
    %2701 = vmatpush1.msra.mxu0 0.0
    %2702 = vmatprep.subr.mxu0 0.0
    %2703 = vmatpush1.msra.mxu0 0.0
    %2704 = vmatprep.subr.mxu0 0.0
    %2705 = vmatpush1.msra.mxu0 0.0
    %2706 = vmatprep.subr.mxu0 0.0
    %2707 = vmatpush1.msra.mxu0 0.0
    %2708 = vmatprep.subr.mxu0 0.0
    %2709 = vmatpush1.msra.mxu0 0.0
    %2710 = vmatprep.subr.mxu0 0.0
    %2711 = vmatpush1.msra.mxu0 0.0
    %2712 = vmatprep.subr.mxu0 0.0
    %2713 = vmatpush1.msra.mxu0 0.0
    %2714 = vmatprep.subr.mxu0 0.0
    %2715 = vmatpush1.msra.mxu0 0.0
    %2716 = vmatprep.subr.mxu0 0.0
    %2717 = vmatpush1.msra.mxu0 %v2673
    %2718 = vmatprep.subr.mxu0 0.0
    %2719 = vmatpush1.msra.mxu0 %v2672
    %2720 = vmatprep.subr.mxu0 0.0
    %2721 = vmatpush1.msra.mxu0 %v2671
    %2722 = vmatprep.subr.mxu0 0.0
    %2723 = vmatpush1.msra.mxu0 %v2670
    %2724 = vmatprep.subr.mxu0 0.0
    %2725 = vmatpush2.msra.mxu0 0.0
    %2726 = vmatprep.subr.mxu0 0.0
    %2727 = vmatpush2.msra.mxu0 0.0
    %2728 = vmatprep.subr.mxu0 0.0
    %2729 = vmatpush2.msra.mxu0 0.0
    %2730 = vmatprep.subr.mxu0 0.0
    %2731 = vmatpush2.msra.mxu0 0.0
    %2732 = vmatprep.subr.mxu0 0.0
    %2733 = vmatpush2.msra.mxu0 0.0
    %2734 = vmatprep.subr.mxu0 0.0
    %2735 = vmatpush2.msra.mxu0 0.0
    %2736 = vmatprep.subr.mxu0 0.0
    %2737 = vmatpush2.msra.mxu0 0.0
    %2738 = vmatprep.subr.mxu0 0.0
    %2739 = vmatpush2.msra.mxu0 0.0
    %2740 = vmatprep.subr.mxu0 0.0
    %2741 = vmatpush2.msra.mxu0 0.0
    %2742 = vmatprep.subr.mxu0 0.0
    %2743 = vmatpush2.msra.mxu0 0.0
    %2744 = vmatprep.subr.mxu0 0.0
    %2745 = vmatpush2.msra.mxu0 0.0
    %2746 = vmatprep.subr.mxu0 0.0
    %2747 = vmatpush2.msra.mxu0 0.0
    %2748 = vmatprep.subr.mxu0 0.0
    %2749 = vmatpush2.msra.mxu0 0.0
    %2750 = vmatprep.subr.mxu0 0.0
    %2751 = vmatpush2.msra.mxu0 0.0
    %2752 = vmatprep.subr.mxu0 0.0
    %2753 = vmatpush2.msra.mxu0 0.0
    %2754 = vmatprep.subr.mxu0 0.0
    %2755 = vmatpush2.msra.mxu0 0.0
    %2756 = vmatprep.mubr.f32.mxu0 0.0
    %2757 = vmatmul.mubr.f32.gmra.mxu0 %v449
    %v2758 = vpop.f32.mrf.mxu0
    %v2759 = vadd.f32 0.0, %v2758
    %v2760 = vpop.f32.mrf.mxu0
    %2761 = vdwg.mxu0
    %2762 = vmatprep.subr.mxu0 0.0
    %2763 = vmatpush1.msra.mxu0 0.0
    %2764 = vmatprep.subr.mxu0 0.0
    %2765 = vmatpush1.msra.mxu0 0.0
    %2766 = vmatprep.subr.mxu0 0.0
    %2767 = vmatpush1.msra.mxu0 0.0
    %2768 = vmatprep.subr.mxu0 0.0
    %2769 = vmatpush1.msra.mxu0 0.0
    %2770 = vmatprep.subr.mxu0 0.0
    %2771 = vmatpush1.msra.mxu0 0.0
    %2772 = vmatprep.subr.mxu0 0.0
    %2773 = vmatpush1.msra.mxu0 0.0
    %2774 = vmatprep.subr.mxu0 0.0
    %2775 = vmatpush1.msra.mxu0 0.0
    %2776 = vmatprep.subr.mxu0 0.0
    %2777 = vmatpush1.msra.mxu0 0.0
    %2778 = vmatprep.subr.mxu0 0.0
    %2779 = vmatpush1.msra.mxu0 0.0
    %2780 = vmatprep.subr.mxu0 0.0
    %2781 = vmatpush1.msra.mxu0 0.0
    %2782 = vmatprep.subr.mxu0 0.0
    %2783 = vmatpush1.msra.mxu0 0.0
    %2784 = vmatprep.subr.mxu0 0.0
    %2785 = vmatpush1.msra.mxu0 0.0
    %2786 = vmatprep.subr.mxu0 0.0
    %2787 = vmatpush1.msra.mxu0 %v2678
    %2788 = vmatprep.subr.mxu0 0.0
    %2789 = vmatpush1.msra.mxu0 %v2677
    %2790 = vmatprep.subr.mxu0 0.0
    %2791 = vmatpush1.msra.mxu0 %v2676
    %2792 = vmatprep.subr.mxu0 0.0
    %2793 = vmatpush1.msra.mxu0 %v2675
    %2794 = vmatprep.subr.mxu0 0.0
    %2795 = vmatpush2.msra.mxu0 0.0
    %2796 = vmatprep.subr.mxu0 0.0
    %2797 = vmatpush2.msra.mxu0 0.0
    %2798 = vmatprep.subr.mxu0 0.0
    %2799 = vmatpush2.msra.mxu0 0.0
    %2800 = vmatprep.subr.mxu0 0.0
    %2801 = vmatpush2.msra.mxu0 0.0
    %2802 = vmatprep.subr.mxu0 0.0
    %2803 = vmatpush2.msra.mxu0 0.0
    %2804 = vmatprep.subr.mxu0 0.0
    %2805 = vmatpush2.msra.mxu0 0.0
    %2806 = vmatprep.subr.mxu0 0.0
    %2807 = vmatpush2.msra.mxu0 0.0
    %2808 = vmatprep.subr.mxu0 0.0
    %2809 = vmatpush2.msra.mxu0 0.0
    %2810 = vmatprep.subr.mxu0 0.0
    %2811 = vmatpush2.msra.mxu0 0.0
    %2812 = vmatprep.subr.mxu0 0.0
    %2813 = vmatpush2.msra.mxu0 0.0
    %2814 = vmatprep.subr.mxu0 0.0
    %2815 = vmatpush2.msra.mxu0 0.0
    %2816 = vmatprep.subr.mxu0 0.0
    %2817 = vmatpush2.msra.mxu0 0.0
    %2818 = vmatprep.subr.mxu0 0.0
    %2819 = vmatpush2.msra.mxu0 0.0
    %2820 = vmatprep.subr.mxu0 0.0
    %2821 = vmatpush2.msra.mxu0 0.0
    %2822 = vmatprep.subr.mxu0 0.0
    %2823 = vmatpush2.msra.mxu0 0.0
    %2824 = vmatprep.subr.mxu0 0.0
    %2825 = vmatpush2.msra.mxu0 0.0
    %2826 = vmatprep.mubr.f32.mxu0 0.0
    %2827 = vmatmul.mubr.f32.gmra.mxu0 %v449
    %v2828 = vpop.f32.mrf.mxu0
    %v2829 = vadd.f32 0.0, %v2828
    %v2830 = vpop.f32.mrf.mxu0
    %2831 = vdwg.mxu0
    %2832 = vmatprep.subr.mxu0 0.0
    %2833 = vmatpush1.msra.mxu0 0.0
    %2834 = vmatprep.subr.mxu0 0.0
    %2835 = vmatpush1.msra.mxu0 0.0
    %2836 = vmatprep.subr.mxu0 0.0
    %2837 = vmatpush1.msra.mxu0 0.0
    %2838 = vmatprep.subr.mxu0 0.0
    %2839 = vmatpush1.msra.mxu0 0.0
    %2840 = vmatprep.subr.mxu0 0.0
    %2841 = vmatpush1.msra.mxu0 0.0
    %2842 = vmatprep.subr.mxu0 0.0
    %2843 = vmatpush1.msra.mxu0 0.0
    %2844 = vmatprep.subr.mxu0 0.0
    %2845 = vmatpush1.msra.mxu0 0.0
    %2846 = vmatprep.subr.mxu0 0.0
    %2847 = vmatpush1.msra.mxu0 0.0
    %2848 = vmatprep.subr.mxu0 0.0
    %2849 = vmatpush1.msra.mxu0 0.0
    %2850 = vmatprep.subr.mxu0 0.0
    %2851 = vmatpush1.msra.mxu0 0.0
    %2852 = vmatprep.subr.mxu0 0.0
    %2853 = vmatpush1.msra.mxu0 0.0
    %2854 = vmatprep.subr.mxu0 0.0
    %2855 = vmatpush1.msra.mxu0 0.0
    %2856 = vmatprep.subr.mxu0 0.0
    %2857 = vmatpush1.msra.mxu0 %v2683
    %2858 = vmatprep.subr.mxu0 0.0
    %2859 = vmatpush1.msra.mxu0 %v2682
    %2860 = vmatprep.subr.mxu0 0.0
    %2861 = vmatpush1.msra.mxu0 %v2681
    %2862 = vmatprep.subr.mxu0 0.0
    %2863 = vmatpush1.msra.mxu0 %v2680
    %2864 = vmatprep.subr.mxu0 0.0
    %2865 = vmatpush2.msra.mxu0 0.0
    %2866 = vmatprep.subr.mxu0 0.0
    %2867 = vmatpush2.msra.mxu0 0.0
    %2868 = vmatprep.subr.mxu0 0.0
    %2869 = vmatpush2.msra.mxu0 0.0
    %2870 = vmatprep.subr.mxu0 0.0
    %2871 = vmatpush2.msra.mxu0 0.0
    %2872 = vmatprep.subr.mxu0 0.0
    %2873 = vmatpush2.msra.mxu0 0.0
    %2874 = vmatprep.subr.mxu0 0.0
    %2875 = vmatpush2.msra.mxu0 0.0
    %2876 = vmatprep.subr.mxu0 0.0
    %2877 = vmatpush2.msra.mxu0 0.0
    %2878 = vmatprep.subr.mxu0 0.0
    %2879 = vmatpush2.msra.mxu0 0.0
    %2880 = vmatprep.subr.mxu0 0.0
    %2881 = vmatpush2.msra.mxu0 0.0
    %2882 = vmatprep.subr.mxu0 0.0
    %2883 = vmatpush2.msra.mxu0 0.0
    %2884 = vmatprep.subr.mxu0 0.0
    %2885 = vmatpush2.msra.mxu0 0.0
    %2886 = vmatprep.subr.mxu0 0.0
    %2887 = vmatpush2.msra.mxu0 0.0
    %2888 = vmatprep.subr.mxu0 0.0
    %2889 = vmatpush2.msra.mxu0 0.0
    %2890 = vmatprep.subr.mxu0 0.0
    %2891 = vmatpush2.msra.mxu0 0.0
    %2892 = vmatprep.subr.mxu0 0.0
    %2893 = vmatpush2.msra.mxu0 0.0
    %2894 = vmatprep.subr.mxu0 0.0
    %2895 = vmatpush2.msra.mxu0 0.0
    %2896 = vmatprep.mubr.f32.mxu0 0.0
    %2897 = vmatmul.mubr.f32.gmra.mxu0 %v449
    %v2898 = vpop.f32.mrf.mxu0
    %v2899 = vadd.f32 %v2690, %v2898
    %v2900 = vpop.f32.mrf.mxu0
    %2901 = vdwg.mxu0
    %v2902 = vadd.f32 %v2395, %v2759
    %v2903 = vxor.u32 %v2902, 2147483648
    %v2904 = vmul.f32 %v2903, 1.442695
    %v2905 = vpow.pop %v2904
    %v2906 = vadd.f32 %v2905, 1.0
    %v2907 = vrcp.pop %v2906
    %v2908 = vmul.f32 1.0, %v2907
    %v2909 = vadd.f32 %v2513, %v2829
    %v2910 = vxor.u32 %v2909, 2147483648
    %v2911 = vmul.f32 %v2910, 1.442695
    %v2912 = vpow.pop %v2911
    %v2913 = vadd.f32 %v2912, 1.0
    %v2914 = vrcp.pop %v2913
    %v2915 = vmul.f32 1.0, %v2914
    %v2916 = vmul.f32 %v2908, %v2899
    %v2917 = vadd.f32 %v2631, %v2916
    %v2918 = vtanh.pop %v2917
    %v2919 = vsub.f32 0.0, %v2918
    %v2920 = vmul.f32 %v2915, %v2919
    %v2921 = vadd.f32 %v2918, %v2920
    %v2923 = vsel %vm61, %v2921, 0
    %2925 = vmatprep.subr.mxu0 0.0
    %2926 = vmatpush1.msra.mxu0 0.0
    %2927 = vmatprep.subr.mxu0 0.0
    %2928 = vmatpush1.msra.mxu0 0.0
    %2929 = vmatprep.subr.mxu0 0.0
    %2930 = vmatpush1.msra.mxu0 0.0
    %2931 = vmatprep.subr.mxu0 0.0
    %2932 = vmatpush1.msra.mxu0 0.0
    %2933 = vmatprep.subr.mxu0 0.0
    %2934 = vmatpush1.msra.mxu0 0.0
    %2935 = vmatprep.subr.mxu0 0.0
    %2936 = vmatpush1.msra.mxu0 0.0
    %2937 = vmatprep.subr.mxu0 0.0
    %2938 = vmatpush1.msra.mxu0 0.0
    %2939 = vmatprep.subr.mxu0 0.0
    %2940 = vmatpush1.msra.mxu0 0.0
    %2941 = vmatprep.subr.mxu0 0.0
    %2942 = vmatpush1.msra.mxu0 0.0
    %2943 = vmatprep.subr.mxu0 0.0
    %2944 = vmatpush1.msra.mxu0 0.0
    %2945 = vmatprep.subr.mxu0 0.0
    %2946 = vmatpush1.msra.mxu0 0.0
    %2947 = vmatprep.subr.mxu0 0.0
    %2948 = vmatpush1.msra.mxu0 0.0
    %2949 = vmatprep.subr.mxu0 0.0
    %2950 = vmatpush1.msra.mxu0 %v2673
    %2951 = vmatprep.subr.mxu0 0.0
    %2952 = vmatpush1.msra.mxu0 %v2672
    %2953 = vmatprep.subr.mxu0 0.0
    %2954 = vmatpush1.msra.mxu0 %v2671
    %2955 = vmatprep.subr.mxu0 0.0
    %2956 = vmatpush1.msra.mxu0 %v2670
    %2957 = vmatprep.subr.mxu0 0.0
    %2958 = vmatpush2.msra.mxu0 0.0
    %2959 = vmatprep.subr.mxu0 0.0
    %2960 = vmatpush2.msra.mxu0 0.0
    %2961 = vmatprep.subr.mxu0 0.0
    %2962 = vmatpush2.msra.mxu0 0.0
    %2963 = vmatprep.subr.mxu0 0.0
    %2964 = vmatpush2.msra.mxu0 0.0
    %2965 = vmatprep.subr.mxu0 0.0
    %2966 = vmatpush2.msra.mxu0 0.0
    %2967 = vmatprep.subr.mxu0 0.0
    %2968 = vmatpush2.msra.mxu0 0.0
    %2969 = vmatprep.subr.mxu0 0.0
    %2970 = vmatpush2.msra.mxu0 0.0
    %2971 = vmatprep.subr.mxu0 0.0
    %2972 = vmatpush2.msra.mxu0 0.0
    %2973 = vmatprep.subr.mxu0 0.0
    %2974 = vmatpush2.msra.mxu0 0.0
    %2975 = vmatprep.subr.mxu0 0.0
    %2976 = vmatpush2.msra.mxu0 0.0
    %2977 = vmatprep.subr.mxu0 0.0
    %2978 = vmatpush2.msra.mxu0 0.0
    %2979 = vmatprep.subr.mxu0 0.0
    %2980 = vmatpush2.msra.mxu0 0.0
    %2981 = vmatprep.subr.mxu0 0.0
    %2982 = vmatpush2.msra.mxu0 0.0
    %2983 = vmatprep.subr.mxu0 0.0
    %2984 = vmatpush2.msra.mxu0 0.0
    %2985 = vmatprep.subr.mxu0 0.0
    %2986 = vmatpush2.msra.mxu0 0.0
    %2987 = vmatprep.subr.mxu0 0.0
    %2988 = vmatpush2.msra.mxu0 0.0
    %2989 = vmatprep.mubr.f32.mxu0 0.0
    %2990 = vmatmul.mubr.f32.gmra.mxu0 %v2923
    %v2991 = vpop.f32.mrf.mxu0
    %v2992 = vadd.f32 0.0, %v2991
    %v2993 = vpop.f32.mrf.mxu0
    %2994 = vdwg.mxu0
    %2995 = vmatprep.subr.mxu0 0.0
    %2996 = vmatpush1.msra.mxu0 0.0
    %2997 = vmatprep.subr.mxu0 0.0
    %2998 = vmatpush1.msra.mxu0 0.0
    %2999 = vmatprep.subr.mxu0 0.0
    %3000 = vmatpush1.msra.mxu0 0.0
    %3001 = vmatprep.subr.mxu0 0.0
    %3002 = vmatpush1.msra.mxu0 0.0
    %3003 = vmatprep.subr.mxu0 0.0
    %3004 = vmatpush1.msra.mxu0 0.0
    %3005 = vmatprep.subr.mxu0 0.0
    %3006 = vmatpush1.msra.mxu0 0.0
    %3007 = vmatprep.subr.mxu0 0.0
    %3008 = vmatpush1.msra.mxu0 0.0
    %3009 = vmatprep.subr.mxu0 0.0
    %3010 = vmatpush1.msra.mxu0 0.0
    %3011 = vmatprep.subr.mxu0 0.0
    %3012 = vmatpush1.msra.mxu0 0.0
    %3013 = vmatprep.subr.mxu0 0.0
    %3014 = vmatpush1.msra.mxu0 0.0
    %3015 = vmatprep.subr.mxu0 0.0
    %3016 = vmatpush1.msra.mxu0 0.0
    %3017 = vmatprep.subr.mxu0 0.0
    %3018 = vmatpush1.msra.mxu0 0.0
    %3019 = vmatprep.subr.mxu0 0.0
    %3020 = vmatpush1.msra.mxu0 %v2678
    %3021 = vmatprep.subr.mxu0 0.0
    %3022 = vmatpush1.msra.mxu0 %v2677
    %3023 = vmatprep.subr.mxu0 0.0
    %3024 = vmatpush1.msra.mxu0 %v2676
    %3025 = vmatprep.subr.mxu0 0.0
    %3026 = vmatpush1.msra.mxu0 %v2675
    %3027 = vmatprep.subr.mxu0 0.0
    %3028 = vmatpush2.msra.mxu0 0.0
    %3029 = vmatprep.subr.mxu0 0.0
    %3030 = vmatpush2.msra.mxu0 0.0
    %3031 = vmatprep.subr.mxu0 0.0
    %3032 = vmatpush2.msra.mxu0 0.0
    %3033 = vmatprep.subr.mxu0 0.0
    %3034 = vmatpush2.msra.mxu0 0.0
    %3035 = vmatprep.subr.mxu0 0.0
    %3036 = vmatpush2.msra.mxu0 0.0
    %3037 = vmatprep.subr.mxu0 0.0
    %3038 = vmatpush2.msra.mxu0 0.0
    %3039 = vmatprep.subr.mxu0 0.0
    %3040 = vmatpush2.msra.mxu0 0.0
    %3041 = vmatprep.subr.mxu0 0.0
    %3042 = vmatpush2.msra.mxu0 0.0
    %3043 = vmatprep.subr.mxu0 0.0
    %3044 = vmatpush2.msra.mxu0 0.0
    %3045 = vmatprep.subr.mxu0 0.0
    %3046 = vmatpush2.msra.mxu0 0.0
    %3047 = vmatprep.subr.mxu0 0.0
    %3048 = vmatpush2.msra.mxu0 0.0
    %3049 = vmatprep.subr.mxu0 0.0
    %3050 = vmatpush2.msra.mxu0 0.0
    %3051 = vmatprep.subr.mxu0 0.0
    %3052 = vmatpush2.msra.mxu0 0.0
    %3053 = vmatprep.subr.mxu0 0.0
    %3054 = vmatpush2.msra.mxu0 0.0
    %3055 = vmatprep.subr.mxu0 0.0
    %3056 = vmatpush2.msra.mxu0 0.0
    %3057 = vmatprep.subr.mxu0 0.0
    %3058 = vmatpush2.msra.mxu0 0.0
    %3059 = vmatprep.mubr.f32.mxu0 0.0
    %3060 = vmatmul.mubr.f32.gmra.mxu0 %v2923
    %v3061 = vpop.f32.mrf.mxu0
    %v3062 = vadd.f32 0.0, %v3061
    %v3063 = vpop.f32.mrf.mxu0
    %3064 = vdwg.mxu0
    %3065 = vmatprep.subr.mxu0 0.0
    %3066 = vmatpush1.msra.mxu0 0.0
    %3067 = vmatprep.subr.mxu0 0.0
    %3068 = vmatpush1.msra.mxu0 0.0
    %3069 = vmatprep.subr.mxu0 0.0
    %3070 = vmatpush1.msra.mxu0 0.0
    %3071 = vmatprep.subr.mxu0 0.0
    %3072 = vmatpush1.msra.mxu0 0.0
    %3073 = vmatprep.subr.mxu0 0.0
    %3074 = vmatpush1.msra.mxu0 0.0
    %3075 = vmatprep.subr.mxu0 0.0
    %3076 = vmatpush1.msra.mxu0 0.0
    %3077 = vmatprep.subr.mxu0 0.0
    %3078 = vmatpush1.msra.mxu0 0.0
    %3079 = vmatprep.subr.mxu0 0.0
    %3080 = vmatpush1.msra.mxu0 0.0
    %3081 = vmatprep.subr.mxu0 0.0
    %3082 = vmatpush1.msra.mxu0 0.0
    %3083 = vmatprep.subr.mxu0 0.0
    %3084 = vmatpush1.msra.mxu0 0.0
    %3085 = vmatprep.subr.mxu0 0.0
    %3086 = vmatpush1.msra.mxu0 0.0
    %3087 = vmatprep.subr.mxu0 0.0
    %3088 = vmatpush1.msra.mxu0 0.0
    %3089 = vmatprep.subr.mxu0 0.0
    %3090 = vmatpush1.msra.mxu0 %v2683
    %3091 = vmatprep.subr.mxu0 0.0
    %3092 = vmatpush1.msra.mxu0 %v2682
    %3093 = vmatprep.subr.mxu0 0.0
    %3094 = vmatpush1.msra.mxu0 %v2681
    %3095 = vmatprep.subr.mxu0 0.0
    %3096 = vmatpush1.msra.mxu0 %v2680
    %3097 = vmatprep.subr.mxu0 0.0
    %3098 = vmatpush2.msra.mxu0 0.0
    %3099 = vmatprep.subr.mxu0 0.0
    %3100 = vmatpush2.msra.mxu0 0.0
    %3101 = vmatprep.subr.mxu0 0.0
    %3102 = vmatpush2.msra.mxu0 0.0
    %3103 = vmatprep.subr.mxu0 0.0
    %3104 = vmatpush2.msra.mxu0 0.0
    %3105 = vmatprep.subr.mxu0 0.0
    %3106 = vmatpush2.msra.mxu0 0.0
    %3107 = vmatprep.subr.mxu0 0.0
    %3108 = vmatpush2.msra.mxu0 0.0
    %3109 = vmatprep.subr.mxu0 0.0
    %3110 = vmatpush2.msra.mxu0 0.0
    %3111 = vmatprep.subr.mxu0 0.0
    %3112 = vmatpush2.msra.mxu0 0.0
    %3113 = vmatprep.subr.mxu0 0.0
    %3114 = vmatpush2.msra.mxu0 0.0
    %3115 = vmatprep.subr.mxu0 0.0
    %3116 = vmatpush2.msra.mxu0 0.0
    %3117 = vmatprep.subr.mxu0 0.0
    %3118 = vmatpush2.msra.mxu0 0.0
    %3119 = vmatprep.subr.mxu0 0.0
    %3120 = vmatpush2.msra.mxu0 0.0
    %3121 = vmatprep.subr.mxu0 0.0
    %3122 = vmatpush2.msra.mxu0 0.0
    %3123 = vmatprep.subr.mxu0 0.0
    %3124 = vmatpush2.msra.mxu0 0.0
    %3125 = vmatprep.subr.mxu0 0.0
    %3126 = vmatpush2.msra.mxu0 0.0
    %3127 = vmatprep.subr.mxu0 0.0
    %3128 = vmatpush2.msra.mxu0 0.0
    %3129 = vmatprep.mubr.f32.mxu0 0.0
    %3130 = vmatmul.mubr.f32.gmra.mxu0 %v2923
    %v3131 = vpop.f32.mrf.mxu0
    %v3132 = vadd.f32 %v2690, %v3131
    %v3133 = vpop.f32.mrf.mxu0
    %3134 = vdwg.mxu0
    %v3135 = vadd.f32 %v2400, %v2992
    %v3136 = vxor.u32 %v3135, 2147483648
    %v3137 = vmul.f32 %v3136, 1.442695
    %v3138 = vpow.pop %v3137
    %v3139 = vadd.f32 %v3138, 1.0
    %v3140 = vrcp.pop %v3139
    %v3141 = vmul.f32 1.0, %v3140
    %v3142 = vadd.f32 %v2518, %v3062
    %v3143 = vxor.u32 %v3142, 2147483648
    %v3144 = vmul.f32 %v3143, 1.442695
    %v3145 = vpow.pop %v3144
    %v3146 = vadd.f32 %v3145, 1.0
    %v3147 = vrcp.pop %v3146
    %v3148 = vmul.f32 1.0, %v3147
    %v3149 = vmul.f32 %v3141, %v3132
    %v3150 = vadd.f32 %v2636, %v3149
    %v3151 = vtanh.pop %v3150
    %v3152 = vsub.f32 %v2921, %v3151
    %v3153 = vmul.f32 %v3148, %v3152
    %v3154 = vadd.f32 %v3151, %v3153
    %v3156 = vsel %vm61, %v3154, 0
    %3158 = vmatprep.subr.mxu0 0.0
    %3159 = vmatpush1.msra.mxu0 0.0
    %3160 = vmatprep.subr.mxu0 0.0
    %3161 = vmatpush1.msra.mxu0 0.0
    %3162 = vmatprep.subr.mxu0 0.0
    %3163 = vmatpush1.msra.mxu0 0.0
    %3164 = vmatprep.subr.mxu0 0.0
    %3165 = vmatpush1.msra.mxu0 0.0
    %3166 = vmatprep.subr.mxu0 0.0
    %3167 = vmatpush1.msra.mxu0 0.0
    %3168 = vmatprep.subr.mxu0 0.0
    %3169 = vmatpush1.msra.mxu0 0.0
    %3170 = vmatprep.subr.mxu0 0.0
    %3171 = vmatpush1.msra.mxu0 0.0
    %3172 = vmatprep.subr.mxu0 0.0
    %3173 = vmatpush1.msra.mxu0 0.0
    %3174 = vmatprep.subr.mxu0 0.0
    %3175 = vmatpush1.msra.mxu0 0.0
    %3176 = vmatprep.subr.mxu0 0.0
    %3177 = vmatpush1.msra.mxu0 0.0
    %3178 = vmatprep.subr.mxu0 0.0
    %3179 = vmatpush1.msra.mxu0 0.0
    %3180 = vmatprep.subr.mxu0 0.0
    %3181 = vmatpush1.msra.mxu0 0.0
    %3182 = vmatprep.subr.mxu0 0.0
    %3183 = vmatpush1.msra.mxu0 %v2673
    %3184 = vmatprep.subr.mxu0 0.0
    %3185 = vmatpush1.msra.mxu0 %v2672
    %3186 = vmatprep.subr.mxu0 0.0
    %3187 = vmatpush1.msra.mxu0 %v2671
    %3188 = vmatprep.subr.mxu0 0.0
    %3189 = vmatpush1.msra.mxu0 %v2670
    %3190 = vmatprep.subr.mxu0 0.0
    %3191 = vmatpush2.msra.mxu0 0.0
    %3192 = vmatprep.subr.mxu0 0.0
    %3193 = vmatpush2.msra.mxu0 0.0
    %3194 = vmatprep.subr.mxu0 0.0
    %3195 = vmatpush2.msra.mxu0 0.0
    %3196 = vmatprep.subr.mxu0 0.0
    %3197 = vmatpush2.msra.mxu0 0.0
    %3198 = vmatprep.subr.mxu0 0.0
    %3199 = vmatpush2.msra.mxu0 0.0
    %3200 = vmatprep.subr.mxu0 0.0
    %3201 = vmatpush2.msra.mxu0 0.0
    %3202 = vmatprep.subr.mxu0 0.0
    %3203 = vmatpush2.msra.mxu0 0.0
    %3204 = vmatprep.subr.mxu0 0.0
    %3205 = vmatpush2.msra.mxu0 0.0
    %3206 = vmatprep.subr.mxu0 0.0
    %3207 = vmatpush2.msra.mxu0 0.0
    %3208 = vmatprep.subr.mxu0 0.0
    %3209 = vmatpush2.msra.mxu0 0.0
    %3210 = vmatprep.subr.mxu0 0.0
    %3211 = vmatpush2.msra.mxu0 0.0
    %3212 = vmatprep.subr.mxu0 0.0
    %3213 = vmatpush2.msra.mxu0 0.0
    %3214 = vmatprep.subr.mxu0 0.0
    %3215 = vmatpush2.msra.mxu0 0.0
    %3216 = vmatprep.subr.mxu0 0.0
    %3217 = vmatpush2.msra.mxu0 0.0
    %3218 = vmatprep.subr.mxu0 0.0
    %3219 = vmatpush2.msra.mxu0 0.0
    %3220 = vmatprep.subr.mxu0 0.0
    %3221 = vmatpush2.msra.mxu0 0.0
    %3222 = vmatprep.mubr.f32.mxu0 0.0
    %3223 = vmatmul.mubr.f32.gmra.mxu0 %v3156
    %v3224 = vpop.f32.mrf.mxu0
    %v3225 = vadd.f32 0.0, %v3224
    %v3226 = vpop.f32.mrf.mxu0
    %3227 = vdwg.mxu0
    %3228 = vmatprep.subr.mxu0 0.0
    %3229 = vmatpush1.msra.mxu0 0.0
    %3230 = vmatprep.subr.mxu0 0.0
    %3231 = vmatpush1.msra.mxu0 0.0
    %3232 = vmatprep.subr.mxu0 0.0
    %3233 = vmatpush1.msra.mxu0 0.0
    %3234 = vmatprep.subr.mxu0 0.0
    %3235 = vmatpush1.msra.mxu0 0.0
    %3236 = vmatprep.subr.mxu0 0.0
    %3237 = vmatpush1.msra.mxu0 0.0
    %3238 = vmatprep.subr.mxu0 0.0
    %3239 = vmatpush1.msra.mxu0 0.0
    %3240 = vmatprep.subr.mxu0 0.0
    %3241 = vmatpush1.msra.mxu0 0.0
    %3242 = vmatprep.subr.mxu0 0.0
    %3243 = vmatpush1.msra.mxu0 0.0
    %3244 = vmatprep.subr.mxu0 0.0
    %3245 = vmatpush1.msra.mxu0 0.0
    %3246 = vmatprep.subr.mxu0 0.0
    %3247 = vmatpush1.msra.mxu0 0.0
    %3248 = vmatprep.subr.mxu0 0.0
    %3249 = vmatpush1.msra.mxu0 0.0
    %3250 = vmatprep.subr.mxu0 0.0
    %3251 = vmatpush1.msra.mxu0 0.0
    %3252 = vmatprep.subr.mxu0 0.0
    %3253 = vmatpush1.msra.mxu0 %v2678
    %3254 = vmatprep.subr.mxu0 0.0
    %3255 = vmatpush1.msra.mxu0 %v2677
    %3256 = vmatprep.subr.mxu0 0.0
    %3257 = vmatpush1.msra.mxu0 %v2676
    %3258 = vmatprep.subr.mxu0 0.0
    %3259 = vmatpush1.msra.mxu0 %v2675
    %3260 = vmatprep.subr.mxu0 0.0
    %3261 = vmatpush2.msra.mxu0 0.0
    %3262 = vmatprep.subr.mxu0 0.0
    %3263 = vmatpush2.msra.mxu0 0.0
    %3264 = vmatprep.subr.mxu0 0.0
    %3265 = vmatpush2.msra.mxu0 0.0
    %3266 = vmatprep.subr.mxu0 0.0
    %3267 = vmatpush2.msra.mxu0 0.0
    %3268 = vmatprep.subr.mxu0 0.0
    %3269 = vmatpush2.msra.mxu0 0.0
    %3270 = vmatprep.subr.mxu0 0.0
    %3271 = vmatpush2.msra.mxu0 0.0
    %3272 = vmatprep.subr.mxu0 0.0
    %3273 = vmatpush2.msra.mxu0 0.0
    %3274 = vmatprep.subr.mxu0 0.0
    %3275 = vmatpush2.msra.mxu0 0.0
    %3276 = vmatprep.subr.mxu0 0.0
    %3277 = vmatpush2.msra.mxu0 0.0
    %3278 = vmatprep.subr.mxu0 0.0
    %3279 = vmatpush2.msra.mxu0 0.0
    %3280 = vmatprep.subr.mxu0 0.0
    %3281 = vmatpush2.msra.mxu0 0.0
    %3282 = vmatprep.subr.mxu0 0.0
    %3283 = vmatpush2.msra.mxu0 0.0
    %3284 = vmatprep.subr.mxu0 0.0
    %3285 = vmatpush2.msra.mxu0 0.0
    %3286 = vmatprep.subr.mxu0 0.0
    %3287 = vmatpush2.msra.mxu0 0.0
    %3288 = vmatprep.subr.mxu0 0.0
    %3289 = vmatpush2.msra.mxu0 0.0
    %3290 = vmatprep.subr.mxu0 0.0
    %3291 = vmatpush2.msra.mxu0 0.0
    %3292 = vmatprep.mubr.f32.mxu0 0.0
    %3293 = vmatmul.mubr.f32.gmra.mxu0 %v3156
    %v3294 = vpop.f32.mrf.mxu0
    %v3295 = vadd.f32 0.0, %v3294
    %v3296 = vpop.f32.mrf.mxu0
    %3297 = vdwg.mxu0
    %3298 = vmatprep.subr.mxu0 0.0
    %3299 = vmatpush1.msra.mxu0 0.0
    %3300 = vmatprep.subr.mxu0 0.0
    %3301 = vmatpush1.msra.mxu0 0.0
    %3302 = vmatprep.subr.mxu0 0.0
    %3303 = vmatpush1.msra.mxu0 0.0
    %3304 = vmatprep.subr.mxu0 0.0
    %3305 = vmatpush1.msra.mxu0 0.0
    %3306 = vmatprep.subr.mxu0 0.0
    %3307 = vmatpush1.msra.mxu0 0.0
    %3308 = vmatprep.subr.mxu0 0.0
    %3309 = vmatpush1.msra.mxu0 0.0
    %3310 = vmatprep.subr.mxu0 0.0
    %3311 = vmatpush1.msra.mxu0 0.0
    %3312 = vmatprep.subr.mxu0 0.0
    %3313 = vmatpush1.msra.mxu0 0.0
    %3314 = vmatprep.subr.mxu0 0.0
    %3315 = vmatpush1.msra.mxu0 0.0
    %3316 = vmatprep.subr.mxu0 0.0
    %3317 = vmatpush1.msra.mxu0 0.0
    %3318 = vmatprep.subr.mxu0 0.0
    %3319 = vmatpush1.msra.mxu0 0.0
    %3320 = vmatprep.subr.mxu0 0.0
    %3321 = vmatpush1.msra.mxu0 0.0
    %3322 = vmatprep.subr.mxu0 0.0
    %3323 = vmatpush1.msra.mxu0 %v2683
    %3324 = vmatprep.subr.mxu0 0.0
    %3325 = vmatpush1.msra.mxu0 %v2682
    %3326 = vmatprep.subr.mxu0 0.0
    %3327 = vmatpush1.msra.mxu0 %v2681
    %3328 = vmatprep.subr.mxu0 0.0
    %3329 = vmatpush1.msra.mxu0 %v2680
    %3330 = vmatprep.subr.mxu0 0.0
    %3331 = vmatpush2.msra.mxu0 0.0
    %3332 = vmatprep.subr.mxu0 0.0
    %3333 = vmatpush2.msra.mxu0 0.0
    %3334 = vmatprep.subr.mxu0 0.0
    %3335 = vmatpush2.msra.mxu0 0.0
    %3336 = vmatprep.subr.mxu0 0.0
    %3337 = vmatpush2.msra.mxu0 0.0
    %3338 = vmatprep.subr.mxu0 0.0
    %3339 = vmatpush2.msra.mxu0 0.0
    %3340 = vmatprep.subr.mxu0 0.0
    %3341 = vmatpush2.msra.mxu0 0.0
    %3342 = vmatprep.subr.mxu0 0.0
    %3343 = vmatpush2.msra.mxu0 0.0
    %3344 = vmatprep.subr.mxu0 0.0
    %3345 = vmatpush2.msra.mxu0 0.0
    %3346 = vmatprep.subr.mxu0 0.0
    %3347 = vmatpush2.msra.mxu0 0.0
    %3348 = vmatprep.subr.mxu0 0.0
    %3349 = vmatpush2.msra.mxu0 0.0
    %3350 = vmatprep.subr.mxu0 0.0
    %3351 = vmatpush2.msra.mxu0 0.0
    %3352 = vmatprep.subr.mxu0 0.0
    %3353 = vmatpush2.msra.mxu0 0.0
    %3354 = vmatprep.subr.mxu0 0.0
    %3355 = vmatpush2.msra.mxu0 0.0
    %3356 = vmatprep.subr.mxu0 0.0
    %3357 = vmatpush2.msra.mxu0 0.0
    %3358 = vmatprep.subr.mxu0 0.0
    %3359 = vmatpush2.msra.mxu0 0.0
    %3360 = vmatprep.subr.mxu0 0.0
    %3361 = vmatpush2.msra.mxu0 0.0
    %3362 = vmatprep.mubr.f32.mxu0 0.0
    %3363 = vmatmul.mubr.f32.gmra.mxu0 %v3156
    %v3364 = vpop.f32.mrf.mxu0
    %v3365 = vadd.f32 %v2690, %v3364
    %v3366 = vpop.f32.mrf.mxu0
    %3367 = vdwg.mxu0
    %v3368 = vadd.f32 %v2405, %v3225
    %v3369 = vxor.u32 %v3368, 2147483648
    %v3370 = vmul.f32 %v3369, 1.442695
    %v3371 = vpow.pop %v3370
    %v3372 = vadd.f32 %v3371, 1.0
    %v3373 = vrcp.pop %v3372
    %v3374 = vmul.f32 1.0, %v3373
    %v3375 = vadd.f32 %v2523, %v3295
    %v3376 = vxor.u32 %v3375, 2147483648
    %v3377 = vmul.f32 %v3376, 1.442695
    %v3378 = vpow.pop %v3377
    %v3379 = vadd.f32 %v3378, 1.0
    %v3380 = vrcp.pop %v3379
    %v3381 = vmul.f32 1.0, %v3380
    %v3382 = vmul.f32 %v3374, %v3365
    %v3383 = vadd.f32 %v2641, %v3382
    %v3384 = vtanh.pop %v3383
    %v3385 = vsub.f32 %v3154, %v3384
    %v3386 = vmul.f32 %v3381, %v3385
    %v3387 = vadd.f32 %v3384, %v3386
    %v3389 = vsel %vm61, %v3387, 0
    %3391 = vmatprep.subr.mxu0 0.0
    %3392 = vmatpush1.msra.mxu0 0.0
    %3393 = vmatprep.subr.mxu0 0.0
    %3394 = vmatpush1.msra.mxu0 0.0
    %3395 = vmatprep.subr.mxu0 0.0
    %3396 = vmatpush1.msra.mxu0 0.0
    %3397 = vmatprep.subr.mxu0 0.0
    %3398 = vmatpush1.msra.mxu0 0.0
    %3399 = vmatprep.subr.mxu0 0.0
    %3400 = vmatpush1.msra.mxu0 0.0
    %3401 = vmatprep.subr.mxu0 0.0
    %3402 = vmatpush1.msra.mxu0 0.0
    %3403 = vmatprep.subr.mxu0 0.0
    %3404 = vmatpush1.msra.mxu0 0.0
    %3405 = vmatprep.subr.mxu0 0.0
    %3406 = vmatpush1.msra.mxu0 0.0
    %3407 = vmatprep.subr.mxu0 0.0
    %3408 = vmatpush1.msra.mxu0 0.0
    %3409 = vmatprep.subr.mxu0 0.0
    %3410 = vmatpush1.msra.mxu0 0.0
    %3411 = vmatprep.subr.mxu0 0.0
    %3412 = vmatpush1.msra.mxu0 0.0
    %3413 = vmatprep.subr.mxu0 0.0
    %3414 = vmatpush1.msra.mxu0 0.0
    %3415 = vmatprep.subr.mxu0 0.0
    %3416 = vmatpush1.msra.mxu0 %v2673
    %3417 = vmatprep.subr.mxu0 0.0
    %3418 = vmatpush1.msra.mxu0 %v2672
    %3419 = vmatprep.subr.mxu0 0.0
    %3420 = vmatpush1.msra.mxu0 %v2671
    %3421 = vmatprep.subr.mxu0 0.0
    %3422 = vmatpush1.msra.mxu0 %v2670
    %3423 = vmatprep.subr.mxu0 0.0
    %3424 = vmatpush2.msra.mxu0 0.0
    %3425 = vmatprep.subr.mxu0 0.0
    %3426 = vmatpush2.msra.mxu0 0.0
    %3427 = vmatprep.subr.mxu0 0.0
    %3428 = vmatpush2.msra.mxu0 0.0
    %3429 = vmatprep.subr.mxu0 0.0
    %3430 = vmatpush2.msra.mxu0 0.0
    %3431 = vmatprep.subr.mxu0 0.0
    %3432 = vmatpush2.msra.mxu0 0.0
    %3433 = vmatprep.subr.mxu0 0.0
    %3434 = vmatpush2.msra.mxu0 0.0
    %3435 = vmatprep.subr.mxu0 0.0
    %3436 = vmatpush2.msra.mxu0 0.0
    %3437 = vmatprep.subr.mxu0 0.0
    %3438 = vmatpush2.msra.mxu0 0.0
    %3439 = vmatprep.subr.mxu0 0.0
    %3440 = vmatpush2.msra.mxu0 0.0
    %3441 = vmatprep.subr.mxu0 0.0
    %3442 = vmatpush2.msra.mxu0 0.0
    %3443 = vmatprep.subr.mxu0 0.0
    %3444 = vmatpush2.msra.mxu0 0.0
    %3445 = vmatprep.subr.mxu0 0.0
    %3446 = vmatpush2.msra.mxu0 0.0
    %3447 = vmatprep.subr.mxu0 0.0
    %3448 = vmatpush2.msra.mxu0 0.0
    %3449 = vmatprep.subr.mxu0 0.0
    %3450 = vmatpush2.msra.mxu0 0.0
    %3451 = vmatprep.subr.mxu0 0.0
    %3452 = vmatpush2.msra.mxu0 0.0
    %3453 = vmatprep.subr.mxu0 0.0
    %3454 = vmatpush2.msra.mxu0 0.0
    %3455 = vmatprep.mubr.f32.mxu0 0.0
    %3456 = vmatmul.mubr.f32.gmra.mxu0 %v3389
    %v3457 = vpop.f32.mrf.mxu0
    %v3458 = vadd.f32 0.0, %v3457
    %v3459 = vpop.f32.mrf.mxu0
    %3460 = vdwg.mxu0
    %3461 = vmatprep.subr.mxu0 0.0
    %3462 = vmatpush1.msra.mxu0 0.0
    %3463 = vmatprep.subr.mxu0 0.0
    %3464 = vmatpush1.msra.mxu0 0.0
    %3465 = vmatprep.subr.mxu0 0.0
    %3466 = vmatpush1.msra.mxu0 0.0
    %3467 = vmatprep.subr.mxu0 0.0
    %3468 = vmatpush1.msra.mxu0 0.0
    %3469 = vmatprep.subr.mxu0 0.0
    %3470 = vmatpush1.msra.mxu0 0.0
    %3471 = vmatprep.subr.mxu0 0.0
    %3472 = vmatpush1.msra.mxu0 0.0
    %3473 = vmatprep.subr.mxu0 0.0
    %3474 = vmatpush1.msra.mxu0 0.0
    %3475 = vmatprep.subr.mxu0 0.0
    %3476 = vmatpush1.msra.mxu0 0.0
    %3477 = vmatprep.subr.mxu0 0.0
    %3478 = vmatpush1.msra.mxu0 0.0
    %3479 = vmatprep.subr.mxu0 0.0
    %3480 = vmatpush1.msra.mxu0 0.0
    %3481 = vmatprep.subr.mxu0 0.0
    %3482 = vmatpush1.msra.mxu0 0.0
    %3483 = vmatprep.subr.mxu0 0.0
    %3484 = vmatpush1.msra.mxu0 0.0
    %3485 = vmatprep.subr.mxu0 0.0
    %3486 = vmatpush1.msra.mxu0 %v2678
    %3487 = vmatprep.subr.mxu0 0.0
    %3488 = vmatpush1.msra.mxu0 %v2677
    %3489 = vmatprep.subr.mxu0 0.0
    %3490 = vmatpush1.msra.mxu0 %v2676
    %3491 = vmatprep.subr.mxu0 0.0
    %3492 = vmatpush1.msra.mxu0 %v2675
    %3493 = vmatprep.subr.mxu0 0.0
    %3494 = vmatpush2.msra.mxu0 0.0
    %3495 = vmatprep.subr.mxu0 0.0
    %3496 = vmatpush2.msra.mxu0 0.0
    %3497 = vmatprep.subr.mxu0 0.0
    %3498 = vmatpush2.msra.mxu0 0.0
    %3499 = vmatprep.subr.mxu0 0.0
    %3500 = vmatpush2.msra.mxu0 0.0
    %3501 = vmatprep.subr.mxu0 0.0
    %3502 = vmatpush2.msra.mxu0 0.0
    %3503 = vmatprep.subr.mxu0 0.0
    %3504 = vmatpush2.msra.mxu0 0.0
    %3505 = vmatprep.subr.mxu0 0.0
    %3506 = vmatpush2.msra.mxu0 0.0
    %3507 = vmatprep.subr.mxu0 0.0
    %3508 = vmatpush2.msra.mxu0 0.0
    %3509 = vmatprep.subr.mxu0 0.0
    %3510 = vmatpush2.msra.mxu0 0.0
    %3511 = vmatprep.subr.mxu0 0.0
    %3512 = vmatpush2.msra.mxu0 0.0
    %3513 = vmatprep.subr.mxu0 0.0
    %3514 = vmatpush2.msra.mxu0 0.0
    %3515 = vmatprep.subr.mxu0 0.0
    %3516 = vmatpush2.msra.mxu0 0.0
    %3517 = vmatprep.subr.mxu0 0.0
    %3518 = vmatpush2.msra.mxu0 0.0
    %3519 = vmatprep.subr.mxu0 0.0
    %3520 = vmatpush2.msra.mxu0 0.0
    %3521 = vmatprep.subr.mxu0 0.0
    %3522 = vmatpush2.msra.mxu0 0.0
    %3523 = vmatprep.subr.mxu0 0.0
    %3524 = vmatpush2.msra.mxu0 0.0
    %3525 = vmatprep.mubr.f32.mxu0 0.0
    %3526 = vmatmul.mubr.f32.gmra.mxu0 %v3389
    %v3527 = vpop.f32.mrf.mxu0
    %v3528 = vadd.f32 0.0, %v3527
    %v3529 = vpop.f32.mrf.mxu0
    %3530 = vdwg.mxu0
    %3531 = vmatprep.subr.mxu0 0.0
    %3532 = vmatpush1.msra.mxu0 0.0
    %3533 = vmatprep.subr.mxu0 0.0
    %3534 = vmatpush1.msra.mxu0 0.0
    %3535 = vmatprep.subr.mxu0 0.0
    %3536 = vmatpush1.msra.mxu0 0.0
    %3537 = vmatprep.subr.mxu0 0.0
    %3538 = vmatpush1.msra.mxu0 0.0
    %3539 = vmatprep.subr.mxu0 0.0
    %3540 = vmatpush1.msra.mxu0 0.0
    %3541 = vmatprep.subr.mxu0 0.0
    %3542 = vmatpush1.msra.mxu0 0.0
    %3543 = vmatprep.subr.mxu0 0.0
    %3544 = vmatpush1.msra.mxu0 0.0
    %3545 = vmatprep.subr.mxu0 0.0
    %3546 = vmatpush1.msra.mxu0 0.0
    %3547 = vmatprep.subr.mxu0 0.0
    %3548 = vmatpush1.msra.mxu0 0.0
    %3549 = vmatprep.subr.mxu0 0.0
    %3550 = vmatpush1.msra.mxu0 0.0
    %3551 = vmatprep.subr.mxu0 0.0
    %3552 = vmatpush1.msra.mxu0 0.0
    %3553 = vmatprep.subr.mxu0 0.0
    %3554 = vmatpush1.msra.mxu0 0.0
    %3555 = vmatprep.subr.mxu0 0.0
    %3556 = vmatpush1.msra.mxu0 %v2683
    %3557 = vmatprep.subr.mxu0 0.0
    %3558 = vmatpush1.msra.mxu0 %v2682
    %3559 = vmatprep.subr.mxu0 0.0
    %3560 = vmatpush1.msra.mxu0 %v2681
    %3561 = vmatprep.subr.mxu0 0.0
    %3562 = vmatpush1.msra.mxu0 %v2680
    %3563 = vmatprep.subr.mxu0 0.0
    %3564 = vmatpush2.msra.mxu0 0.0
    %3565 = vmatprep.subr.mxu0 0.0
    %3566 = vmatpush2.msra.mxu0 0.0
    %3567 = vmatprep.subr.mxu0 0.0
    %3568 = vmatpush2.msra.mxu0 0.0
    %3569 = vmatprep.subr.mxu0 0.0
    %3570 = vmatpush2.msra.mxu0 0.0
    %3571 = vmatprep.subr.mxu0 0.0
    %3572 = vmatpush2.msra.mxu0 0.0
    %3573 = vmatprep.subr.mxu0 0.0
    %3574 = vmatpush2.msra.mxu0 0.0
    %3575 = vmatprep.subr.mxu0 0.0
    %3576 = vmatpush2.msra.mxu0 0.0
    %3577 = vmatprep.subr.mxu0 0.0
    %3578 = vmatpush2.msra.mxu0 0.0
    %3579 = vmatprep.subr.mxu0 0.0
    %3580 = vmatpush2.msra.mxu0 0.0
    %3581 = vmatprep.subr.mxu0 0.0
    %3582 = vmatpush2.msra.mxu0 0.0
    %3583 = vmatprep.subr.mxu0 0.0
    %3584 = vmatpush2.msra.mxu0 0.0
    %3585 = vmatprep.subr.mxu0 0.0
    %3586 = vmatpush2.msra.mxu0 0.0
    %3587 = vmatprep.subr.mxu0 0.0
    %3588 = vmatpush2.msra.mxu0 0.0
    %3589 = vmatprep.subr.mxu0 0.0
    %3590 = vmatpush2.msra.mxu0 0.0
    %3591 = vmatprep.subr.mxu0 0.0
    %3592 = vmatpush2.msra.mxu0 0.0
    %3593 = vmatprep.subr.mxu0 0.0
    %3594 = vmatpush2.msra.mxu0 0.0
    %3595 = vmatprep.mubr.f32.mxu0 0.0
    %3596 = vmatmul.mubr.f32.gmra.mxu0 %v3389
    %v3597 = vpop.f32.mrf.mxu0
    %v3598 = vadd.f32 %v2690, %v3597
    %v3599 = vpop.f32.mrf.mxu0
    %3600 = vdwg.mxu0
    %v3601 = vadd.f32 %v2410, %v3458
    %v3602 = vxor.u32 %v3601, 2147483648
    %v3603 = vmul.f32 %v3602, 1.442695
    %v3604 = vpow.pop %v3603
    %v3605 = vadd.f32 %v3604, 1.0
    %v3606 = vrcp.pop %v3605
    %v3607 = vmul.f32 1.0, %v3606
    %v3608 = vadd.f32 %v2528, %v3528
    %v3609 = vxor.u32 %v3608, 2147483648
    %v3610 = vmul.f32 %v3609, 1.442695
    %v3611 = vpow.pop %v3610
    %v3612 = vadd.f32 %v3611, 1.0
    %v3613 = vrcp.pop %v3612
    %v3614 = vmul.f32 1.0, %v3613
    %v3615 = vmul.f32 %v3607, %v3598
    %v3616 = vadd.f32 %v2646, %v3615
    %v3617 = vtanh.pop %v3616
    %v3618 = vsub.f32 %v3387, %v3617
    %v3619 = vmul.f32 %v3614, %v3618
    %v3620 = vadd.f32 %v3617, %v3619
    %v3622 = vsel %vm61, %v3620, 0
    %3624 = vmatprep.subr.mxu0 0.0
    %3625 = vmatpush1.msra.mxu0 0.0
    %3626 = vmatprep.subr.mxu0 0.0
    %3627 = vmatpush1.msra.mxu0 0.0
    %3628 = vmatprep.subr.mxu0 0.0
    %3629 = vmatpush1.msra.mxu0 0.0
    %3630 = vmatprep.subr.mxu0 0.0
    %3631 = vmatpush1.msra.mxu0 0.0
    %3632 = vmatprep.subr.mxu0 0.0
    %3633 = vmatpush1.msra.mxu0 0.0
    %3634 = vmatprep.subr.mxu0 0.0
    %3635 = vmatpush1.msra.mxu0 0.0
    %3636 = vmatprep.subr.mxu0 0.0
    %3637 = vmatpush1.msra.mxu0 0.0
    %3638 = vmatprep.subr.mxu0 0.0
    %3639 = vmatpush1.msra.mxu0 0.0
    %3640 = vmatprep.subr.mxu0 0.0
    %3641 = vmatpush1.msra.mxu0 0.0
    %3642 = vmatprep.subr.mxu0 0.0
    %3643 = vmatpush1.msra.mxu0 0.0
    %3644 = vmatprep.subr.mxu0 0.0
    %3645 = vmatpush1.msra.mxu0 0.0
    %3646 = vmatprep.subr.mxu0 0.0
    %3647 = vmatpush1.msra.mxu0 0.0
    %3648 = vmatprep.subr.mxu0 0.0
    %3649 = vmatpush1.msra.mxu0 %v2673
    %3650 = vmatprep.subr.mxu0 0.0
    %3651 = vmatpush1.msra.mxu0 %v2672
    %3652 = vmatprep.subr.mxu0 0.0
    %3653 = vmatpush1.msra.mxu0 %v2671
    %3654 = vmatprep.subr.mxu0 0.0
    %3655 = vmatpush1.msra.mxu0 %v2670
    %3656 = vmatprep.subr.mxu0 0.0
    %3657 = vmatpush2.msra.mxu0 0.0
    %3658 = vmatprep.subr.mxu0 0.0
    %3659 = vmatpush2.msra.mxu0 0.0
    %3660 = vmatprep.subr.mxu0 0.0
    %3661 = vmatpush2.msra.mxu0 0.0
    %3662 = vmatprep.subr.mxu0 0.0
    %3663 = vmatpush2.msra.mxu0 0.0
    %3664 = vmatprep.subr.mxu0 0.0
    %3665 = vmatpush2.msra.mxu0 0.0
    %3666 = vmatprep.subr.mxu0 0.0
    %3667 = vmatpush2.msra.mxu0 0.0
    %3668 = vmatprep.subr.mxu0 0.0
    %3669 = vmatpush2.msra.mxu0 0.0
    %3670 = vmatprep.subr.mxu0 0.0
    %3671 = vmatpush2.msra.mxu0 0.0
    %3672 = vmatprep.subr.mxu0 0.0
    %3673 = vmatpush2.msra.mxu0 0.0
    %3674 = vmatprep.subr.mxu0 0.0
    %3675 = vmatpush2.msra.mxu0 0.0
    %3676 = vmatprep.subr.mxu0 0.0
    %3677 = vmatpush2.msra.mxu0 0.0
    %3678 = vmatprep.subr.mxu0 0.0
    %3679 = vmatpush2.msra.mxu0 0.0
    %3680 = vmatprep.subr.mxu0 0.0
    %3681 = vmatpush2.msra.mxu0 0.0
    %3682 = vmatprep.subr.mxu0 0.0
    %3683 = vmatpush2.msra.mxu0 0.0
    %3684 = vmatprep.subr.mxu0 0.0
    %3685 = vmatpush2.msra.mxu0 0.0
    %3686 = vmatprep.subr.mxu0 0.0
    %3687 = vmatpush2.msra.mxu0 0.0
    %3688 = vmatprep.mubr.f32.mxu0 0.0
    %3689 = vmatmul.mubr.f32.gmra.mxu0 %v3622
    %v3690 = vpop.f32.mrf.mxu0
    %v3691 = vadd.f32 0.0, %v3690
    %v3692 = vpop.f32.mrf.mxu0
    %3693 = vdwg.mxu0
    %3694 = vmatprep.subr.mxu0 0.0
    %3695 = vmatpush1.msra.mxu0 0.0
    %3696 = vmatprep.subr.mxu0 0.0
    %3697 = vmatpush1.msra.mxu0 0.0
    %3698 = vmatprep.subr.mxu0 0.0
    %3699 = vmatpush1.msra.mxu0 0.0
    %3700 = vmatprep.subr.mxu0 0.0
    %3701 = vmatpush1.msra.mxu0 0.0
    %3702 = vmatprep.subr.mxu0 0.0
    %3703 = vmatpush1.msra.mxu0 0.0
    %3704 = vmatprep.subr.mxu0 0.0
    %3705 = vmatpush1.msra.mxu0 0.0
    %3706 = vmatprep.subr.mxu0 0.0
    %3707 = vmatpush1.msra.mxu0 0.0
    %3708 = vmatprep.subr.mxu0 0.0
    %3709 = vmatpush1.msra.mxu0 0.0
    %3710 = vmatprep.subr.mxu0 0.0
    %3711 = vmatpush1.msra.mxu0 0.0
    %3712 = vmatprep.subr.mxu0 0.0
    %3713 = vmatpush1.msra.mxu0 0.0
    %3714 = vmatprep.subr.mxu0 0.0
    %3715 = vmatpush1.msra.mxu0 0.0
    %3716 = vmatprep.subr.mxu0 0.0
    %3717 = vmatpush1.msra.mxu0 0.0
    %3718 = vmatprep.subr.mxu0 0.0
    %3719 = vmatpush1.msra.mxu0 %v2678
    %3720 = vmatprep.subr.mxu0 0.0
    %3721 = vmatpush1.msra.mxu0 %v2677
    %3722 = vmatprep.subr.mxu0 0.0
    %3723 = vmatpush1.msra.mxu0 %v2676
    %3724 = vmatprep.subr.mxu0 0.0
    %3725 = vmatpush1.msra.mxu0 %v2675
    %3726 = vmatprep.subr.mxu0 0.0
    %3727 = vmatpush2.msra.mxu0 0.0
    %3728 = vmatprep.subr.mxu0 0.0
    %3729 = vmatpush2.msra.mxu0 0.0
    %3730 = vmatprep.subr.mxu0 0.0
    %3731 = vmatpush2.msra.mxu0 0.0
    %3732 = vmatprep.subr.mxu0 0.0
    %3733 = vmatpush2.msra.mxu0 0.0
    %3734 = vmatprep.subr.mxu0 0.0
    %3735 = vmatpush2.msra.mxu0 0.0
    %3736 = vmatprep.subr.mxu0 0.0
    %3737 = vmatpush2.msra.mxu0 0.0
    %3738 = vmatprep.subr.mxu0 0.0
    %3739 = vmatpush2.msra.mxu0 0.0
    %3740 = vmatprep.subr.mxu0 0.0
    %3741 = vmatpush2.msra.mxu0 0.0
    %3742 = vmatprep.subr.mxu0 0.0
    %3743 = vmatpush2.msra.mxu0 0.0
    %3744 = vmatprep.subr.mxu0 0.0
    %3745 = vmatpush2.msra.mxu0 0.0
    %3746 = vmatprep.subr.mxu0 0.0
    %3747 = vmatpush2.msra.mxu0 0.0
    %3748 = vmatprep.subr.mxu0 0.0
    %3749 = vmatpush2.msra.mxu0 0.0
    %3750 = vmatprep.subr.mxu0 0.0
    %3751 = vmatpush2.msra.mxu0 0.0
    %3752 = vmatprep.subr.mxu0 0.0
    %3753 = vmatpush2.msra.mxu0 0.0
    %3754 = vmatprep.subr.mxu0 0.0
    %3755 = vmatpush2.msra.mxu0 0.0
    %3756 = vmatprep.subr.mxu0 0.0
    %3757 = vmatpush2.msra.mxu0 0.0
    %3758 = vmatprep.mubr.f32.mxu0 0.0
    %3759 = vmatmul.mubr.f32.gmra.mxu0 %v3622
    %v3760 = vpop.f32.mrf.mxu0
    %v3761 = vadd.f32 0.0, %v3760
    %v3762 = vpop.f32.mrf.mxu0
    %3763 = vdwg.mxu0
    %3764 = vmatprep.subr.mxu0 0.0
    %3765 = vmatpush1.msra.mxu0 0.0
    %3766 = vmatprep.subr.mxu0 0.0
    %3767 = vmatpush1.msra.mxu0 0.0
    %3768 = vmatprep.subr.mxu0 0.0
    %3769 = vmatpush1.msra.mxu0 0.0
    %3770 = vmatprep.subr.mxu0 0.0
    %3771 = vmatpush1.msra.mxu0 0.0
    %3772 = vmatprep.subr.mxu0 0.0
    %3773 = vmatpush1.msra.mxu0 0.0
    %3774 = vmatprep.subr.mxu0 0.0
    %3775 = vmatpush1.msra.mxu0 0.0
    %3776 = vmatprep.subr.mxu0 0.0
    %3777 = vmatpush1.msra.mxu0 0.0
    %3778 = vmatprep.subr.mxu0 0.0
    %3779 = vmatpush1.msra.mxu0 0.0
    %3780 = vmatprep.subr.mxu0 0.0
    %3781 = vmatpush1.msra.mxu0 0.0
    %3782 = vmatprep.subr.mxu0 0.0
    %3783 = vmatpush1.msra.mxu0 0.0
    %3784 = vmatprep.subr.mxu0 0.0
    %3785 = vmatpush1.msra.mxu0 0.0
    %3786 = vmatprep.subr.mxu0 0.0
    %3787 = vmatpush1.msra.mxu0 0.0
    %3788 = vmatprep.subr.mxu0 0.0
    %3789 = vmatpush1.msra.mxu0 %v2683
    %3790 = vmatprep.subr.mxu0 0.0
    %3791 = vmatpush1.msra.mxu0 %v2682
    %3792 = vmatprep.subr.mxu0 0.0
    %3793 = vmatpush1.msra.mxu0 %v2681
    %3794 = vmatprep.subr.mxu0 0.0
    %3795 = vmatpush1.msra.mxu0 %v2680
    %3796 = vmatprep.subr.mxu0 0.0
    %3797 = vmatpush2.msra.mxu0 0.0
    %3798 = vmatprep.subr.mxu0 0.0
    %3799 = vmatpush2.msra.mxu0 0.0
    %3800 = vmatprep.subr.mxu0 0.0
    %3801 = vmatpush2.msra.mxu0 0.0
    %3802 = vmatprep.subr.mxu0 0.0
    %3803 = vmatpush2.msra.mxu0 0.0
    %3804 = vmatprep.subr.mxu0 0.0
    %3805 = vmatpush2.msra.mxu0 0.0
    %3806 = vmatprep.subr.mxu0 0.0
    %3807 = vmatpush2.msra.mxu0 0.0
    %3808 = vmatprep.subr.mxu0 0.0
    %3809 = vmatpush2.msra.mxu0 0.0
    %3810 = vmatprep.subr.mxu0 0.0
    %3811 = vmatpush2.msra.mxu0 0.0
    %3812 = vmatprep.subr.mxu0 0.0
    %3813 = vmatpush2.msra.mxu0 0.0
    %3814 = vmatprep.subr.mxu0 0.0
    %3815 = vmatpush2.msra.mxu0 0.0
    %3816 = vmatprep.subr.mxu0 0.0
    %3817 = vmatpush2.msra.mxu0 0.0
    %3818 = vmatprep.subr.mxu0 0.0
    %3819 = vmatpush2.msra.mxu0 0.0
    %3820 = vmatprep.subr.mxu0 0.0
    %3821 = vmatpush2.msra.mxu0 0.0
    %3822 = vmatprep.subr.mxu0 0.0
    %3823 = vmatpush2.msra.mxu0 0.0
    %3824 = vmatprep.subr.mxu0 0.0
    %3825 = vmatpush2.msra.mxu0 0.0
    %3826 = vmatprep.subr.mxu0 0.0
    %3827 = vmatpush2.msra.mxu0 0.0
    %3828 = vmatprep.mubr.f32.mxu0 0.0
    %3829 = vmatmul.mubr.f32.gmra.mxu0 %v3622
    %v3830 = vpop.f32.mrf.mxu0
    %v3831 = vadd.f32 %v2690, %v3830
    %v3832 = vpop.f32.mrf.mxu0
    %3833 = vdwg.mxu0
    %v3834 = vadd.f32 %v2415, %v3691
    %v3835 = vxor.u32 %v3834, 2147483648
    %v3836 = vmul.f32 %v3835, 1.442695
    %v3837 = vpow.pop %v3836
    %v3838 = vadd.f32 %v3837, 1.0
    %v3839 = vrcp.pop %v3838
    %v3840 = vmul.f32 1.0, %v3839
    %v3841 = vadd.f32 %v2533, %v3761
    %v3842 = vxor.u32 %v3841, 2147483648
    %v3843 = vmul.f32 %v3842, 1.442695
    %v3844 = vpow.pop %v3843
    %v3845 = vadd.f32 %v3844, 1.0
    %v3846 = vrcp.pop %v3845
    %v3847 = vmul.f32 1.0, %v3846
    %v3848 = vmul.f32 %v3840, %v3831
    %v3849 = vadd.f32 %v2651, %v3848
    %v3850 = vtanh.pop %v3849
    %v3851 = vsub.f32 %v3620, %v3850
    %v3852 = vmul.f32 %v3847, %v3851
    %v3853 = vadd.f32 %v3850, %v3852
    %v3855 = vsel %vm61, %v3853, 0
    %3857 = vmatprep.subr.mxu0 0.0
    %3858 = vmatpush1.msra.mxu0 0.0
    %3859 = vmatprep.subr.mxu0 0.0
    %3860 = vmatpush1.msra.mxu0 0.0
    %3861 = vmatprep.subr.mxu0 0.0
    %3862 = vmatpush1.msra.mxu0 0.0
    %3863 = vmatprep.subr.mxu0 0.0
    %3864 = vmatpush1.msra.mxu0 0.0
    %3865 = vmatprep.subr.mxu0 0.0
    %3866 = vmatpush1.msra.mxu0 0.0
    %3867 = vmatprep.subr.mxu0 0.0
    %3868 = vmatpush1.msra.mxu0 0.0
    %3869 = vmatprep.subr.mxu0 0.0
    %3870 = vmatpush1.msra.mxu0 0.0
    %3871 = vmatprep.subr.mxu0 0.0
    %3872 = vmatpush1.msra.mxu0 0.0
    %3873 = vmatprep.subr.mxu0 0.0
    %3874 = vmatpush1.msra.mxu0 0.0
    %3875 = vmatprep.subr.mxu0 0.0
    %3876 = vmatpush1.msra.mxu0 0.0
    %3877 = vmatprep.subr.mxu0 0.0
    %3878 = vmatpush1.msra.mxu0 0.0
    %3879 = vmatprep.subr.mxu0 0.0
    %3880 = vmatpush1.msra.mxu0 0.0
    %3881 = vmatprep.subr.mxu0 0.0
    %3882 = vmatpush1.msra.mxu0 %v2673
    %3883 = vmatprep.subr.mxu0 0.0
    %3884 = vmatpush1.msra.mxu0 %v2672
    %3885 = vmatprep.subr.mxu0 0.0
    %3886 = vmatpush1.msra.mxu0 %v2671
    %3887 = vmatprep.subr.mxu0 0.0
    %3888 = vmatpush1.msra.mxu0 %v2670
    %3889 = vmatprep.subr.mxu0 0.0
    %3890 = vmatpush2.msra.mxu0 0.0
    %3891 = vmatprep.subr.mxu0 0.0
    %3892 = vmatpush2.msra.mxu0 0.0
    %3893 = vmatprep.subr.mxu0 0.0
    %3894 = vmatpush2.msra.mxu0 0.0
    %3895 = vmatprep.subr.mxu0 0.0
    %3896 = vmatpush2.msra.mxu0 0.0
    %3897 = vmatprep.subr.mxu0 0.0
    %3898 = vmatpush2.msra.mxu0 0.0
    %3899 = vmatprep.subr.mxu0 0.0
    %3900 = vmatpush2.msra.mxu0 0.0
    %3901 = vmatprep.subr.mxu0 0.0
    %3902 = vmatpush2.msra.mxu0 0.0
    %3903 = vmatprep.subr.mxu0 0.0
    %3904 = vmatpush2.msra.mxu0 0.0
    %3905 = vmatprep.subr.mxu0 0.0
    %3906 = vmatpush2.msra.mxu0 0.0
    %3907 = vmatprep.subr.mxu0 0.0
    %3908 = vmatpush2.msra.mxu0 0.0
    %3909 = vmatprep.subr.mxu0 0.0
    %3910 = vmatpush2.msra.mxu0 0.0
    %3911 = vmatprep.subr.mxu0 0.0
    %3912 = vmatpush2.msra.mxu0 0.0
    %3913 = vmatprep.subr.mxu0 0.0
    %3914 = vmatpush2.msra.mxu0 0.0
    %3915 = vmatprep.subr.mxu0 0.0
    %3916 = vmatpush2.msra.mxu0 0.0
    %3917 = vmatprep.subr.mxu0 0.0
    %3918 = vmatpush2.msra.mxu0 0.0
    %3919 = vmatprep.subr.mxu0 0.0
    %3920 = vmatpush2.msra.mxu0 0.0
    %3921 = vmatprep.mubr.f32.mxu0 0.0
    %3922 = vmatmul.mubr.f32.gmra.mxu0 %v3855
    %v3923 = vpop.f32.mrf.mxu0
    %v3924 = vadd.f32 0.0, %v3923
    %v3925 = vpop.f32.mrf.mxu0
    %3926 = vdwg.mxu0
    %3927 = vmatprep.subr.mxu0 0.0
    %3928 = vmatpush1.msra.mxu0 0.0
    %3929 = vmatprep.subr.mxu0 0.0
    %3930 = vmatpush1.msra.mxu0 0.0
    %3931 = vmatprep.subr.mxu0 0.0
    %3932 = vmatpush1.msra.mxu0 0.0
    %3933 = vmatprep.subr.mxu0 0.0
    %3934 = vmatpush1.msra.mxu0 0.0
    %3935 = vmatprep.subr.mxu0 0.0
    %3936 = vmatpush1.msra.mxu0 0.0
    %3937 = vmatprep.subr.mxu0 0.0
    %3938 = vmatpush1.msra.mxu0 0.0
    %3939 = vmatprep.subr.mxu0 0.0
    %3940 = vmatpush1.msra.mxu0 0.0
    %3941 = vmatprep.subr.mxu0 0.0
    %3942 = vmatpush1.msra.mxu0 0.0
    %3943 = vmatprep.subr.mxu0 0.0
    %3944 = vmatpush1.msra.mxu0 0.0
    %3945 = vmatprep.subr.mxu0 0.0
    %3946 = vmatpush1.msra.mxu0 0.0
    %3947 = vmatprep.subr.mxu0 0.0
    %3948 = vmatpush1.msra.mxu0 0.0
    %3949 = vmatprep.subr.mxu0 0.0
    %3950 = vmatpush1.msra.mxu0 0.0
    %3951 = vmatprep.subr.mxu0 0.0
    %3952 = vmatpush1.msra.mxu0 %v2678
    %3953 = vmatprep.subr.mxu0 0.0
    %3954 = vmatpush1.msra.mxu0 %v2677
    %3955 = vmatprep.subr.mxu0 0.0
    %3956 = vmatpush1.msra.mxu0 %v2676
    %3957 = vmatprep.subr.mxu0 0.0
    %3958 = vmatpush1.msra.mxu0 %v2675
    %3959 = vmatprep.subr.mxu0 0.0
    %3960 = vmatpush2.msra.mxu0 0.0
    %3961 = vmatprep.subr.mxu0 0.0
    %3962 = vmatpush2.msra.mxu0 0.0
    %3963 = vmatprep.subr.mxu0 0.0
    %3964 = vmatpush2.msra.mxu0 0.0
    %3965 = vmatprep.subr.mxu0 0.0
    %3966 = vmatpush2.msra.mxu0 0.0
    %3967 = vmatprep.subr.mxu0 0.0
    %3968 = vmatpush2.msra.mxu0 0.0
    %3969 = vmatprep.subr.mxu0 0.0
    %3970 = vmatpush2.msra.mxu0 0.0
    %3971 = vmatprep.subr.mxu0 0.0
    %3972 = vmatpush2.msra.mxu0 0.0
    %3973 = vmatprep.subr.mxu0 0.0
    %3974 = vmatpush2.msra.mxu0 0.0
    %3975 = vmatprep.subr.mxu0 0.0
    %3976 = vmatpush2.msra.mxu0 0.0
    %3977 = vmatprep.subr.mxu0 0.0
    %3978 = vmatpush2.msra.mxu0 0.0
    %3979 = vmatprep.subr.mxu0 0.0
    %3980 = vmatpush2.msra.mxu0 0.0
    %3981 = vmatprep.subr.mxu0 0.0
    %3982 = vmatpush2.msra.mxu0 0.0
    %3983 = vmatprep.subr.mxu0 0.0
    %3984 = vmatpush2.msra.mxu0 0.0
    %3985 = vmatprep.subr.mxu0 0.0
    %3986 = vmatpush2.msra.mxu0 0.0
    %3987 = vmatprep.subr.mxu0 0.0
    %3988 = vmatpush2.msra.mxu0 0.0
    %3989 = vmatprep.subr.mxu0 0.0
    %3990 = vmatpush2.msra.mxu0 0.0
    %3991 = vmatprep.mubr.f32.mxu0 0.0
    %3992 = vmatmul.mubr.f32.gmra.mxu0 %v3855
    %v3993 = vpop.f32.mrf.mxu0
    %v3994 = vadd.f32 0.0, %v3993
    %v3995 = vpop.f32.mrf.mxu0
    %3996 = vdwg.mxu0
    %3997 = vmatprep.subr.mxu0 0.0
    %3998 = vmatpush1.msra.mxu0 0.0
    %3999 = vmatprep.subr.mxu0 0.0
    %4000 = vmatpush1.msra.mxu0 0.0
    %4001 = vmatprep.subr.mxu0 0.0
    %4002 = vmatpush1.msra.mxu0 0.0
    %4003 = vmatprep.subr.mxu0 0.0
    %4004 = vmatpush1.msra.mxu0 0.0
    %4005 = vmatprep.subr.mxu0 0.0
    %4006 = vmatpush1.msra.mxu0 0.0
    %4007 = vmatprep.subr.mxu0 0.0
    %4008 = vmatpush1.msra.mxu0 0.0
    %4009 = vmatprep.subr.mxu0 0.0
    %4010 = vmatpush1.msra.mxu0 0.0
    %4011 = vmatprep.subr.mxu0 0.0
    %4012 = vmatpush1.msra.mxu0 0.0
    %4013 = vmatprep.subr.mxu0 0.0
    %4014 = vmatpush1.msra.mxu0 0.0
    %4015 = vmatprep.subr.mxu0 0.0
    %4016 = vmatpush1.msra.mxu0 0.0
    %4017 = vmatprep.subr.mxu0 0.0
    %4018 = vmatpush1.msra.mxu0 0.0
    %4019 = vmatprep.subr.mxu0 0.0
    %4020 = vmatpush1.msra.mxu0 0.0
    %4021 = vmatprep.subr.mxu0 0.0
    %4022 = vmatpush1.msra.mxu0 %v2683
    %4023 = vmatprep.subr.mxu0 0.0
    %4024 = vmatpush1.msra.mxu0 %v2682
    %4025 = vmatprep.subr.mxu0 0.0
    %4026 = vmatpush1.msra.mxu0 %v2681
    %4027 = vmatprep.subr.mxu0 0.0
    %4028 = vmatpush1.msra.mxu0 %v2680
    %4029 = vmatprep.subr.mxu0 0.0
    %4030 = vmatpush2.msra.mxu0 0.0
    %4031 = vmatprep.subr.mxu0 0.0
    %4032 = vmatpush2.msra.mxu0 0.0
    %4033 = vmatprep.subr.mxu0 0.0
    %4034 = vmatpush2.msra.mxu0 0.0
    %4035 = vmatprep.subr.mxu0 0.0
    %4036 = vmatpush2.msra.mxu0 0.0
    %4037 = vmatprep.subr.mxu0 0.0
    %4038 = vmatpush2.msra.mxu0 0.0
    %4039 = vmatprep.subr.mxu0 0.0
    %4040 = vmatpush2.msra.mxu0 0.0
    %4041 = vmatprep.subr.mxu0 0.0
    %4042 = vmatpush2.msra.mxu0 0.0
    %4043 = vmatprep.subr.mxu0 0.0
    %4044 = vmatpush2.msra.mxu0 0.0
    %4045 = vmatprep.subr.mxu0 0.0
    %4046 = vmatpush2.msra.mxu0 0.0
    %4047 = vmatprep.subr.mxu0 0.0
    %4048 = vmatpush2.msra.mxu0 0.0
    %4049 = vmatprep.subr.mxu0 0.0
    %4050 = vmatpush2.msra.mxu0 0.0
    %4051 = vmatprep.subr.mxu0 0.0
    %4052 = vmatpush2.msra.mxu0 0.0
    %4053 = vmatprep.subr.mxu0 0.0
    %4054 = vmatpush2.msra.mxu0 0.0
    %4055 = vmatprep.subr.mxu0 0.0
    %4056 = vmatpush2.msra.mxu0 0.0
    %4057 = vmatprep.subr.mxu0 0.0
    %4058 = vmatpush2.msra.mxu0 0.0
    %4059 = vmatprep.subr.mxu0 0.0
    %4060 = vmatpush2.msra.mxu0 0.0
    %4061 = vmatprep.mubr.f32.mxu0 0.0
    %4062 = vmatmul.mubr.f32.gmra.mxu0 %v3855
    %v4063 = vpop.f32.mrf.mxu0
    %v4064 = vadd.f32 %v2690, %v4063
    %v4065 = vpop.f32.mrf.mxu0
    %4066 = vdwg.mxu0
    %v4067 = vadd.f32 %v2420, %v3924
    %v4068 = vxor.u32 %v4067, 2147483648
    %v4069 = vmul.f32 %v4068, 1.442695
    %v4070 = vpow.pop %v4069
    %v4071 = vadd.f32 %v4070, 1.0
    %v4072 = vrcp.pop %v4071
    %v4073 = vmul.f32 1.0, %v4072
    %v4074 = vadd.f32 %v2538, %v3994
    %v4075 = vxor.u32 %v4074, 2147483648
    %v4076 = vmul.f32 %v4075, 1.442695
    %v4077 = vpow.pop %v4076
    %v4078 = vadd.f32 %v4077, 1.0
    %v4079 = vrcp.pop %v4078
    %v4080 = vmul.f32 1.0, %v4079
    %v4081 = vmul.f32 %v4073, %v4064
    %v4082 = vadd.f32 %v2656, %v4081
    %v4083 = vtanh.pop %v4082
    %v4084 = vsub.f32 %v3853, %v4083
    %v4085 = vmul.f32 %v4080, %v4084
    %v4086 = vadd.f32 %v4083, %v4085
    %v4088 = vsel %vm61, %v4086, 0
    %4090 = vmatprep.subr.mxu0 0.0
    %4091 = vmatpush1.msra.mxu0 0.0
    %4092 = vmatprep.subr.mxu0 0.0
    %4093 = vmatpush1.msra.mxu0 0.0
    %4094 = vmatprep.subr.mxu0 0.0
    %4095 = vmatpush1.msra.mxu0 0.0
    %4096 = vmatprep.subr.mxu0 0.0
    %4097 = vmatpush1.msra.mxu0 0.0
    %4098 = vmatprep.subr.mxu0 0.0
    %4099 = vmatpush1.msra.mxu0 0.0
    %4100 = vmatprep.subr.mxu0 0.0
    %4101 = vmatpush1.msra.mxu0 0.0
    %4102 = vmatprep.subr.mxu0 0.0
    %4103 = vmatpush1.msra.mxu0 0.0
    %4104 = vmatprep.subr.mxu0 0.0
    %4105 = vmatpush1.msra.mxu0 0.0
    %4106 = vmatprep.subr.mxu0 0.0
    %4107 = vmatpush1.msra.mxu0 0.0
    %4108 = vmatprep.subr.mxu0 0.0
    %4109 = vmatpush1.msra.mxu0 0.0
    %4110 = vmatprep.subr.mxu0 0.0
    %4111 = vmatpush1.msra.mxu0 0.0
    %4112 = vmatprep.subr.mxu0 0.0
    %4113 = vmatpush1.msra.mxu0 0.0
    %4114 = vmatprep.subr.mxu0 0.0
    %4115 = vmatpush1.msra.mxu0 %v2673
    %4116 = vmatprep.subr.mxu0 0.0
    %4117 = vmatpush1.msra.mxu0 %v2672
    %4118 = vmatprep.subr.mxu0 0.0
    %4119 = vmatpush1.msra.mxu0 %v2671
    %4120 = vmatprep.subr.mxu0 0.0
    %4121 = vmatpush1.msra.mxu0 %v2670
    %4122 = vmatprep.subr.mxu0 0.0
    %4123 = vmatpush2.msra.mxu0 0.0
    %4124 = vmatprep.subr.mxu0 0.0
    %4125 = vmatpush2.msra.mxu0 0.0
    %4126 = vmatprep.subr.mxu0 0.0
    %4127 = vmatpush2.msra.mxu0 0.0
    %4128 = vmatprep.subr.mxu0 0.0
    %4129 = vmatpush2.msra.mxu0 0.0
    %4130 = vmatprep.subr.mxu0 0.0
    %4131 = vmatpush2.msra.mxu0 0.0
    %4132 = vmatprep.subr.mxu0 0.0
    %4133 = vmatpush2.msra.mxu0 0.0
    %4134 = vmatprep.subr.mxu0 0.0
    %4135 = vmatpush2.msra.mxu0 0.0
    %4136 = vmatprep.subr.mxu0 0.0
    %4137 = vmatpush2.msra.mxu0 0.0
    %4138 = vmatprep.subr.mxu0 0.0
    %4139 = vmatpush2.msra.mxu0 0.0
    %4140 = vmatprep.subr.mxu0 0.0
    %4141 = vmatpush2.msra.mxu0 0.0
    %4142 = vmatprep.subr.mxu0 0.0
    %4143 = vmatpush2.msra.mxu0 0.0
    %4144 = vmatprep.subr.mxu0 0.0
    %4145 = vmatpush2.msra.mxu0 0.0
    %4146 = vmatprep.subr.mxu0 0.0
    %4147 = vmatpush2.msra.mxu0 0.0
    %4148 = vmatprep.subr.mxu0 0.0
    %4149 = vmatpush2.msra.mxu0 0.0
    %4150 = vmatprep.subr.mxu0 0.0
    %4151 = vmatpush2.msra.mxu0 0.0
    %4152 = vmatprep.subr.mxu0 0.0
    %4153 = vmatpush2.msra.mxu0 0.0
    %4154 = vmatprep.mubr.f32.mxu0 0.0
    %4155 = vmatmul.mubr.f32.gmra.mxu0 %v4088
    %v4156 = vpop.f32.mrf.mxu0
    %v4157 = vadd.f32 0.0, %v4156
    %v4158 = vpop.f32.mrf.mxu0
    %4159 = vdwg.mxu0
    %4160 = vmatprep.subr.mxu0 0.0
    %4161 = vmatpush1.msra.mxu0 0.0
    %4162 = vmatprep.subr.mxu0 0.0
    %4163 = vmatpush1.msra.mxu0 0.0
    %4164 = vmatprep.subr.mxu0 0.0
    %4165 = vmatpush1.msra.mxu0 0.0
    %4166 = vmatprep.subr.mxu0 0.0
    %4167 = vmatpush1.msra.mxu0 0.0
    %4168 = vmatprep.subr.mxu0 0.0
    %4169 = vmatpush1.msra.mxu0 0.0
    %4170 = vmatprep.subr.mxu0 0.0
    %4171 = vmatpush1.msra.mxu0 0.0
    %4172 = vmatprep.subr.mxu0 0.0
    %4173 = vmatpush1.msra.mxu0 0.0
    %4174 = vmatprep.subr.mxu0 0.0
    %4175 = vmatpush1.msra.mxu0 0.0
    %4176 = vmatprep.subr.mxu0 0.0
    %4177 = vmatpush1.msra.mxu0 0.0
    %4178 = vmatprep.subr.mxu0 0.0
    %4179 = vmatpush1.msra.mxu0 0.0
    %4180 = vmatprep.subr.mxu0 0.0
    %4181 = vmatpush1.msra.mxu0 0.0
    %4182 = vmatprep.subr.mxu0 0.0
    %4183 = vmatpush1.msra.mxu0 0.0
    %4184 = vmatprep.subr.mxu0 0.0
    %4185 = vmatpush1.msra.mxu0 %v2678
    %4186 = vmatprep.subr.mxu0 0.0
    %4187 = vmatpush1.msra.mxu0 %v2677
    %4188 = vmatprep.subr.mxu0 0.0
    %4189 = vmatpush1.msra.mxu0 %v2676
    %4190 = vmatprep.subr.mxu0 0.0
    %4191 = vmatpush1.msra.mxu0 %v2675
    %4192 = vmatprep.subr.mxu0 0.0
    %4193 = vmatpush2.msra.mxu0 0.0
    %4194 = vmatprep.subr.mxu0 0.0
    %4195 = vmatpush2.msra.mxu0 0.0
    %4196 = vmatprep.subr.mxu0 0.0
    %4197 = vmatpush2.msra.mxu0 0.0
    %4198 = vmatprep.subr.mxu0 0.0
    %4199 = vmatpush2.msra.mxu0 0.0
    %4200 = vmatprep.subr.mxu0 0.0
    %4201 = vmatpush2.msra.mxu0 0.0
    %4202 = vmatprep.subr.mxu0 0.0
    %4203 = vmatpush2.msra.mxu0 0.0
    %4204 = vmatprep.subr.mxu0 0.0
    %4205 = vmatpush2.msra.mxu0 0.0
    %4206 = vmatprep.subr.mxu0 0.0
    %4207 = vmatpush2.msra.mxu0 0.0
    %4208 = vmatprep.subr.mxu0 0.0
    %4209 = vmatpush2.msra.mxu0 0.0
    %4210 = vmatprep.subr.mxu0 0.0
    %4211 = vmatpush2.msra.mxu0 0.0
    %4212 = vmatprep.subr.mxu0 0.0
    %4213 = vmatpush2.msra.mxu0 0.0
    %4214 = vmatprep.subr.mxu0 0.0
    %4215 = vmatpush2.msra.mxu0 0.0
    %4216 = vmatprep.subr.mxu0 0.0
    %4217 = vmatpush2.msra.mxu0 0.0
    %4218 = vmatprep.subr.mxu0 0.0
    %4219 = vmatpush2.msra.mxu0 0.0
    %4220 = vmatprep.subr.mxu0 0.0
    %4221 = vmatpush2.msra.mxu0 0.0
    %4222 = vmatprep.subr.mxu0 0.0
    %4223 = vmatpush2.msra.mxu0 0.0
    %4224 = vmatprep.mubr.f32.mxu0 0.0
    %4225 = vmatmul.mubr.f32.gmra.mxu0 %v4088
    %v4226 = vpop.f32.mrf.mxu0
    %v4227 = vadd.f32 0.0, %v4226
    %v4228 = vpop.f32.mrf.mxu0
    %4229 = vdwg.mxu0
    %4230 = vmatprep.subr.mxu0 0.0
    %4231 = vmatpush1.msra.mxu0 0.0
    %4232 = vmatprep.subr.mxu0 0.0
    %4233 = vmatpush1.msra.mxu0 0.0
    %4234 = vmatprep.subr.mxu0 0.0
    %4235 = vmatpush1.msra.mxu0 0.0
    %4236 = vmatprep.subr.mxu0 0.0
    %4237 = vmatpush1.msra.mxu0 0.0
    %4238 = vmatprep.subr.mxu0 0.0
    %4239 = vmatpush1.msra.mxu0 0.0
    %4240 = vmatprep.subr.mxu0 0.0
    %4241 = vmatpush1.msra.mxu0 0.0
    %4242 = vmatprep.subr.mxu0 0.0
    %4243 = vmatpush1.msra.mxu0 0.0
    %4244 = vmatprep.subr.mxu0 0.0
    %4245 = vmatpush1.msra.mxu0 0.0
    %4246 = vmatprep.subr.mxu0 0.0
    %4247 = vmatpush1.msra.mxu0 0.0
    %4248 = vmatprep.subr.mxu0 0.0
    %4249 = vmatpush1.msra.mxu0 0.0
    %4250 = vmatprep.subr.mxu0 0.0
    %4251 = vmatpush1.msra.mxu0 0.0
    %4252 = vmatprep.subr.mxu0 0.0
    %4253 = vmatpush1.msra.mxu0 0.0
    %4254 = vmatprep.subr.mxu0 0.0
    %4255 = vmatpush1.msra.mxu0 %v2683
    %4256 = vmatprep.subr.mxu0 0.0
    %4257 = vmatpush1.msra.mxu0 %v2682
    %4258 = vmatprep.subr.mxu0 0.0
    %4259 = vmatpush1.msra.mxu0 %v2681
    %4260 = vmatprep.subr.mxu0 0.0
    %4261 = vmatpush1.msra.mxu0 %v2680
    %4262 = vmatprep.subr.mxu0 0.0
    %4263 = vmatpush2.msra.mxu0 0.0
    %4264 = vmatprep.subr.mxu0 0.0
    %4265 = vmatpush2.msra.mxu0 0.0
    %4266 = vmatprep.subr.mxu0 0.0
    %4267 = vmatpush2.msra.mxu0 0.0
    %4268 = vmatprep.subr.mxu0 0.0
    %4269 = vmatpush2.msra.mxu0 0.0
    %4270 = vmatprep.subr.mxu0 0.0
    %4271 = vmatpush2.msra.mxu0 0.0
    %4272 = vmatprep.subr.mxu0 0.0
    %4273 = vmatpush2.msra.mxu0 0.0
    %4274 = vmatprep.subr.mxu0 0.0
    %4275 = vmatpush2.msra.mxu0 0.0
    %4276 = vmatprep.subr.mxu0 0.0
    %4277 = vmatpush2.msra.mxu0 0.0
    %4278 = vmatprep.subr.mxu0 0.0
    %4279 = vmatpush2.msra.mxu0 0.0
    %4280 = vmatprep.subr.mxu0 0.0
    %4281 = vmatpush2.msra.mxu0 0.0
    %4282 = vmatprep.subr.mxu0 0.0
    %4283 = vmatpush2.msra.mxu0 0.0
    %4284 = vmatprep.subr.mxu0 0.0
    %4285 = vmatpush2.msra.mxu0 0.0
    %4286 = vmatprep.subr.mxu0 0.0
    %4287 = vmatpush2.msra.mxu0 0.0
    %4288 = vmatprep.subr.mxu0 0.0
    %4289 = vmatpush2.msra.mxu0 0.0
    %4290 = vmatprep.subr.mxu0 0.0
    %4291 = vmatpush2.msra.mxu0 0.0
    %4292 = vmatprep.subr.mxu0 0.0
    %4293 = vmatpush2.msra.mxu0 0.0
    %4294 = vmatprep.mubr.f32.mxu0 0.0
    %4295 = vmatmul.mubr.f32.gmra.mxu0 %v4088
    %v4296 = vpop.f32.mrf.mxu0
    %v4297 = vadd.f32 %v2690, %v4296
    %v4298 = vpop.f32.mrf.mxu0
    %4299 = vdwg.mxu0
    %v4300 = vadd.f32 %v2425, %v4157
    %v4301 = vxor.u32 %v4300, 2147483648
    %v4302 = vmul.f32 %v4301, 1.442695
    %v4303 = vpow.pop %v4302
    %v4304 = vadd.f32 %v4303, 1.0
    %v4305 = vrcp.pop %v4304
    %v4306 = vmul.f32 1.0, %v4305
    %v4307 = vadd.f32 %v2543, %v4227
    %v4308 = vxor.u32 %v4307, 2147483648
    %v4309 = vmul.f32 %v4308, 1.442695
    %v4310 = vpow.pop %v4309
    %v4311 = vadd.f32 %v4310, 1.0
    %v4312 = vrcp.pop %v4311
    %v4313 = vmul.f32 1.0, %v4312
    %v4314 = vmul.f32 %v4306, %v4297
    %v4315 = vadd.f32 %v2661, %v4314
    %v4316 = vtanh.pop %v4315
    %v4317 = vsub.f32 %v4086, %v4316
    %v4318 = vmul.f32 %v4313, %v4317
    %v4319 = vadd.f32 %v4316, %v4318
    %v4321 = vsel %vm61, %v4319, 0
    %4323 = vmatprep.subr.mxu0 0.0
    %4324 = vmatpush1.msra.mxu0 0.0
    %4325 = vmatprep.subr.mxu0 0.0
    %4326 = vmatpush1.msra.mxu0 0.0
    %4327 = vmatprep.subr.mxu0 0.0
    %4328 = vmatpush1.msra.mxu0 0.0
    %4329 = vmatprep.subr.mxu0 0.0
    %4330 = vmatpush1.msra.mxu0 0.0
    %4331 = vmatprep.subr.mxu0 0.0
    %4332 = vmatpush1.msra.mxu0 0.0
    %4333 = vmatprep.subr.mxu0 0.0
    %4334 = vmatpush1.msra.mxu0 0.0
    %4335 = vmatprep.subr.mxu0 0.0
    %4336 = vmatpush1.msra.mxu0 0.0
    %4337 = vmatprep.subr.mxu0 0.0
    %4338 = vmatpush1.msra.mxu0 0.0
    %4339 = vmatprep.subr.mxu0 0.0
    %4340 = vmatpush1.msra.mxu0 0.0
    %4341 = vmatprep.subr.mxu0 0.0
    %4342 = vmatpush1.msra.mxu0 0.0
    %4343 = vmatprep.subr.mxu0 0.0
    %4344 = vmatpush1.msra.mxu0 0.0
    %4345 = vmatprep.subr.mxu0 0.0
    %4346 = vmatpush1.msra.mxu0 0.0
    %4347 = vmatprep.subr.mxu0 0.0
    %4348 = vmatpush1.msra.mxu0 %v2673
    %4349 = vmatprep.subr.mxu0 0.0
    %4350 = vmatpush1.msra.mxu0 %v2672
    %4351 = vmatprep.subr.mxu0 0.0
    %4352 = vmatpush1.msra.mxu0 %v2671
    %4353 = vmatprep.subr.mxu0 0.0
    %4354 = vmatpush1.msra.mxu0 %v2670
    %4355 = vmatprep.subr.mxu0 0.0
    %4356 = vmatpush2.msra.mxu0 0.0
    %4357 = vmatprep.subr.mxu0 0.0
    %4358 = vmatpush2.msra.mxu0 0.0
    %4359 = vmatprep.subr.mxu0 0.0
    %4360 = vmatpush2.msra.mxu0 0.0
    %4361 = vmatprep.subr.mxu0 0.0
    %4362 = vmatpush2.msra.mxu0 0.0
    %4363 = vmatprep.subr.mxu0 0.0
    %4364 = vmatpush2.msra.mxu0 0.0
    %4365 = vmatprep.subr.mxu0 0.0
    %4366 = vmatpush2.msra.mxu0 0.0
    %4367 = vmatprep.subr.mxu0 0.0
    %4368 = vmatpush2.msra.mxu0 0.0
    %4369 = vmatprep.subr.mxu0 0.0
    %4370 = vmatpush2.msra.mxu0 0.0
    %4371 = vmatprep.subr.mxu0 0.0
    %4372 = vmatpush2.msra.mxu0 0.0
    %4373 = vmatprep.subr.mxu0 0.0
    %4374 = vmatpush2.msra.mxu0 0.0
    %4375 = vmatprep.subr.mxu0 0.0
    %4376 = vmatpush2.msra.mxu0 0.0
    %4377 = vmatprep.subr.mxu0 0.0
    %4378 = vmatpush2.msra.mxu0 0.0
    %4379 = vmatprep.subr.mxu0 0.0
    %4380 = vmatpush2.msra.mxu0 0.0
    %4381 = vmatprep.subr.mxu0 0.0
    %4382 = vmatpush2.msra.mxu0 0.0
    %4383 = vmatprep.subr.mxu0 0.0
    %4384 = vmatpush2.msra.mxu0 0.0
    %4385 = vmatprep.subr.mxu0 0.0
    %4386 = vmatpush2.msra.mxu0 0.0
    %4387 = vmatprep.mubr.f32.mxu0 0.0
    %4388 = vmatmul.mubr.f32.gmra.mxu0 %v4321
    %v4389 = vpop.f32.mrf.mxu0
    %v4390 = vadd.f32 0.0, %v4389
    %v4391 = vpop.f32.mrf.mxu0
    %4392 = vdwg.mxu0
    %4393 = vmatprep.subr.mxu0 0.0
    %4394 = vmatpush1.msra.mxu0 0.0
    %4395 = vmatprep.subr.mxu0 0.0
    %4396 = vmatpush1.msra.mxu0 0.0
    %4397 = vmatprep.subr.mxu0 0.0
    %4398 = vmatpush1.msra.mxu0 0.0
    %4399 = vmatprep.subr.mxu0 0.0
    %4400 = vmatpush1.msra.mxu0 0.0
    %4401 = vmatprep.subr.mxu0 0.0
    %4402 = vmatpush1.msra.mxu0 0.0
    %4403 = vmatprep.subr.mxu0 0.0
    %4404 = vmatpush1.msra.mxu0 0.0
    %4405 = vmatprep.subr.mxu0 0.0
    %4406 = vmatpush1.msra.mxu0 0.0
    %4407 = vmatprep.subr.mxu0 0.0
    %4408 = vmatpush1.msra.mxu0 0.0
    %4409 = vmatprep.subr.mxu0 0.0
    %4410 = vmatpush1.msra.mxu0 0.0
    %4411 = vmatprep.subr.mxu0 0.0
    %4412 = vmatpush1.msra.mxu0 0.0
    %4413 = vmatprep.subr.mxu0 0.0
    %4414 = vmatpush1.msra.mxu0 0.0
    %4415 = vmatprep.subr.mxu0 0.0
    %4416 = vmatpush1.msra.mxu0 0.0
    %4417 = vmatprep.subr.mxu0 0.0
    %4418 = vmatpush1.msra.mxu0 %v2678
    %4419 = vmatprep.subr.mxu0 0.0
    %4420 = vmatpush1.msra.mxu0 %v2677
    %4421 = vmatprep.subr.mxu0 0.0
    %4422 = vmatpush1.msra.mxu0 %v2676
    %4423 = vmatprep.subr.mxu0 0.0
    %4424 = vmatpush1.msra.mxu0 %v2675
    %4425 = vmatprep.subr.mxu0 0.0
    %4426 = vmatpush2.msra.mxu0 0.0
    %4427 = vmatprep.subr.mxu0 0.0
    %4428 = vmatpush2.msra.mxu0 0.0
    %4429 = vmatprep.subr.mxu0 0.0
    %4430 = vmatpush2.msra.mxu0 0.0
    %4431 = vmatprep.subr.mxu0 0.0
    %4432 = vmatpush2.msra.mxu0 0.0
    %4433 = vmatprep.subr.mxu0 0.0
    %4434 = vmatpush2.msra.mxu0 0.0
    %4435 = vmatprep.subr.mxu0 0.0
    %4436 = vmatpush2.msra.mxu0 0.0
    %4437 = vmatprep.subr.mxu0 0.0
    %4438 = vmatpush2.msra.mxu0 0.0
    %4439 = vmatprep.subr.mxu0 0.0
    %4440 = vmatpush2.msra.mxu0 0.0
    %4441 = vmatprep.subr.mxu0 0.0
    %4442 = vmatpush2.msra.mxu0 0.0
    %4443 = vmatprep.subr.mxu0 0.0
    %4444 = vmatpush2.msra.mxu0 0.0
    %4445 = vmatprep.subr.mxu0 0.0
    %4446 = vmatpush2.msra.mxu0 0.0
    %4447 = vmatprep.subr.mxu0 0.0
    %4448 = vmatpush2.msra.mxu0 0.0
    %4449 = vmatprep.subr.mxu0 0.0
    %4450 = vmatpush2.msra.mxu0 0.0
    %4451 = vmatprep.subr.mxu0 0.0
    %4452 = vmatpush2.msra.mxu0 0.0
    %4453 = vmatprep.subr.mxu0 0.0
    %4454 = vmatpush2.msra.mxu0 0.0
    %4455 = vmatprep.subr.mxu0 0.0
    %4456 = vmatpush2.msra.mxu0 0.0
    %4457 = vmatprep.mubr.f32.mxu0 0.0
    %4458 = vmatmul.mubr.f32.gmra.mxu0 %v4321
    %v4459 = vpop.f32.mrf.mxu0
    %v4460 = vadd.f32 0.0, %v4459
    %v4461 = vpop.f32.mrf.mxu0
    %4462 = vdwg.mxu0
    %4463 = vmatprep.subr.mxu0 0.0
    %4464 = vmatpush1.msra.mxu0 0.0
    %4465 = vmatprep.subr.mxu0 0.0
    %4466 = vmatpush1.msra.mxu0 0.0
    %4467 = vmatprep.subr.mxu0 0.0
    %4468 = vmatpush1.msra.mxu0 0.0
    %4469 = vmatprep.subr.mxu0 0.0
    %4470 = vmatpush1.msra.mxu0 0.0
    %4471 = vmatprep.subr.mxu0 0.0
    %4472 = vmatpush1.msra.mxu0 0.0
    %4473 = vmatprep.subr.mxu0 0.0
    %4474 = vmatpush1.msra.mxu0 0.0
    %4475 = vmatprep.subr.mxu0 0.0
    %4476 = vmatpush1.msra.mxu0 0.0
    %4477 = vmatprep.subr.mxu0 0.0
    %4478 = vmatpush1.msra.mxu0 0.0
    %4479 = vmatprep.subr.mxu0 0.0
    %4480 = vmatpush1.msra.mxu0 0.0
    %4481 = vmatprep.subr.mxu0 0.0
    %4482 = vmatpush1.msra.mxu0 0.0
    %4483 = vmatprep.subr.mxu0 0.0
    %4484 = vmatpush1.msra.mxu0 0.0
    %4485 = vmatprep.subr.mxu0 0.0
    %4486 = vmatpush1.msra.mxu0 0.0
    %4487 = vmatprep.subr.mxu0 0.0
    %4488 = vmatpush1.msra.mxu0 %v2683
    %4489 = vmatprep.subr.mxu0 0.0
    %4490 = vmatpush1.msra.mxu0 %v2682
    %4491 = vmatprep.subr.mxu0 0.0
    %4492 = vmatpush1.msra.mxu0 %v2681
    %4493 = vmatprep.subr.mxu0 0.0
    %4494 = vmatpush1.msra.mxu0 %v2680
    %4495 = vmatprep.subr.mxu0 0.0
    %4496 = vmatpush2.msra.mxu0 0.0
    %4497 = vmatprep.subr.mxu0 0.0
    %4498 = vmatpush2.msra.mxu0 0.0
    %4499 = vmatprep.subr.mxu0 0.0
    %4500 = vmatpush2.msra.mxu0 0.0
    %4501 = vmatprep.subr.mxu0 0.0
    %4502 = vmatpush2.msra.mxu0 0.0
    %4503 = vmatprep.subr.mxu0 0.0
    %4504 = vmatpush2.msra.mxu0 0.0
    %4505 = vmatprep.subr.mxu0 0.0
    %4506 = vmatpush2.msra.mxu0 0.0
    %4507 = vmatprep.subr.mxu0 0.0
    %4508 = vmatpush2.msra.mxu0 0.0
    %4509 = vmatprep.subr.mxu0 0.0
    %4510 = vmatpush2.msra.mxu0 0.0
    %4511 = vmatprep.subr.mxu0 0.0
    %4512 = vmatpush2.msra.mxu0 0.0
    %4513 = vmatprep.subr.mxu0 0.0
    %4514 = vmatpush2.msra.mxu0 0.0
    %4515 = vmatprep.subr.mxu0 0.0
    %4516 = vmatpush2.msra.mxu0 0.0
    %4517 = vmatprep.subr.mxu0 0.0
    %4518 = vmatpush2.msra.mxu0 0.0
    %4519 = vmatprep.subr.mxu0 0.0
    %4520 = vmatpush2.msra.mxu0 0.0
    %4521 = vmatprep.subr.mxu0 0.0
    %4522 = vmatpush2.msra.mxu0 0.0
    %4523 = vmatprep.subr.mxu0 0.0
    %4524 = vmatpush2.msra.mxu0 0.0
    %4525 = vmatprep.subr.mxu0 0.0
    %4526 = vmatpush2.msra.mxu0 0.0
    %4527 = vmatprep.mubr.f32.mxu0 0.0
    %4528 = vmatmul.mubr.f32.gmra.mxu0 %v4321
    %v4529 = vpop.f32.mrf.mxu0
    %v4530 = vadd.f32 %v2690, %v4529
    %v4531 = vpop.f32.mrf.mxu0
    %4532 = vdwg.mxu0
    %v4533 = vadd.f32 %v2430, %v4390
    %v4534 = vxor.u32 %v4533, 2147483648
    %v4535 = vmul.f32 %v4534, 1.442695
    %v4536 = vpow.pop %v4535
    %v4537 = vadd.f32 %v4536, 1.0
    %v4538 = vrcp.pop %v4537
    %v4539 = vmul.f32 1.0, %v4538
    %v4540 = vadd.f32 %v2548, %v4460
    %v4541 = vxor.u32 %v4540, 2147483648
    %v4542 = vmul.f32 %v4541, 1.442695
    %v4543 = vpow.pop %v4542
    %v4544 = vadd.f32 %v4543, 1.0
    %v4545 = vrcp.pop %v4544
    %v4546 = vmul.f32 1.0, %v4545
    %v4547 = vmul.f32 %v4539, %v4530
    %v4548 = vadd.f32 %v2666, %v4547
    %v4549 = vtanh.pop %v4548
    %v4550 = vsub.f32 %v4319, %v4549
    %v4551 = vmul.f32 %v4546, %v4550
    %v4552 = vadd.f32 %v4549, %v4551
    %v4553 = vld [vmem:[%s5] sm:$0x1]
    %v4555 = vlaneseq
    %v4556 = vshrl.u32 %v4555, 7
    %v4557 = vsub.s32 0, %v4556
    %v4558 = vrot.slane %v4553, %v4557
    %v4560 = vmul.f32 %v2921, %v4558
    %v4561 = vmul.f32 %v3154, %v4558
    %v4562 = vmul.f32 %v3387, %v4558
    %v4563 = vmul.f32 %v3620, %v4558
    %v4564 = vmul.f32 %v3853, %v4558
    %v4565 = vmul.f32 %v4086, %v4558
    %v4566 = vmul.f32 %v4319, %v4558
    %v4567 = vmul.f32 %v4552, %v4558
    %v4568 = vsel %vm61, %v4560, 0.0
    %4569 = vadd.xlane.f32.xlu0 %v4568
    %v4570 = vpop.xlane.xlu0 %4569
    %v4571 = vsel %vm61, %v4561, 0.0
    %4572 = vadd.xlane.f32.xlu0 %v4571
    %v4573 = vpop.xlane.xlu0 %4572
    %v4574 = vsel %vm61, %v4562, 0.0
    %4575 = vadd.xlane.f32.xlu0 %v4574
    %v4576 = vpop.xlane.xlu0 %4575
    %v4577 = vsel %vm61, %v4563, 0.0
    %4578 = vadd.xlane.f32.xlu0 %v4577
    %v4579 = vpop.xlane.xlu0 %4578
    %v4580 = vsel %vm61, %v4564, 0.0
    %4581 = vadd.xlane.f32.xlu0 %v4580
    %v4582 = vpop.xlane.xlu0 %4581
    %v4583 = vsel %vm61, %v4565, 0.0
    %4584 = vadd.xlane.f32.xlu0 %v4583
    %v4585 = vpop.xlane.xlu0 %4584
    %v4586 = vsel %vm61, %v4566, 0.0
    %4587 = vadd.xlane.f32.xlu0 %v4586
    %v4588 = vpop.xlane.xlu0 %4587
    %v4589 = vsel %vm61, %v4567, 0.0
    %4590 = vadd.xlane.f32.xlu0 %v4589
    %v4591 = vpop.xlane.xlu0 %4590
    %v4592 = vlaneseq
    %v4593 = vand.u32 %v4592, 127
    %vm4594 = vcmp.eq.s32.totalorder %v4593, 0
    %v4595 = vsel %vm4594, %v4570, 0.0
    %vm4596 = vcmp.eq.s32.totalorder %v4593, 1
    %v4597 = vsel %vm4596, %v4573, %v4595
    %vm4598 = vcmp.eq.s32.totalorder %v4593, 2
    %v4599 = vsel %vm4598, %v4576, %v4597
    %vm4600 = vcmp.eq.s32.totalorder %v4593, 3
    %v4601 = vsel %vm4600, %v4579, %v4599
    %vm4602 = vcmp.eq.s32.totalorder %v4593, 4
    %v4603 = vsel %vm4602, %v4582, %v4601
    %vm4604 = vcmp.eq.s32.totalorder %v4593, 5
    %v4605 = vsel %vm4604, %v4585, %v4603
    %vm4606 = vcmp.eq.s32.totalorder %v4593, 6
    %v4607 = vsel %vm4606, %v4588, %v4605
    %vm4608 = vcmp.eq.s32.totalorder %v4593, 7
    %v4609 = vsel %vm4608, %v4591, %v4607
    %v4610 = vld [vmem:[#allocation2] sm:$0x1]
    %v4612 = vlaneseq
    %v4613 = vshrl.u32 %v4612, 7
    %v4614 = vsub.s32 0, %v4613
    %v4615 = vrot.slane %v4610, %v4614
    %4616 = vset.pattern.permute.xlu0 0
    %4617 = vperm.xlu0 %4616, %v4615
    %v4618 = vpop.permute.xlu0 %4617
    %v4620 = vadd.f32 %v4609, %v4618
    %vm4621 = vcmask 64512
    %4622 = vst.msk [vmem:[%s7] sm:$0xff] %vm4621, %v4620
    // Predicated region
    $region34: #{discriminator_forward.1} parent=1 // pred_check
      _
    $region35: #{discriminator_forward.1} parent=1 // pred_check_branch
      %4624 = sbr.rel (0) target = $region37
    $region36: #{discriminator_forward.1} parent=1 // pred_region
      _
    $region37: #{discriminator_forward.1} parent=1 // pred_fallthru
      _
    // Predicated region
    $region38: #{discriminator_forward.1} parent=1 // pred_check
      _
    $region39: #{discriminator_forward.1} parent=1 // pred_check_branch
      %4626 = sbr.rel (0) target = $region41
    $region40: #{discriminator_forward.1} parent=1 // pred_region
      _
    $region41: #{discriminator_forward.1} parent=1 // pred_fallthru
      _
    %4627 = vsyncpa [#allocation4], 1

</llo_original>
